<compile_context>
chip_gen: v6e
topology: v6e:2x2x1
jax: 0.10.0
libtpu: 0.0.40
codegen_flags: <defaults>
</compile_context>

<pallas_src>
import functools
import math

import jax
import jax.numpy as jnp
from jax.experimental import pallas as pl
from jax.experimental.pallas import tpu as pltpu

_HAS_RECIP = hasattr(pl, "reciprocal")
_GELU_TANH = True      # tanh GELU on the EUP (review); False -> exact erf (nn.GELU)


# ---------------------------------------------------------------------------
# helpers
# ---------------------------------------------------------------------------
def _round_up(x, m):
    return ((x + m - 1) // m) * m


def _layernorm(x, g, b, eps=1e-5):
    mu = jnp.mean(x, axis=-1, keepdims=True)
    var = jnp.mean((x - mu) ** 2, axis=-1, keepdims=True)
    return (x - mu) * jax.lax.rsqrt(var + eps) * g + b


def _recip(x):
    if _HAS_RECIP:
        return pl.reciprocal(x, approx=True)
    return 1.0 / x


# ---------------------------------------------------------------------------
# kernels
# ---------------------------------------------------------------------------
def patch_embed_kernel(xp_ref, w_ref, add_ref, o_ref):
    # xp : (rows_tile, Kpad) bf16  (row0 of each image slot = CLS slot = zeros)
    # w  : (Kpad, D)       bf16    zero-padded conv weight (as matmul)
    # add: (rows_tile, D)  f32     [cls+pos[0] ; conv_bias+pos[1:N] ; zeros]
    o_ref[...] = (
        jnp.dot(xp_ref[...], w_ref[...], preferred_element_type=jnp.float32)
        + add_ref[...]
    )


def block_kernel(scale, n_tokens, num_heads,
                 x_ref, g1_ref, b1_ref, wqkv_ref, bqkv_ref, wproj_ref, bproj_ref,
                 g2_ref, b2_ref, w1_ref, bb1_ref, w2_ref, bb2_ref, o_ref):
    """One full transformer block (LN -> MHA -> residual -> LN -> MLP -> residual)
    for a single batch element.  grid = (B,), no reduction axis, no scratch."""
    Npad, D = x_ref.shape
    Dh = D // num_heads

    x = x_ref[...]                                            # (Npad, D) f32

    # ----- attention -----
    y1 = _layernorm(x, g1_ref[...], b1_ref[...])              # f32 VPU math
    qkv = jnp.dot(y1.astype(jnp.bfloat16), wqkv_ref[...],     # full-width MXU
                  preferred_element_type=jnp.float32) + bqkv_ref[...]   # (Npad,3D)

    key_mask = jax.lax.broadcasted_iota(jnp.int32, (Npad, Npad), 1) < n_tokens

    ctx_heads = []
    for h in range(num_heads):                                # short unrolled loop
        q = qkv[:, h * Dh:(h + 1) * Dh]
        k = qkv[:, D + h * Dh:D + (h + 1) * Dh]
        v = qkv[:, 2 * D + h * Dh:2 * D + (h + 1) * Dh]
        s = jax.lax.dot_general(
            q.astype(jnp.bfloat16), k.astype(jnp.bfloat16),
            (((1,), (1,)), ((), ())), preferred_element_type=jnp.float32) * scale
        s = jnp.where(key_mask, s, -1e30)                     # mask padded keys
        e = jnp.exp(s - jnp.max(s, axis=-1, keepdims=True))
        p = e * _recip(jnp.sum(e, axis=-1, keepdims=True))    # EUP reciprocal
        ctx_heads.append(jnp.dot(p.astype(jnp.bfloat16), v.astype(jnp.bfloat16),
                                 preferred_element_type=jnp.float32))
    ctx = jnp.concatenate(ctx_heads, axis=-1)                 # (Npad, D) head-concat

    x = x + jnp.dot(ctx.astype(jnp.bfloat16), wproj_ref[...],
                    preferred_element_type=jnp.float32) + bproj_ref[...]

    # ----- MLP -----
    y2 = _layernorm(x, g2_ref[...], b2_ref[...])
    hdn = jnp.dot(y2.astype(jnp.bfloat16), w1_ref[...],
                  preferred_element_type=jnp.float32) + bb1_ref[...]
    hdn = jax.nn.gelu(hdn, approximate=_GELU_TANH)
    x = x + jnp.dot(hdn.astype(jnp.bfloat16), w2_ref[...],
                    preferred_element_type=jnp.float32) + bb2_ref[...]

    # pin padded token rows to exactly zero so padding can never go non-finite
    row_mask = jax.lax.broadcasted_iota(jnp.int32, (Npad, D), 0) < n_tokens
    o_ref[...] = jnp.where(row_mask, x, 0.0)


def head_kernel(x_ref, g_ref, b_ref, w_ref, bw_ref, o_ref):
    # x: (B, D) — only the CLS rows; output class dim padded to 128 (lane-dense).
    y = _layernorm(x_ref[...], g_ref[...], b_ref[...])
    o_ref[...] = (jnp.dot(y.astype(jnp.bfloat16), w_ref[...],
                          preferred_element_type=jnp.float32) + bw_ref[...])


# ---------------------------------------------------------------------------
# pallas_call wrappers
# ---------------------------------------------------------------------------
def patch_embed_call(patches_rows, w_pad, add_rows):
    rows, Kpad = patches_rows.shape
    D = w_pad.shape[1]
    row_tile = math.gcd(rows, 256)            # divisor of rows (rows % 32 == 0)
    return pl.pallas_call(
        patch_embed_kernel,
        out_shape=jax.ShapeDtypeStruct((rows, D), jnp.float32),
        grid=(rows // row_tile,),
        in_specs=[
            pl.BlockSpec((row_tile, Kpad), lambda i: (i, 0)),
            pl.BlockSpec((Kpad, D), lambda i: (0, 0)),
            pl.BlockSpec((row_tile, D), lambda i: (i, 0)),
        ],
        out_specs=pl.BlockSpec((row_tile, D), lambda i: (i, 0)),
        compiler_params=pltpu.CompilerParams(dimension_semantics=("parallel",)),
    )(patches_rows, w_pad, add_rows)


def block_call(x, blk, *, num_heads, n_tokens):
    B, Npad, D = x.shape
    Hd = blk['w1'].shape[1]
    scale = float(D) ** (-0.5)                # matches PyTorch: dim ** -0.5
    kernel = functools.partial(block_kernel, scale, n_tokens, num_heads)

    def vec_spec(c):
        return pl.BlockSpec((1, c), lambda b: (0, 0))

    return pl.pallas_call(
        kernel,
        out_shape=jax.ShapeDtypeStruct((B, Npad, D), jnp.float32),
        grid=(B,),
        in_specs=[
            pl.BlockSpec((None, Npad, D), lambda b: (b, 0, 0)),   # x (per-batch)
            vec_spec(D), vec_spec(D),                             # g1, b1
            pl.BlockSpec((D, 3 * D), lambda b: (0, 0)),           # wqkv (resident)
            vec_spec(3 * D),                                      # bqkv
            pl.BlockSpec((D, D), lambda b: (0, 0)),               # wproj
            vec_spec(D),                                          # bproj
            vec_spec(D), vec_spec(D),                             # g2, b2
            pl.BlockSpec((D, Hd), lambda b: (0, 0)),              # w1
            vec_spec(Hd),                                         # bb1
            pl.BlockSpec((Hd, D), lambda b: (0, 0)),              # w2
            vec_spec(D),                                          # bb2
        ],
        out_specs=pl.BlockSpec((None, Npad, D), lambda b: (b, 0, 0)),
        compiler_params=pltpu.CompilerParams(
            dimension_semantics=("parallel",)),                   # v7x: 2 TCs @ B>=2
    )(x, blk['g1'], blk['b1'], blk['wqkv'], blk['bqkv'], blk['wproj'], blk['bproj'],
      blk['g2'], blk['b2'], blk['w1'], blk['bb1'], blk['w2'], blk['bb2'])


def head_call(x_cls, g, b, w_pad, bw_pad):
    B, D = x_cls.shape
    Cpad = w_pad.shape[1]
    return pl.pallas_call(
        head_kernel,
        out_shape=jax.ShapeDtypeStruct((B, Cpad), jnp.float32),
        grid=(1,),
        in_specs=[
            pl.BlockSpec((B, D), lambda i: (0, 0)),
            pl.BlockSpec((1, D), lambda i: (0, 0)),
            pl.BlockSpec((1, D), lambda i: (0, 0)),
            pl.BlockSpec((D, Cpad), lambda i: (0, 0)),
            pl.BlockSpec((1, Cpad), lambda i: (0, 0)),
        ],
        out_specs=pl.BlockSpec((B, Cpad), lambda i: (0, 0)),
        compiler_params=pltpu.CompilerParams(dimension_semantics=("arbitrary",)),
    )(x_cls, g, b, w_pad, bw_pad)


# ---------------------------------------------------------------------------
# parameters
# ---------------------------------------------------------------------------
def init_params(key, *, in_chans, patch, embed_dim, depth, mlp_ratio,
                num_classes, num_patches):
    keys = iter(jax.random.split(key, 128))

    def rnd(shape):
        return jax.random.normal(next(keys), shape, dtype=jnp.float32) * 0.02

    K = in_chans * patch * patch
    D = embed_dim
    Hd = int(D * mlp_ratio)
    N = num_patches + 1
    params = dict(
        w_patch=rnd((K, D)), b_patch=rnd((1, D)),             # Conv2d as matmul
        cls_token=rnd((1, 1, D)),
        pos_embed=rnd((1, N, D)),
        norm_g=jnp.ones((1, D), jnp.float32), norm_b=jnp.zeros((1, D), jnp.float32),
        head_w=rnd((D, num_classes)), head_b=rnd((1, num_classes)),
        blocks=[],
    )
    for _ in range(depth):
        params['blocks'].append(dict(
            g1=jnp.ones((1, D), jnp.float32), b1=jnp.zeros((1, D), jnp.float32),
            wqkv=rnd((D, 3 * D)), bqkv=rnd((1, 3 * D)),
            wproj=rnd((D, D)), bproj=rnd((1, D)),
            g2=jnp.ones((1, D), jnp.float32), b2=jnp.zeros((1, D), jnp.float32),
            w1=rnd((D, Hd)), bb1=rnd((1, Hd)),
            w2=rnd((Hd, D)), bb2=rnd((1, D)),
        ))
    return params


def prepare_kernel_params(params, *, n_pad, k_pad, c_pad):
    """Host-side re-layout: bf16 matmul weights, fused embed additive term,
    class dim padded to a lane-dense width."""
    K, D = params['w_patch'].shape
    N = params['pos_embed'].shape[1]
    C = params['head_w'].shape[1]

    w_patch_pad = jnp.zeros((k_pad, D), jnp.float32).at[:K].set(
        params['w_patch']).astype(jnp.bfloat16)
    pos = params['pos_embed'][0]                       # (N, D)
    embed_add = jnp.concatenate([
        params['cls_token'][0] + pos[0:1],             # CLS row (patch row is zero)
        params['b_patch'] + pos[1:N],                  # conv bias + pos for patches
        jnp.zeros((n_pad - N, D), jnp.float32),        # padded tokens stay zero
    ], axis=0)

    head_w_pad = jnp.zeros((D, c_pad), jnp.float32).at[:, :C].set(
        params['head_w']).astype(jnp.bfloat16)
    head_b_pad = jnp.zeros((1, c_pad), jnp.float32).at[:, :C].set(params['head_b'])

    blocks = []
    for blk in params['blocks']:
        blocks.append(dict(
            g1=blk['g1'], b1=blk['b1'],
            wqkv=blk['wqkv'].astype(jnp.bfloat16), bqkv=blk['bqkv'],
            wproj=blk['wproj'].astype(jnp.bfloat16), bproj=blk['bproj'],
            g2=blk['g2'], b2=blk['b2'],
            w1=blk['w1'].astype(jnp.bfloat16), bb1=blk['bb1'],
            w2=blk['w2'].astype(jnp.bfloat16), bb2=blk['bb2'],
        ))
    return dict(
        w_patch_pad=w_patch_pad, embed_add=embed_add,
        norm_g=params['norm_g'], norm_b=params['norm_b'],
        head_w_pad=head_w_pad, head_b_pad=head_b_pad,
        blocks=blocks,
    )


# ---------------------------------------------------------------------------
# forward pass
# ---------------------------------------------------------------------------
def vit_forward(x_img, kparams, *, patch, num_heads, n_tokens, n_pad, k_pad,
                num_classes):
    """x_img: NCHW float32 image batch."""
    B, C, Himg, Wimg = x_img.shape
    p = patch
    Hp, Wp = Himg // p, Wimg // p
    P = Hp * Wp
    K = C * p * p

    # Unfold NCHW into (B, P, K), channel-major within a patch (Conv2d layout);
    # shift down one row to leave room for the CLS token; pad token axis to a
    # sublane-friendly multiple of 32 and the contraction dim to 128.
    patches = (x_img.reshape(B, C, Hp, p, Wp, p)
               .transpose(0, 2, 4, 1, 3, 5)
               .reshape(B, P, K))
    patches_pad = jnp.pad(patches, ((0, 0), (1, n_pad - 1 - P), (0, k_pad - K)))
    patches_rows = patches_pad.reshape(B * n_pad, k_pad).astype(jnp.bfloat16)
    add_rows = jnp.tile(kparams['embed_add'], (B, 1))

    x = patch_embed_call(patches_rows, kparams['w_patch_pad'], add_rows)
    x = x.reshape(B, n_pad, -1)
    # pos_drop: inference-mode identity.

    for blk in kparams['blocks']:
        x = block_call(x, blk, num_heads=num_heads, n_tokens=n_tokens)

    x_cls = x[:, 0, :]                     # only the CLS row feeds the head
    logits_pad = head_call(x_cls, kparams['norm_g'], kparams['norm_b'],
                           kparams['head_w_pad'], kparams['head_b_pad'])
    return logits_pad[:, :num_classes]


# ---------------------------------------------------------------------------
# pure-JAX f32 reference (for correctness check)
# ---------------------------------------------------------------------------
def ref_forward(x_img, params, *, patch, num_heads):
    B, C, H, W = x_img.shape
    p = patch
    Hp, Wp = H // p, W // p
    P = Hp * Wp
    K = C * p * p
    patches = (x_img.reshape(B, C, Hp, p, Wp, p)
               .transpose(0, 2, 4, 1, 3, 5).reshape(B, P, K))
    x = patches @ params['w_patch'] + params['b_patch']
    D = x.shape[-1]
    cls = jnp.broadcast_to(params['cls_token'], (B, 1, D))
    x = jnp.concatenate([cls, x], axis=1) + params['pos_embed']
    scale = float(D) ** (-0.5)
    Dh = D // num_heads

    def ln(z, g, b):
        mu = z.mean(-1, keepdims=True)
        var = ((z - mu) ** 2).mean(-1, keepdims=True)
        return (z - mu) / jnp.sqrt(var + 1e-5) * g + b

    for blk in params['blocks']:
        y = ln(x, blk['g1'], blk['b1'])
        qkv = y @ blk['wqkv'] + blk['bqkv']
        q, k, v = qkv[..., :D], qkv[..., D:2 * D], qkv[..., 2 * D:]
        qh = q.reshape(B, -1, num_heads, Dh).transpose(0, 2, 1, 3)
        kh = k.reshape(B, -1, num_heads, Dh).transpose(0, 2, 1, 3)
        vh = v.reshape(B, -1, num_heads, Dh).transpose(0, 2, 1, 3)
        a = jax.nn.softmax((qh @ kh.transpose(0, 1, 3, 2)) * scale, axis=-1)
        ctx = (a @ vh).transpose(0, 2, 1, 3).reshape(B, -1, D)
        x = x + (ctx @ blk['wproj'] + blk['bproj'])
        y = ln(x, blk['g2'], blk['b2'])
        y = jax.nn.gelu(y @ blk['w1'] + blk['bb1'], approximate=False)
        x = x + (y @ blk['w2'] + blk['bb2'])
    x = ln(x, params['norm_g'], params['norm_b'])
    return x[:, 0] @ params['head_w'] + params['head_b']


# ---------------------------------------------------------------------------
# main
# ---------------------------------------------------------------------------
if __name__ == "__main__":
    B, C, IMG, P_SZ = 2, 3, 16, 4
    EMBED, DEPTH, HEADS, MLP_RATIO, CLASSES = 128, 2, 4, 4.0, 16
    NUM_PATCHES = (IMG // P_SZ) ** 2              # 16 patches -> 17 tokens w/ CLS
    N_TOK = NUM_PATCHES + 1
    N_PAD = _round_up(N_TOK, 32)                  # sublane-friendly token axis (32)
    K_IN = C * P_SZ * P_SZ
    K_PAD = _round_up(K_IN, 128)                  # MXU-friendly contraction dim
    C_PAD = _round_up(CLASSES, 128)               # lane-dense classifier output

    key = jax.random.PRNGKey(0)
    kx, kp = jax.random.split(key)
    x = jax.random.normal(kx, (B, C, IMG, IMG), dtype=jnp.float32)

    params = init_params(kp, in_chans=C, patch=P_SZ, embed_dim=EMBED,
                         depth=DEPTH, mlp_ratio=MLP_RATIO,
                         num_classes=CLASSES, num_patches=NUM_PATCHES)
    kparams = prepare_kernel_params(params, n_pad=N_PAD, k_pad=K_PAD, c_pad=C_PAD)

    fwd = jax.jit(functools.partial(vit_forward, patch=P_SZ, num_heads=HEADS,
                                    n_tokens=N_TOK, n_pad=N_PAD, k_pad=K_PAD,
                                    num_classes=CLASSES))
    out = jax.block_until_ready(fwd(x, kparams))
    assert out.shape == (B, CLASSES), out.shape

    ref = ref_forward(x, params, patch=P_SZ, num_heads=HEADS)
    if not bool(jnp.allclose(out, ref, atol=5e-2, rtol=5e-2)):
        raise AssertionError(
            "mismatch vs f32 reference: max abs err = "
            f"{float(jnp.max(jnp.abs(out - ref)))}")

    print("KERNEL_OK")
</pallas_src>

<mosaic_0001>
module attributes {stable_mosaic.version = 11 : i64} {
  func.func @patch_embed_kernel(%arg0: i32, %arg1: memref<64x128xbf16, #tpu.memory_space<vmem>>, %arg2: memref<128x128xbf16, #tpu.memory_space<vmem>>, %arg3: memref<64x128xf32, #tpu.memory_space<vmem>>, %arg4: memref<64x128xf32, #tpu.memory_space<vmem>>) attributes {dimension_semantics = [#tpu.dimension_semantics<parallel>], iteration_bounds = array<i64: 1>, scalar_prefetch = 0 : i64, scratch_operands = 0 : i64, tpu.core_type = #tpu.core_type<tc>, window_params = [{transform_indices = @transform_0, window_bounds = array<i64: 64, 128>}, {pipeline_mode = #tpu.pipeline_mode<synchronous>, transform_indices = @transform_1, window_bounds = array<i64: 128, 128>}, {transform_indices = @transform_2, window_bounds = array<i64: 64, 128>}, {transform_indices = @transform_3, window_bounds = array<i64: 64, 128>}]} {
    %c0 = arith.constant 0 : index
    %c0_0 = arith.constant 0 : index
    %0 = vector.load %arg1[%c0, %c0_0] : memref<64x128xbf16, #tpu.memory_space<vmem>>, vector<64x128xbf16>
    %c0_1 = arith.constant 0 : index
    %c0_2 = arith.constant 0 : index
    %1 = vector.load %arg2[%c0_1, %c0_2] : memref<128x128xbf16, #tpu.memory_space<vmem>>, vector<128x128xbf16>
    %cst = arith.constant dense<0.000000e+00> : vector<64x128xf32>
    %2 = tpu.matmul %0, %1, %cst {dimension_numbers = #tpu.dot_dimension_numbers<[1], [0], [0], [1], [0, 0, 1, 1], [], []>} : vector<64x128xbf16>, vector<128x128xbf16>, vector<64x128xf32> -> vector<64x128xf32>
    %c0_3 = arith.constant 0 : index
    %c0_4 = arith.constant 0 : index
    %3 = vector.load %arg3[%c0_3, %c0_4] : memref<64x128xf32, #tpu.memory_space<vmem>>, vector<64x128xf32>
    %4 = arith.addf %2, %3 : vector<64x128xf32>
    %c0_5 = arith.constant 0 : index
    %c0_6 = arith.constant 0 : index
    %5 = vector.load %arg4[%c0_5, %c0_6] : memref<64x128xf32, #tpu.memory_space<vmem>>, vector<64x128xf32>
    tpu.vector_store %arg4[%c0_5, %c0_6], %4 {strides = array<i32>} : memref<64x128xf32, #tpu.memory_space<vmem>>, vector<64x128xf32>,
    return
  }
  func.func @transform_0(%arg0: i32) -> (i32, i32) {
    %c0_i32 = arith.constant 0 : i32
    %c0_i32_0 = arith.constant 0 : i32
    return %arg0, %c0_i32 : i32, i32
  }
  func.func @transform_1(%arg0: i32) -> (i32, i32) {
    %c0_i32 = arith.constant 0 : i32
    %c0_i32_0 = arith.constant 0 : i32
    %c0_i32_1 = arith.constant 0 : i32
    return %c0_i32, %c0_i32_0 : i32, i32
  }
  func.func @transform_2(%arg0: i32) -> (i32, i32) {
    %c0_i32 = arith.constant 0 : i32
    %c0_i32_0 = arith.constant 0 : i32
    return %arg0, %c0_i32 : i32, i32
  }
  func.func @transform_3(%arg0: i32) -> (i32, i32) {
    %c0_i32 = arith.constant 0 : i32
    %c0_i32_0 = arith.constant 0 : i32
    return %arg0, %c0_i32 : i32, i32
  }
}

module attributes {stable_mosaic.version = 11 : i64} {
  func.func @head_kernel(%arg0: i32, %arg1: memref<2x128xf32, #tpu.memory_space<vmem>>, %arg2: memref<1x128xf32, #tpu.memory_space<vmem>>, %arg3: memref<1x128xf32, #tpu.memory_space<vmem>>, %arg4: memref<128x128xbf16, #tpu.memory_space<vmem>>, %arg5: memref<1x128xf32, #tpu.memory_space<vmem>>, %arg6: memref<2x128xf32, #tpu.memory_space<vmem>>) attributes {dimension_semantics = [#tpu.dimension_semantics<arbitrary>], iteration_bounds = array<i64: 1>, scalar_prefetch = 0 : i64, scratch_operands = 0 : i64, tpu.core_type = #tpu.core_type<tc>, window_params = [{pipeline_mode = #tpu.pipeline_mode<synchronous>, transform_indices = @transform_0, window_bounds = array<i64: 2, 128>}, {pipeline_mode = #tpu.pipeline_mode<synchronous>, transform_indices = @transform_1, window_bounds = array<i64: 1, 128>}, {pipeline_mode = #tpu.pipeline_mode<synchronous>, transform_indices = @transform_2, window_bounds = array<i64: 1, 128>}, {pipeline_mode = #tpu.pipeline_mode<synchronous>, transform_indices = @transform_3, window_bounds = array<i64: 128, 128>}, {pipeline_mode = #tpu.pipeline_mode<synchronous>, transform_indices = @transform_4, window_bounds = array<i64: 1, 128>}, {pipeline_mode = #tpu.pipeline_mode<synchronous>, transform_indices = @transform_5, window_bounds = array<i64: 2, 128>}]} {
    %c0 = arith.constant 0 : index
    %c0_0 = arith.constant 0 : index
    %0 = vector.load %arg1[%c0, %c0_0] : memref<2x128xf32, #tpu.memory_space<vmem>>, vector<2x128xf32>
    %c0_1 = arith.constant 0 : index
    %c0_2 = arith.constant 0 : index
    %1 = vector.load %arg2[%c0_1, %c0_2] : memref<1x128xf32, #tpu.memory_space<vmem>>, vector<1x128xf32>
    %c0_3 = arith.constant 0 : index
    %c0_4 = arith.constant 0 : index
    %2 = vector.load %arg3[%c0_3, %c0_4] : memref<1x128xf32, #tpu.memory_space<vmem>>, vector<1x128xf32>
    %cst = arith.constant dense<0.000000e+00> : vector<2xf32>
    %3 = vector.multi_reduction <add>, %0, %cst [1] : vector<2x128xf32> to vector<2xf32>
    %4 = vector.shape_cast %3 : vector<2xf32> to vector<2x1xf32>
    %cst_5 = arith.constant 1.280000e+02 : f32
    %5 = vector.broadcast %cst_5 : f32 to vector<2x1xf32>
    %6 = arith.divf %4, %5 : vector<2x1xf32>
    %7 = vector.broadcast %6 : vector<2x1xf32> to vector<2x128xf32>
    %8 = arith.subf %0, %7 : vector<2x128xf32>
    %9 = arith.mulf %8, %8 : vector<2x128xf32>
    %cst_6 = arith.constant dense<0.000000e+00> : vector<2xf32>
    %10 = vector.multi_reduction <add>, %9, %cst_6 [1] : vector<2x128xf32> to vector<2xf32>
    %11 = vector.shape_cast %10 : vector<2xf32> to vector<2x1xf32>
    %cst_7 = arith.constant 1.280000e+02 : f32
    %12 = vector.broadcast %cst_7 : f32 to vector<2x1xf32>
    %13 = arith.divf %11, %12 : vector<2x1xf32>
    %14 = vector.broadcast %6 : vector<2x1xf32> to vector<2x128xf32>
    %15 = arith.subf %0, %14 : vector<2x128xf32>
    %cst_8 = arith.constant 9.99999974E-6 : f32
    %16 = vector.broadcast %cst_8 : f32 to vector<2x1xf32>
    %17 = arith.addf %13, %16 : vector<2x1xf32>
    %18 = math.rsqrt %17 : vector<2x1xf32>
    %19 = vector.broadcast %18 : vector<2x1xf32> to vector<2x128xf32>
    %20 = arith.mulf %15, %19 : vector<2x128xf32>
    %21 = vector.broadcast %1 : vector<1x128xf32> to vector<2x128xf32>
    %22 = arith.mulf %20, %21 : vector<2x128xf32>
    %23 = vector.broadcast %2 : vector<1x128xf32> to vector<2x128xf32>
    %24 = arith.addf %22, %23 : vector<2x128xf32>
    %25 = arith.truncf %24 : vector<2x128xf32> to vector<2x128xbf16>
    %c0_9 = arith.constant 0 : index
    %c0_10 = arith.constant 0 : index
    %26 = vector.load %arg4[%c0_9, %c0_10] : memref<128x128xbf16, #tpu.memory_space<vmem>>, vector<128x128xbf16>
    %cst_11 = arith.constant dense<0.000000e+00> : vector<2x128xf32>
    %27 = tpu.matmul %25, %26, %cst_11 {dimension_numbers = #tpu.dot_dimension_numbers<[1], [0], [0], [1], [0, 0, 1, 1], [], []>} : vector<2x128xbf16>, vector<128x128xbf16>, vector<2x128xf32> -> vector<2x128xf32>
    %c0_12 = arith.constant 0 : index
    %c0_13 = arith.constant 0 : index
    %28 = vector.load %arg5[%c0_12, %c0_13] : memref<1x128xf32, #tpu.memory_space<vmem>>, vector<1x128xf32>
    %29 = vector.broadcast %28 : vector<1x128xf32> to vector<2x128xf32>
    %30 = arith.addf %27, %29 : vector<2x128xf32>
    %c0_14 = arith.constant 0 : index
    %c0_15 = arith.constant 0 : index
    %31 = vector.load %arg6[%c0_14, %c0_15] : memref<2x128xf32, #tpu.memory_space<vmem>>, vector<2x128xf32>
    tpu.vector_store %arg6[%c0_14, %c0_15], %30 {strides = array<i32>} : memref<2x128xf32, #tpu.memory_space<vmem>>, vector<2x128xf32>,
    return
  }
  func.func @transform_0(%arg0: i32) -> (i32, i32) {
    %c0_i32 = arith.constant 0 : i32
    %c0_i32_0 = arith.constant 0 : i32
    %c0_i32_1 = arith.constant 0 : i32
    return %c0_i32, %c0_i32_0 : i32, i32
  }
  func.func @transform_1(%arg0: i32) -> (i32, i32) {
    %c0_i32 = arith.constant 0 : i32
    %c0_i32_0 = arith.constant 0 : i32
    %c0_i32_1 = arith.constant 0 : i32
    return %c0_i32, %c0_i32_0 : i32, i32
  }
  func.func @transform_2(%arg0: i32) -> (i32, i32) {
    %c0_i32 = arith.constant 0 : i32
    %c0_i32_0 = arith.constant 0 : i32
    %c0_i32_1 = arith.constant 0 : i32
    return %c0_i32, %c0_i32_0 : i32, i32
  }
  func.func @transform_3(%arg0: i32) -> (i32, i32) {
    %c0_i32 = arith.constant 0 : i32
    %c0_i32_0 = arith.constant 0 : i32
    %c0_i32_1 = arith.constant 0 : i32
    return %c0_i32, %c0_i32_0 : i32, i32
  }
  func.func @transform_4(%arg0: i32) -> (i32, i32) {
    %c0_i32 = arith.constant 0 : i32
    %c0_i32_0 = arith.constant 0 : i32
    %c0_i32_1 = arith.constant 0 : i32
    return %c0_i32, %c0_i32_0 : i32, i32
  }
  func.func @transform_5(%arg0: i32) -> (i32, i32) {
    %c0_i32 = arith.constant 0 : i32
    %c0_i32_0 = arith.constant 0 : i32
    %c0_i32_1 = arith.constant 0 : i32
    return %c0_i32, %c0_i32_0 : i32, i32
  }
}

module attributes {stable_mosaic.version = 11 : i64} {
  func.func @block_kernel(%arg0: i32, %arg1: memref<1x32x128xf32, #tpu.memory_space<vmem>>, %arg2: memref<1x128xf32, #tpu.memory_space<vmem>>, %arg3: memref<1x128xf32, #tpu.memory_space<vmem>>, %arg4: memref<128x384xbf16, #tpu.memory_space<vmem>>, %arg5: memref<1x384xf32, #tpu.memory_space<vmem>>, %arg6: memref<128x128xbf16, #tpu.memory_space<vmem>>, %arg7: memref<1x128xf32, #tpu.memory_space<vmem>>, %arg8: memref<1x128xf32, #tpu.memory_space<vmem>>, %arg9: memref<1x128xf32, #tpu.memory_space<vmem>>, %arg10: memref<128x512xbf16, #tpu.memory_space<vmem>>, %arg11: memref<1x512xf32, #tpu.memory_space<vmem>>, %arg12: memref<512x128xbf16, #tpu.memory_space<vmem>>, %arg13: memref<1x128xf32, #tpu.memory_space<vmem>>, %arg14: memref<1x32x128xf32, #tpu.memory_space<vmem>>) attributes {dimension_semantics = [#tpu.dimension_semantics<parallel>], iteration_bounds = array<i64: 2>, scalar_prefetch = 0 : i64, scratch_operands = 0 : i64, tpu.core_type = #tpu.core_type<tc>, window_params = [{transform_indices = @transform_0, window_bounds = array<i64: 1, 32, 128>}, {pipeline_mode = #tpu.pipeline_mode<synchronous>, transform_indices = @transform_1, window_bounds = array<i64: 1, 128>}, {pipeline_mode = #tpu.pipeline_mode<synchronous>, transform_indices = @transform_2, window_bounds = array<i64: 1, 128>}, {pipeline_mode = #tpu.pipeline_mode<synchronous>, transform_indices = @transform_3, window_bounds = array<i64: 128, 384>}, {pipeline_mode = #tpu.pipeline_mode<synchronous>, transform_indices = @transform_4, window_bounds = array<i64: 1, 384>}, {pipeline_mode = #tpu.pipeline_mode<synchronous>, transform_indices = @transform_5, window_bounds = array<i64: 128, 128>}, {pipeline_mode = #tpu.pipeline_mode<synchronous>, transform_indices = @transform_6, window_bounds = array<i64: 1, 128>}, {pipeline_mode = #tpu.pipeline_mode<synchronous>, transform_indices = @transform_7, window_bounds = array<i64: 1, 128>}, {pipeline_mode = #tpu.pipeline_mode<synchronous>, transform_indices = @transform_8, window_bounds = array<i64: 1, 128>}, {pipeline_mode = #tpu.pipeline_mode<synchronous>, transform_indices = @transform_9, window_bounds = array<i64: 128, 512>}, {pipeline_mode = #tpu.pipeline_mode<synchronous>, transform_indices = @transform_10, window_bounds = array<i64: 1, 512>}, {pipeline_mode = #tpu.pipeline_mode<synchronous>, transform_indices = @transform_11, window_bounds = array<i64: 512, 128>}, {pipeline_mode = #tpu.pipeline_mode<synchronous>, transform_indices = @transform_12, window_bounds = array<i64: 1, 128>}, {transform_indices = @transform_13, window_bounds = array<i64: 1, 32, 128>}]} {
    %c0 = arith.constant 0 : index
    %c0_0 = arith.constant 0 : index
    %c0_1 = arith.constant 0 : index
    %0 = vector.load %arg1[%c0, %c0_0, %c0_1] : memref<1x32x128xf32, #tpu.memory_space<vmem>>, vector<1x32x128xf32>
    %1 = vector.shape_cast %0 : vector<1x32x128xf32> to vector<32x128xf32>
    %c0_2 = arith.constant 0 : index
    %c0_3 = arith.constant 0 : index
    %2 = vector.load %arg2[%c0_2, %c0_3] : memref<1x128xf32, #tpu.memory_space<vmem>>, vector<1x128xf32>
    %c0_4 = arith.constant 0 : index
    %c0_5 = arith.constant 0 : index
    %3 = vector.load %arg3[%c0_4, %c0_5] : memref<1x128xf32, #tpu.memory_space<vmem>>, vector<1x128xf32>
    %cst = arith.constant dense<0.000000e+00> : vector<32xf32>
    %4 = vector.multi_reduction <add>, %1, %cst [1] : vector<32x128xf32> to vector<32xf32>
    %5 = vector.shape_cast %4 : vector<32xf32> to vector<32x1xf32>
    %cst_6 = arith.constant 1.280000e+02 : f32
    %6 = vector.broadcast %cst_6 : f32 to vector<32x1xf32>
    %7 = arith.divf %5, %6 : vector<32x1xf32>
    %8 = vector.broadcast %7 : vector<32x1xf32> to vector<32x128xf32>
    %9 = arith.subf %1, %8 : vector<32x128xf32>
    %10 = arith.mulf %9, %9 : vector<32x128xf32>
    %cst_7 = arith.constant dense<0.000000e+00> : vector<32xf32>
    %11 = vector.multi_reduction <add>, %10, %cst_7 [1] : vector<32x128xf32> to vector<32xf32>
    %12 = vector.shape_cast %11 : vector<32xf32> to vector<32x1xf32>
    %cst_8 = arith.constant 1.280000e+02 : f32
    %13 = vector.broadcast %cst_8 : f32 to vector<32x1xf32>
    %14 = arith.divf %12, %13 : vector<32x1xf32>
    %15 = vector.broadcast %7 : vector<32x1xf32> to vector<32x128xf32>
    %16 = arith.subf %1, %15 : vector<32x128xf32>
    %cst_9 = arith.constant 9.99999974E-6 : f32
    %17 = vector.broadcast %cst_9 : f32 to vector<32x1xf32>
    %18 = arith.addf %14, %17 : vector<32x1xf32>
    %19 = math.rsqrt %18 : vector<32x1xf32>
    %20 = vector.broadcast %19 : vector<32x1xf32> to vector<32x128xf32>
    %21 = arith.mulf %16, %20 : vector<32x128xf32>
    %22 = vector.broadcast %2 : vector<1x128xf32> to vector<32x128xf32>
    %23 = arith.mulf %21, %22 : vector<32x128xf32>
    %24 = vector.broadcast %3 : vector<1x128xf32> to vector<32x128xf32>
    %25 = arith.addf %23, %24 : vector<32x128xf32>
    %26 = arith.truncf %25 : vector<32x128xf32> to vector<32x128xbf16>
    %c0_10 = arith.constant 0 : index
    %c0_11 = arith.constant 0 : index
    %27 = vector.load %arg4[%c0_10, %c0_11] : memref<128x384xbf16, #tpu.memory_space<vmem>>, vector<128x384xbf16>
    %cst_12 = arith.constant dense<0.000000e+00> : vector<32x384xf32>
    %28 = tpu.matmul %26, %27, %cst_12 {dimension_numbers = #tpu.dot_dimension_numbers<[1], [0], [0], [1], [0, 0, 1, 1], [], []>} : vector<32x128xbf16>, vector<128x384xbf16>, vector<32x384xf32> -> vector<32x384xf32>
    %c0_13 = arith.constant 0 : index
    %c0_14 = arith.constant 0 : index
    %29 = vector.load %arg5[%c0_13, %c0_14] : memref<1x384xf32, #tpu.memory_space<vmem>>, vector<1x384xf32>
    %30 = vector.broadcast %29 : vector<1x384xf32> to vector<32x384xf32>
    %31 = arith.addf %28, %30 : vector<32x384xf32>
    %32 = tpu.iota {dimensions = array<i32: 1>} : vector<32x32xi32>
    %c17_i32 = arith.constant 17 : i32
    %33 = vector.broadcast %c17_i32 : i32 to vector<32x32xi32>
    %34 = arith.cmpi slt, %32, %33 : vector<32x32xi32>
    %35 = vector.extract_strided_slice %31 {offsets = [0, 0], sizes = [32, 32], strides = [1, 1]} : vector<32x384xf32> to vector<32x32xf32>
    %36 = vector.extract_strided_slice %31 {offsets = [0, 128], sizes = [32, 32], strides = [1, 1]} : vector<32x384xf32> to vector<32x32xf32>
    %37 = vector.extract_strided_slice %31 {offsets = [0, 256], sizes = [32, 32], strides = [1, 1]} : vector<32x384xf32> to vector<32x32xf32>
    %38 = arith.truncf %35 : vector<32x32xf32> to vector<32x32xbf16>
    %39 = arith.truncf %36 : vector<32x32xf32> to vector<32x32xbf16>
    %cst_15 = arith.constant dense<0.000000e+00> : vector<32x32xf32>
    %40 = tpu.matmul %38, %39, %cst_15 {dimension_numbers = #tpu.dot_dimension_numbers<[1], [1], [0], [0], [0, 0, 1, 0], [], []>} : vector<32x32xbf16>, vector<32x32xbf16>, vector<32x32xf32> -> vector<32x32xf32>
    %cst_16 = arith.constant 0.0883883461 : f32
    %41 = vector.broadcast %cst_16 : f32 to vector<32x32xf32>
    %42 = arith.mulf %40, %41 : vector<32x32xf32>
    %cst_17 = arith.constant -1.000000e+30 : f32
    %43 = vector.broadcast %cst_17 : f32 to vector<32x32xf32>
    %44 = arith.select %34, %42, %43 : vector<32x32xi1>, vector<32x32xf32>
    %cst_18 = arith.constant dense<0xFF800000> : vector<32xf32>
    %45 = vector.multi_reduction <maximumf>, %44, %cst_18 [1] : vector<32x32xf32> to vector<32xf32>
    %46 = vector.shape_cast %45 : vector<32xf32> to vector<32x1xf32>
    %47 = vector.broadcast %46 : vector<32x1xf32> to vector<32x32xf32>
    %48 = arith.subf %44, %47 : vector<32x32xf32>
    %49 = math.exp %48 : vector<32x32xf32>
    %cst_19 = arith.constant dense<0.000000e+00> : vector<32xf32>
    %50 = vector.multi_reduction <add>, %49, %cst_19 [1] : vector<32x32xf32> to vector<32xf32>
    %51 = vector.shape_cast %50 : vector<32xf32> to vector<32x1xf32>
    %52 = tpu.reciprocal %51 {approx = true} : vector<32x1xf32> -> vector<32x1xf32>
    %53 = vector.broadcast %52 : vector<32x1xf32> to vector<32x32xf32>
    %54 = arith.mulf %49, %53 : vector<32x32xf32>
    %55 = arith.truncf %54 : vector<32x32xf32> to vector<32x32xbf16>
    %56 = arith.truncf %37 : vector<32x32xf32> to vector<32x32xbf16>
    %cst_20 = arith.constant dense<0.000000e+00> : vector<32x32xf32>
    %57 = tpu.matmul %55, %56, %cst_20 {dimension_numbers = #tpu.dot_dimension_numbers<[1], [0], [0], [1], [0, 0, 1, 1], [], []>} : vector<32x32xbf16>, vector<32x32xbf16>, vector<32x32xf32> -> vector<32x32xf32>
    %58 = vector.extract_strided_slice %31 {offsets = [0, 32], sizes = [32, 32], strides = [1, 1]} : vector<32x384xf32> to vector<32x32xf32>
    %59 = vector.extract_strided_slice %31 {offsets = [0, 160], sizes = [32, 32], strides = [1, 1]} : vector<32x384xf32> to vector<32x32xf32>
    %60 = vector.extract_strided_slice %31 {offsets = [0, 288], sizes = [32, 32], strides = [1, 1]} : vector<32x384xf32> to vector<32x32xf32>
    %61 = arith.truncf %58 : vector<32x32xf32> to vector<32x32xbf16>
    %62 = arith.truncf %59 : vector<32x32xf32> to vector<32x32xbf16>
    %cst_21 = arith.constant dense<0.000000e+00> : vector<32x32xf32>
    %63 = tpu.matmul %61, %62, %cst_21 {dimension_numbers = #tpu.dot_dimension_numbers<[1], [1], [0], [0], [0, 0, 1, 0], [], []>} : vector<32x32xbf16>, vector<32x32xbf16>, vector<32x32xf32> -> vector<32x32xf32>
    %cst_22 = arith.constant 0.0883883461 : f32
    %64 = vector.broadcast %cst_22 : f32 to vector<32x32xf32>
    %65 = arith.mulf %63, %64 : vector<32x32xf32>
    %cst_23 = arith.constant -1.000000e+30 : f32
    %66 = vector.broadcast %cst_23 : f32 to vector<32x32xf32>
    %67 = arith.select %34, %65, %66 : vector<32x32xi1>, vector<32x32xf32>
    %cst_24 = arith.constant dense<0xFF800000> : vector<32xf32>
    %68 = vector.multi_reduction <maximumf>, %67, %cst_24 [1] : vector<32x32xf32> to vector<32xf32>
    %69 = vector.shape_cast %68 : vector<32xf32> to vector<32x1xf32>
    %70 = vector.broadcast %69 : vector<32x1xf32> to vector<32x32xf32>
    %71 = arith.subf %67, %70 : vector<32x32xf32>
    %72 = math.exp %71 : vector<32x32xf32>
    %cst_25 = arith.constant dense<0.000000e+00> : vector<32xf32>
    %73 = vector.multi_reduction <add>, %72, %cst_25 [1] : vector<32x32xf32> to vector<32xf32>
    %74 = vector.shape_cast %73 : vector<32xf32> to vector<32x1xf32>
    %75 = tpu.reciprocal %74 {approx = true} : vector<32x1xf32> -> vector<32x1xf32>
    %76 = vector.broadcast %75 : vector<32x1xf32> to vector<32x32xf32>
    %77 = arith.mulf %72, %76 : vector<32x32xf32>
    %78 = arith.truncf %77 : vector<32x32xf32> to vector<32x32xbf16>
    %79 = arith.truncf %60 : vector<32x32xf32> to vector<32x32xbf16>
    %cst_26 = arith.constant dense<0.000000e+00> : vector<32x32xf32>
    %80 = tpu.matmul %78, %79, %cst_26 {dimension_numbers = #tpu.dot_dimension_numbers<[1], [0], [0], [1], [0, 0, 1, 1], [], []>} : vector<32x32xbf16>, vector<32x32xbf16>, vector<32x32xf32> -> vector<32x32xf32>
    %81 = vector.extract_strided_slice %31 {offsets = [0, 64], sizes = [32, 32], strides = [1, 1]} : vector<32x384xf32> to vector<32x32xf32>
    %82 = vector.extract_strided_slice %31 {offsets = [0, 192], sizes = [32, 32], strides = [1, 1]} : vector<32x384xf32> to vector<32x32xf32>
    %83 = vector.extract_strided_slice %31 {offsets = [0, 320], sizes = [32, 32], strides = [1, 1]} : vector<32x384xf32> to vector<32x32xf32>
    %84 = arith.truncf %81 : vector<32x32xf32> to vector<32x32xbf16>
    %85 = arith.truncf %82 : vector<32x32xf32> to vector<32x32xbf16>
    %cst_27 = arith.constant dense<0.000000e+00> : vector<32x32xf32>
    %86 = tpu.matmul %84, %85, %cst_27 {dimension_numbers = #tpu.dot_dimension_numbers<[1], [1], [0], [0], [0, 0, 1, 0], [], []>} : vector<32x32xbf16>, vector<32x32xbf16>, vector<32x32xf32> -> vector<32x32xf32>
    %cst_28 = arith.constant 0.0883883461 : f32
    %87 = vector.broadcast %cst_28 : f32 to vector<32x32xf32>
    %88 = arith.mulf %86, %87 : vector<32x32xf32>
    %cst_29 = arith.constant -1.000000e+30 : f32
    %89 = vector.broadcast %cst_29 : f32 to vector<32x32xf32>
    %90 = arith.select %34, %88, %89 : vector<32x32xi1>, vector<32x32xf32>
    %cst_30 = arith.constant dense<0xFF800000> : vector<32xf32>
    %91 = vector.multi_reduction <maximumf>, %90, %cst_30 [1] : vector<32x32xf32> to vector<32xf32>
    %92 = vector.shape_cast %91 : vector<32xf32> to vector<32x1xf32>
    %93 = vector.broadcast %92 : vector<32x1xf32> to vector<32x32xf32>
    %94 = arith.subf %90, %93 : vector<32x32xf32>
    %95 = math.exp %94 : vector<32x32xf32>
    %cst_31 = arith.constant dense<0.000000e+00> : vector<32xf32>
    %96 = vector.multi_reduction <add>, %95, %cst_31 [1] : vector<32x32xf32> to vector<32xf32>
    %97 = vector.shape_cast %96 : vector<32xf32> to vector<32x1xf32>
    %98 = tpu.reciprocal %97 {approx = true} : vector<32x1xf32> -> vector<32x1xf32>
    %99 = vector.broadcast %98 : vector<32x1xf32> to vector<32x32xf32>
    %100 = arith.mulf %95, %99 : vector<32x32xf32>
    %101 = arith.truncf %100 : vector<32x32xf32> to vector<32x32xbf16>
    %102 = arith.truncf %83 : vector<32x32xf32> to vector<32x32xbf16>
    %cst_32 = arith.constant dense<0.000000e+00> : vector<32x32xf32>
    %103 = tpu.matmul %101, %102, %cst_32 {dimension_numbers = #tpu.dot_dimension_numbers<[1], [0], [0], [1], [0, 0, 1, 1], [], []>} : vector<32x32xbf16>, vector<32x32xbf16>, vector<32x32xf32> -> vector<32x32xf32>
    %104 = vector.extract_strided_slice %31 {offsets = [0, 96], sizes = [32, 32], strides = [1, 1]} : vector<32x384xf32> to vector<32x32xf32>
    %105 = vector.extract_strided_slice %31 {offsets = [0, 224], sizes = [32, 32], strides = [1, 1]} : vector<32x384xf32> to vector<32x32xf32>
    %106 = vector.extract_strided_slice %31 {offsets = [0, 352], sizes = [32, 32], strides = [1, 1]} : vector<32x384xf32> to vector<32x32xf32>
    %107 = arith.truncf %104 : vector<32x32xf32> to vector<32x32xbf16>
    %108 = arith.truncf %105 : vector<32x32xf32> to vector<32x32xbf16>
    %cst_33 = arith.constant dense<0.000000e+00> : vector<32x32xf32>
    %109 = tpu.matmul %107, %108, %cst_33 {dimension_numbers = #tpu.dot_dimension_numbers<[1], [1], [0], [0], [0, 0, 1, 0], [], []>} : vector<32x32xbf16>, vector<32x32xbf16>, vector<32x32xf32> -> vector<32x32xf32>
    %cst_34 = arith.constant 0.0883883461 : f32
    %110 = vector.broadcast %cst_34 : f32 to vector<32x32xf32>
    %111 = arith.mulf %109, %110 : vector<32x32xf32>
    %cst_35 = arith.constant -1.000000e+30 : f32
    %112 = vector.broadcast %cst_35 : f32 to vector<32x32xf32>
    %113 = arith.select %34, %111, %112 : vector<32x32xi1>, vector<32x32xf32>
    %cst_36 = arith.constant dense<0xFF800000> : vector<32xf32>
    %114 = vector.multi_reduction <maximumf>, %113, %cst_36 [1] : vector<32x32xf32> to vector<32xf32>
    %115 = vector.shape_cast %114 : vector<32xf32> to vector<32x1xf32>
    %116 = vector.broadcast %115 : vector<32x1xf32> to vector<32x32xf32>
    %117 = arith.subf %113, %116 : vector<32x32xf32>
    %118 = math.exp %117 : vector<32x32xf32>
    %cst_37 = arith.constant dense<0.000000e+00> : vector<32xf32>
    %119 = vector.multi_reduction <add>, %118, %cst_37 [1] : vector<32x32xf32> to vector<32xf32>
    %120 = vector.shape_cast %119 : vector<32xf32> to vector<32x1xf32>
    %121 = tpu.reciprocal %120 {approx = true} : vector<32x1xf32> -> vector<32x1xf32>
    %122 = vector.broadcast %121 : vector<32x1xf32> to vector<32x32xf32>
    %123 = arith.mulf %118, %122 : vector<32x32xf32>
    %124 = arith.truncf %123 : vector<32x32xf32> to vector<32x32xbf16>
    %125 = arith.truncf %106 : vector<32x32xf32> to vector<32x32xbf16>
    %cst_38 = arith.constant dense<0.000000e+00> : vector<32x32xf32>
    %126 = tpu.matmul %124, %125, %cst_38 {dimension_numbers = #tpu.dot_dimension_numbers<[1], [0], [0], [1], [0, 0, 1, 1], [], []>} : vector<32x32xbf16>, vector<32x32xbf16>, vector<32x32xf32> -> vector<32x32xf32>
    %127 = tpu.concatenate %57, %80, %103, %126 in 1 : vector<32x32xf32>, vector<32x32xf32>, vector<32x32xf32>, vector<32x32xf32> -> vector<32x128xf32>
    %128 = arith.truncf %127 : vector<32x128xf32> to vector<32x128xbf16>
    %c0_39 = arith.constant 0 : index
    %c0_40 = arith.constant 0 : index
    %129 = vector.load %arg6[%c0_39, %c0_40] : memref<128x128xbf16, #tpu.memory_space<vmem>>, vector<128x128xbf16>
    %cst_41 = arith.constant dense<0.000000e+00> : vector<32x128xf32>
    %130 = tpu.matmul %128, %129, %cst_41 {dimension_numbers = #tpu.dot_dimension_numbers<[1], [0], [0], [1], [0, 0, 1, 1], [], []>} : vector<32x128xbf16>, vector<128x128xbf16>, vector<32x128xf32> -> vector<32x128xf32>
    %131 = arith.addf %1, %130 : vector<32x128xf32>
    %c0_42 = arith.constant 0 : index
    %c0_43 = arith.constant 0 : index
    %132 = vector.load %arg7[%c0_42, %c0_43] : memref<1x128xf32, #tpu.memory_space<vmem>>, vector<1x128xf32>
    %133 = vector.broadcast %132 : vector<1x128xf32> to vector<32x128xf32>
    %134 = arith.addf %131, %133 : vector<32x128xf32>
    %c0_44 = arith.constant 0 : index
    %c0_45 = arith.constant 0 : index
    %135 = vector.load %arg8[%c0_44, %c0_45] : memref<1x128xf32, #tpu.memory_space<vmem>>, vector<1x128xf32>
    %c0_46 = arith.constant 0 : index
    %c0_47 = arith.constant 0 : index
    %136 = vector.load %arg9[%c0_46, %c0_47] : memref<1x128xf32, #tpu.memory_space<vmem>>, vector<1x128xf32>
    %cst_48 = arith.constant dense<0.000000e+00> : vector<32xf32>
    %137 = vector.multi_reduction <add>, %134, %cst_48 [1] : vector<32x128xf32> to vector<32xf32>
    %138 = vector.shape_cast %137 : vector<32xf32> to vector<32x1xf32>
    %cst_49 = arith.constant 1.280000e+02 : f32
    %139 = vector.broadcast %cst_49 : f32 to vector<32x1xf32>
    %140 = arith.divf %138, %139 : vector<32x1xf32>
    %141 = vector.broadcast %140 : vector<32x1xf32> to vector<32x128xf32>
    %142 = arith.subf %134, %141 : vector<32x128xf32>
    %143 = arith.mulf %142, %142 : vector<32x128xf32>
    %cst_50 = arith.constant dense<0.000000e+00> : vector<32xf32>
    %144 = vector.multi_reduction <add>, %143, %cst_50 [1] : vector<32x128xf32> to vector<32xf32>
    %145 = vector.shape_cast %144 : vector<32xf32> to vector<32x1xf32>
    %cst_51 = arith.constant 1.280000e+02 : f32
    %146 = vector.broadcast %cst_51 : f32 to vector<32x1xf32>
    %147 = arith.divf %145, %146 : vector<32x1xf32>
    %148 = vector.broadcast %140 : vector<32x1xf32> to vector<32x128xf32>
    %149 = arith.subf %134, %148 : vector<32x128xf32>
    %cst_52 = arith.constant 9.99999974E-6 : f32
    %150 = vector.broadcast %cst_52 : f32 to vector<32x1xf32>
    %151 = arith.addf %147, %150 : vector<32x1xf32>
    %152 = math.rsqrt %151 : vector<32x1xf32>
    %153 = vector.broadcast %152 : vector<32x1xf32> to vector<32x128xf32>
    %154 = arith.mulf %149, %153 : vector<32x128xf32>
    %155 = vector.broadcast %135 : vector<1x128xf32> to vector<32x128xf32>
    %156 = arith.mulf %154, %155 : vector<32x128xf32>
    %157 = vector.broadcast %136 : vector<1x128xf32> to vector<32x128xf32>
    %158 = arith.addf %156, %157 : vector<32x128xf32>
    %159 = arith.truncf %158 : vector<32x128xf32> to vector<32x128xbf16>
    %c0_53 = arith.constant 0 : index
    %c0_54 = arith.constant 0 : index
    %160 = vector.load %arg10[%c0_53, %c0_54] : memref<128x512xbf16, #tpu.memory_space<vmem>>, vector<128x512xbf16>
    %cst_55 = arith.constant dense<0.000000e+00> : vector<32x512xf32>
    %161 = tpu.matmul %159, %160, %cst_55 {dimension_numbers = #tpu.dot_dimension_numbers<[1], [0], [0], [1], [0, 0, 1, 1], [], []>} : vector<32x128xbf16>, vector<128x512xbf16>, vector<32x512xf32> -> vector<32x512xf32>
    %c0_56 = arith.constant 0 : index
    %c0_57 = arith.constant 0 : index
    %162 = vector.load %arg11[%c0_56, %c0_57] : memref<1x512xf32, #tpu.memory_space<vmem>>, vector<1x512xf32>
    %163 = vector.broadcast %162 : vector<1x512xf32> to vector<32x512xf32>
    %164 = arith.addf %161, %163 : vector<32x512xf32>
    %165 = arith.mulf %164, %164 : vector<32x512xf32>
    %166 = arith.mulf %164, %165 : vector<32x512xf32>
    %cst_58 = arith.constant 4.471500e-02 : f32
    %167 = vector.broadcast %cst_58 : f32 to vector<32x512xf32>
    %168 = arith.mulf %167, %166 : vector<32x512xf32>
    %169 = arith.addf %164, %168 : vector<32x512xf32>
    %cst_59 = arith.constant 0.797884583 : f32
    %170 = vector.broadcast %cst_59 : f32 to vector<32x512xf32>
    %171 = arith.mulf %170, %169 : vector<32x512xf32>
    %172 = math.tanh %171 : vector<32x512xf32>
    %cst_60 = arith.constant 1.000000e+00 : f32
    %173 = vector.broadcast %cst_60 : f32 to vector<32x512xf32>
    %174 = arith.addf %173, %172 : vector<32x512xf32>
    %cst_61 = arith.constant 5.000000e-01 : f32
    %175 = vector.broadcast %cst_61 : f32 to vector<32x512xf32>
    %176 = arith.mulf %175, %174 : vector<32x512xf32>
    %177 = arith.mulf %164, %176 : vector<32x512xf32>
    %178 = arith.truncf %177 : vector<32x512xf32> to vector<32x512xbf16>
    %c0_62 = arith.constant 0 : index
    %c0_63 = arith.constant 0 : index
    %179 = vector.load %arg12[%c0_62, %c0_63] : memref<512x128xbf16, #tpu.memory_space<vmem>>, vector<512x128xbf16>
    %cst_64 = arith.constant dense<0.000000e+00> : vector<32x128xf32>
    %180 = tpu.matmul %178, %179, %cst_64 {dimension_numbers = #tpu.dot_dimension_numbers<[1], [0], [0], [1], [0, 0, 1, 1], [], []>} : vector<32x512xbf16>, vector<512x128xbf16>, vector<32x128xf32> -> vector<32x128xf32>
    %181 = arith.addf %134, %180 : vector<32x128xf32>
    %c0_65 = arith.constant 0 : index
    %c0_66 = arith.constant 0 : index
    %182 = vector.load %arg13[%c0_65, %c0_66] : memref<1x128xf32, #tpu.memory_space<vmem>>, vector<1x128xf32>
    %183 = vector.broadcast %182 : vector<1x128xf32> to vector<32x128xf32>
    %184 = arith.addf %181, %183 : vector<32x128xf32>
    %185 = tpu.iota {dimensions = array<i32: 0>} : vector<32x128xi32>
    %c17_i32_67 = arith.constant 17 : i32
    %186 = vector.broadcast %c17_i32_67 : i32 to vector<32x128xi32>
    %187 = arith.cmpi slt, %185, %186 : vector<32x128xi32>
    %cst_68 = arith.constant 0.000000e+00 : f32
    %188 = vector.broadcast %cst_68 : f32 to vector<32x128xf32>
    %189 = arith.select %187, %184, %188 : vector<32x128xi1>, vector<32x128xf32>
    %c0_69 = arith.constant 0 : index
    %c0_70 = arith.constant 0 : index
    %c0_71 = arith.constant 0 : index
    %190 = vector.load %arg14[%c0_69, %c0_70, %c0_71] : memref<1x32x128xf32, #tpu.memory_space<vmem>>, vector<1x32x128xf32>
    %191 = vector.shape_cast %190 : vector<1x32x128xf32> to vector<32x128xf32>
    %192 = vector.shape_cast %189 : vector<32x128xf32> to vector<1x32x128xf32>
    tpu.vector_store %arg14[%c0_69, %c0_70, %c0_71], %192 {strides = array<i32>} : memref<1x32x128xf32, #tpu.memory_space<vmem>>, vector<1x32x128xf32>,
    return
  }
  func.func @transform_0(%arg0: i32) -> (i32, i32, i32) {
    %c0_i32 = arith.constant 0 : i32
    %c0_i32_0 = arith.constant 0 : i32
    %c0_i32_1 = arith.constant 0 : i32
    return %arg0, %c0_i32, %c0_i32_0 : i32, i32, i32
  }
  func.func @transform_1(%arg0: i32) -> (i32, i32) {
    %c0_i32 = arith.constant 0 : i32
    %c0_i32_0 = arith.constant 0 : i32
    %c0_i32_1 = arith.constant 0 : i32
    return %c0_i32, %c0_i32_0 : i32, i32
  }
  func.func @transform_2(%arg0: i32) -> (i32, i32) {
    %c0_i32 = arith.constant 0 : i32
    %c0_i32_0 = arith.constant 0 : i32
    %c0_i32_1 = arith.constant 0 : i32
    return %c0_i32, %c0_i32_0 : i32, i32
  }
  func.func @transform_3(%arg0: i32) -> (i32, i32) {
    %c0_i32 = arith.constant 0 : i32
    %c0_i32_0 = arith.constant 0 : i32
    %c0_i32_1 = arith.constant 0 : i32
    return %c0_i32, %c0_i32_0 : i32, i32
  }
  func.func @transform_4(%arg0: i32) -> (i32, i32) {
    %c0_i32 = arith.constant 0 : i32
    %c0_i32_0 = arith.constant 0 : i32
    %c0_i32_1 = arith.constant 0 : i32
    return %c0_i32, %c0_i32_0 : i32, i32
  }
  func.func @transform_5(%arg0: i32) -> (i32, i32) {
    %c0_i32 = arith.constant 0 : i32
    %c0_i32_0 = arith.constant 0 : i32
    %c0_i32_1 = arith.constant 0 : i32
    return %c0_i32, %c0_i32_0 : i32, i32
  }
  func.func @transform_6(%arg0: i32) -> (i32, i32) {
    %c0_i32 = arith.constant 0 : i32
    %c0_i32_0 = arith.constant 0 : i32
    %c0_i32_1 = arith.constant 0 : i32
    return %c0_i32, %c0_i32_0 : i32, i32
  }
  func.func @transform_7(%arg0: i32) -> (i32, i32) {
    %c0_i32 = arith.constant 0 : i32
    %c0_i32_0 = arith.constant 0 : i32
    %c0_i32_1 = arith.constant 0 : i32
    return %c0_i32, %c0_i32_0 : i32, i32
  }
  func.func @transform_8(%arg0: i32) -> (i32, i32) {
    %c0_i32 = arith.constant 0 : i32
    %c0_i32_0 = arith.constant 0 : i32
    %c0_i32_1 = arith.constant 0 : i32
    return %c0_i32, %c0_i32_0 : i32, i32
  }
  func.func @transform_9(%arg0: i32) -> (i32, i32) {
    %c0_i32 = arith.constant 0 : i32
    %c0_i32_0 = arith.constant 0 : i32
    %c0_i32_1 = arith.constant 0 : i32
    return %c0_i32, %c0_i32_0 : i32, i32
  }
  func.func @transform_10(%arg0: i32) -> (i32, i32) {
    %c0_i32 = arith.constant 0 : i32
    %c0_i32_0 = arith.constant 0 : i32
    %c0_i32_1 = arith.constant 0 : i32
    return %c0_i32, %c0_i32_0 : i32, i32
  }
  func.func @transform_11(%arg0: i32) -> (i32, i32) {
    %c0_i32 = arith.constant 0 : i32
    %c0_i32_0 = arith.constant 0 : i32
    %c0_i32_1 = arith.constant 0 : i32
    return %c0_i32, %c0_i32_0 : i32, i32
  }
  func.func @transform_12(%arg0: i32) -> (i32, i32) {
    %c0_i32 = arith.constant 0 : i32
    %c0_i32_0 = arith.constant 0 : i32
    %c0_i32_1 = arith.constant 0 : i32
    return %c0_i32, %c0_i32_0 : i32, i32
  }
  func.func @transform_13(%arg0: i32) -> (i32, i32, i32) {
    %c0_i32 = arith.constant 0 : i32
    %c0_i32_0 = arith.constant 0 : i32
    %c0_i32_1 = arith.constant 0 : i32
    return %arg0, %c0_i32, %c0_i32_0 : i32, i32, i32
  }
}

</mosaic_0001>

<llo_original>
// kernel: vit_forward.7
$region0: #{vit_forward.7}
  #allocation0 [shape = 'u32[]', space=smem, size = 0x4, offset = 0x4, fixed_abs, tag = 'smem constant byte address 0x4 - core index']
  #allocation1 [shape = 'u32[144,128]{1,0:T(1,128)}', space=vmem, size = 0x12000, scoped, tag = 'internal scratch']
  %s0 = inlined_call_operand.vmem [shape: f32[2,128], index: 0, kind: input, shape index: {}]
  %s1 = inlined_call_operand.vmem [shape: f32[1,128], index: 1, kind: input, shape index: {}]
  %s2 = inlined_call_operand.vmem [shape: f32[1,128], index: 2, kind: input, shape index: {}]
  %s3 = inlined_call_operand.vmem [shape: bf16[128,128], index: 3, kind: input, shape index: {}]
  %s4 = inlined_call_operand.vmem [shape: f32[1,128], index: 4, kind: input, shape index: {}]
  %s5 = inlined_call_operand.hbm [shape: f32[2,128], index: 5, kind: output, shape index: {}]
  %s6 = sld [smem:[#allocation0]]
  $region30: #{vit_forward.7} parent=0
    _
  %s8 = ssub.s32 1, %s6
  %s9 = scalar_select 0, %s8, %s6
  $region1: #{vit_forward.7} parent=0
    #allocation2 [shape = 'u8[1024]{0}', space=vmem, size = 0x400, scoped, tag = 'output window, operand 0, single buffered']
    #allocation3 [shape = 's32[1]{0}', space=sflag, size = 0x4, scoped, tag = 'scoped memory for vit_forward.7']
    %10 = vsyncpa [#allocation3], 0
    // Predicated region
    $region2: #{vit_forward.7} parent=1 // pred_check
      _
    $region3: #{vit_forward.7} parent=1 // pred_check_branch
      %12 = sbr.rel (0) target = $region5
    $region4: #{vit_forward.7} parent=1 // pred_region
      _
    $region5: #{vit_forward.7} parent=1 // pred_fallthru
      _
    // Predicated region
    $region6: #{vit_forward.7} parent=1 // pred_check
      _
    $region7: #{vit_forward.7} parent=1 // pred_check_branch
      %14 = sbr.rel (0) target = $region9
    $region8: #{vit_forward.7} parent=1 // pred_region
      _
    $region9: #{vit_forward.7} parent=1 // pred_fallthru
      _
    // Predicated region
    $region10: #{vit_forward.7} parent=1 // pred_check
      _
    $region11: #{vit_forward.7} parent=1 // pred_check_branch
      %16 = sbr.rel (0) target = $region13
    $region12: #{vit_forward.7} parent=1 // pred_region
      _
    $region13: #{vit_forward.7} parent=1 // pred_fallthru
      _
    // Predicated region
    $region14: #{vit_forward.7} parent=1 // pred_check
      _
    $region15: #{vit_forward.7} parent=1 // pred_check_branch
      %18 = sbr.rel (0) target = $region17
    $region16: #{vit_forward.7} parent=1 // pred_region
      _
    $region17: #{vit_forward.7} parent=1 // pred_fallthru
      _
    // Predicated region
    $region18: #{vit_forward.7} parent=1 // pred_check
      _
    $region19: #{vit_forward.7} parent=1 // pred_check_branch
      %20 = sbr.rel (0) target = $region21
    $region20: #{vit_forward.7} parent=1 // pred_region
      _
    $region21: #{vit_forward.7} parent=1 // pred_fallthru
      _
    %v22 = vld [vmem:[%s0] sm:$0x3]
    %v23 = vld [vmem:[%s1] sm:$0x1]
    %v24 = vld [vmem:[%s2] sm:$0x1]
    %vm25 = vcmask 1041408
    %v26 = vsel %vm25, %v22, 0.0
    %27 = vadd.xlane.f32.xlu0 %v26
    %v28 = vpop.xlane.xlu0 %27
    %v29 = vrcp.pop 128.0
    %v30 = vmul.f32 %v28, %v29
    %v31 = vsub.f32 %v22, %v30
    %v32 = vmul.f32 %v31, %v31
    %v33 = vsel %vm25, %v32, 0.0
    %34 = vadd.xlane.f32.xlu0 %v33
    %v35 = vpop.xlane.xlu0 %34
    %v36 = vmul.f32 %v35, %v29
    %v37 = vadd.f32 %v36, 1e-05
    %v38 = vrsqrt.pop %v37
    %v39 = vmul.f32 %v31, %v38
    %v41 = vlaneseq
    %v42 = vshrl.u32 %v41, 7
    %v43 = vsub.s32 0, %v42
    %v44 = vrot.slane %v23, %v43
    %v46 = vmul.f32 %v39, %v44
    %v48 = vlaneseq
    %v49 = vshrl.u32 %v48, 7
    %v50 = vsub.s32 0, %v49
    %v51 = vrot.slane %v24, %v50
    %v53 = vadd.f32 %v46, %v51
    %v54 = vpack.c.bf16 %v53, %v53
    %v55 = vld [vmem:[%s3] sm:$0xf]
    %v56 = vld [vmem:[%s3 + $0x4] sm:$0xf]
    %v57 = vld [vmem:[%s3 + $0x8] sm:$0xf]
    %v58 = vld [vmem:[%s3 + $0xc] sm:$0xf]
    %v59 = vld [vmem:[%s3 + $0x10] sm:$0xf]
    %v60 = vld [vmem:[%s3 + $0x14] sm:$0xf]
    %v61 = vld [vmem:[%s3 + $0x18] sm:$0xf]
    %v62 = vld [vmem:[%s3 + $0x1c] sm:$0xf]
    %v63 = vld [vmem:[%s3 + $0x20] sm:$0xf]
    %v64 = vld [vmem:[%s3 + $0x24] sm:$0xf]
    %v65 = vld [vmem:[%s3 + $0x28] sm:$0xf]
    %v66 = vld [vmem:[%s3 + $0x2c] sm:$0xf]
    %v67 = vld [vmem:[%s3 + $0x30] sm:$0xf]
    %v68 = vld [vmem:[%s3 + $0x34] sm:$0xf]
    %v69 = vld [vmem:[%s3 + $0x38] sm:$0xf]
    %v70 = vld [vmem:[%s3 + $0x3c] sm:$0xf]
    %v71 = vld [vmem:[%s4] sm:$0x1]
    %v73 = vlaneseq
    %v74 = vshrl.u32 %v73, 7
    %v75 = vsub.s32 0, %v74
    %v76 = vrot.slane %v71, %v75
    %v94 = vunpack.c.l.b16 %v55
    %v95 = vunpack.c.l.b16 %v56
    %v96 = vunpack.c.l.b16 %v57
    %v97 = vunpack.c.l.b16 %v58
    %v98 = vunpack.c.l.b16 %v59
    %v99 = vunpack.c.l.b16 %v60
    %v100 = vunpack.c.l.b16 %v61
    %v101 = vunpack.c.l.b16 %v62
    %v102 = vunpack.c.l.b16 %v63
    %v103 = vunpack.c.l.b16 %v64
    %v104 = vunpack.c.l.b16 %v65
    %v105 = vunpack.c.l.b16 %v66
    %v106 = vunpack.c.l.b16 %v67
    %v107 = vunpack.c.l.b16 %v68
    %v108 = vunpack.c.l.b16 %v69
    %v109 = vunpack.c.l.b16 %v70
    %v110 = vpack.c.b16 %v95, %v94
    %v111 = vpack.c.b16 %v97, %v96
    %v112 = vpack.c.b16 %v99, %v98
    %v113 = vpack.c.b16 %v101, %v100
    %v114 = vpack.c.b16 %v103, %v102
    %v115 = vpack.c.b16 %v105, %v104
    %v116 = vpack.c.b16 %v107, %v106
    %v117 = vpack.c.b16 %v109, %v108
    %126 = vmatprep.subr.bf16.mxu0 0
    %127 = vmatpush1.bf16.msra.mxu0 %v117
    %128 = vmatprep.subr.bf16.mxu0 0
    %129 = vmatpush1.bf16.msra.mxu0 %v116
    %130 = vmatprep.subr.bf16.mxu0 0
    %131 = vmatpush1.bf16.msra.mxu0 %v115
    %132 = vmatprep.subr.bf16.mxu0 0
    %133 = vmatpush1.bf16.msra.mxu0 %v114
    %134 = vmatprep.subr.bf16.mxu0 0
    %135 = vmatpush1.bf16.msra.mxu0 %v113
    %136 = vmatprep.subr.bf16.mxu0 0
    %137 = vmatpush1.bf16.msra.mxu0 %v112
    %138 = vmatprep.subr.bf16.mxu0 0
    %139 = vmatpush1.bf16.msra.mxu0 %v111
    %140 = vmatprep.subr.bf16.mxu0 0
    %141 = vmatpush1.bf16.msra.mxu0 %v110
    %142 = vmatprep.subr.bf16.mxu0 0
    %143 = vmatpush2.bf16.msra.mxu0 0
    %144 = vmatprep.subr.bf16.mxu0 0
    %145 = vmatpush2.bf16.msra.mxu0 0
    %146 = vmatprep.subr.bf16.mxu0 0
    %147 = vmatpush2.bf16.msra.mxu0 0
    %148 = vmatprep.subr.bf16.mxu0 0
    %149 = vmatpush2.bf16.msra.mxu0 0
    %150 = vmatprep.subr.bf16.mxu0 0
    %151 = vmatpush2.bf16.msra.mxu0 0
    %152 = vmatprep.subr.bf16.mxu0 0
    %153 = vmatpush2.bf16.msra.mxu0 0
    %154 = vmatprep.subr.bf16.mxu0 0
    %155 = vmatpush2.bf16.msra.mxu0 0
    %156 = vmatprep.subr.bf16.mxu0 0
    %157 = vmatpush2.bf16.msra.mxu0 0
    %158 = vmatprep.mubr.bf16.mxu0 0
    %159 = vmatmul.mubr.bf16.gmra.mxu0 %v54
    %v160 = vpop.f32.mrf.mxu0
    %v161 = vadd.f32 %v76, %v160
    %v162 = vpop.f32.mrf.mxu0
    %v163 = vpop.f32.mrf.mxu0
    %v164 = vpop.f32.mrf.mxu0
    %165 = vdwg.mxu0
    %166 = vst [vmem:[#allocation2] sm:$0x3] %v161
    // Predicated region
    $region22: #{vit_forward.7} parent=1 // pred_check
      _
    $region23: #{vit_forward.7} parent=1 // pred_check_branch
      %168 = sbr.rel (0) target = $region25
    $region24: #{vit_forward.7} parent=1 // pred_region
      %s170 = ssub.s32 32, 32
      %171 = vsyncadd [#allocation3], %s170
      %s173 = sshll.u32 [#allocation2], 4
      %s174 = int_to_ptr.vmem [resolvable:$true] %s173
      %176 = dma.vmem_to_hbm [thread:$0]  %s174, 32, %s5, [#allocation3]
    $region25: #{vit_forward.7} parent=1 // pred_fallthru
      _
    // Predicated region
    $region26: #{vit_forward.7} parent=1 // pred_check
      _
    $region27: #{vit_forward.7} parent=1 // pred_check_branch
      %178 = sbr.rel (0) target = $region29
    $region28: #{vit_forward.7} parent=1 // pred_region
      %179 = dma.done [#allocation3], 32
    $region29: #{vit_forward.7} parent=1 // pred_fallthru
      _
    %180 = vsyncpa [#allocation3], 1

// kernel: vit_forward.4
$region0: #{vit_forward.4}
  #allocation0 [shape = 'u32[]', space=smem, size = 0x4, offset = 0x4, fixed_abs, tag = 'smem constant byte address 0x4 - core index']
  #allocation1 [shape = 'u32[144,128]{1,0:T(1,128)}', space=vmem, size = 0x12000, scoped, tag = 'internal scratch']
  %s0 = inlined_call_operand.vmem [shape: bf16[64,128], index: 0, kind: input, shape index: {}]
  %s1 = inlined_call_operand.vmem [shape: bf16[128,128], index: 1, kind: input, shape index: {}]
  %s2 = inlined_call_operand.vmem [shape: f32[64,128], index: 2, kind: input, shape index: {}]
  %s3 = inlined_call_operand.vmem [shape: f32[64,128], index: 3, kind: output, shape index: {}]
  %s4 = sld [smem:[#allocation0]]
  $region22: #{vit_forward.4} parent=0
    _
  %s6 = ssub.s32 1, %s4
  %s7 = scalar_select 0, %s6, %s4
  // Predicated region
  $region2: #{vit_forward.4} parent=0 // pred_check
    _
  $region3: #{vit_forward.4} parent=0 // pred_check_branch
    %9 = sbr.rel (0) target = $region5
  $region4: #{vit_forward.4} parent=0 // pred_region
    _
  $region5: #{vit_forward.4} parent=0 // pred_fallthru
    _
  // Predicated region
  $region6: #{vit_forward.4} parent=0 // pred_check
    _
  $region7: #{vit_forward.4} parent=0 // pred_check_branch
    %11 = sbr.rel (0) target = $region9
  $region8: #{vit_forward.4} parent=0 // pred_region
    _
  $region9: #{vit_forward.4} parent=0 // pred_fallthru
    _
  // Predicated region
  $region10: #{vit_forward.4} parent=0 // pred_check
    _
  $region11: #{vit_forward.4} parent=0 // pred_check_branch
    %13 = sbr.rel (0) target = $region13
  $region12: #{vit_forward.4} parent=0 // pred_region
    _
  $region13: #{vit_forward.4} parent=0 // pred_fallthru
    _
  %v15 = vld [vmem:[%s0] sm:$0xf]
  %v16 = vld [vmem:[%s0 + $0x4] sm:$0xf]
  %v17 = vld [vmem:[%s0 + $0x8] sm:$0xf]
  %v18 = vld [vmem:[%s0 + $0xc] sm:$0xf]
  %v19 = vld [vmem:[%s0 + $0x10] sm:$0xf]
  %v20 = vld [vmem:[%s0 + $0x14] sm:$0xf]
  %v21 = vld [vmem:[%s0 + $0x18] sm:$0xf]
  %v22 = vld [vmem:[%s0 + $0x1c] sm:$0xf]
  %v23 = vld [vmem:[%s1] sm:$0xf]
  %v24 = vld [vmem:[%s1 + $0x4] sm:$0xf]
  %v25 = vld [vmem:[%s1 + $0x8] sm:$0xf]
  %v26 = vld [vmem:[%s1 + $0xc] sm:$0xf]
  %v27 = vld [vmem:[%s1 + $0x10] sm:$0xf]
  %v28 = vld [vmem:[%s1 + $0x14] sm:$0xf]
  %v29 = vld [vmem:[%s1 + $0x18] sm:$0xf]
  %v30 = vld [vmem:[%s1 + $0x1c] sm:$0xf]
  %v31 = vld [vmem:[%s1 + $0x20] sm:$0xf]
  %v32 = vld [vmem:[%s1 + $0x24] sm:$0xf]
  %v33 = vld [vmem:[%s1 + $0x28] sm:$0xf]
  %v34 = vld [vmem:[%s1 + $0x2c] sm:$0xf]
  %v35 = vld [vmem:[%s1 + $0x30] sm:$0xf]
  %v36 = vld [vmem:[%s1 + $0x34] sm:$0xf]
  %v37 = vld [vmem:[%s1 + $0x38] sm:$0xf]
  %v38 = vld [vmem:[%s1 + $0x3c] sm:$0xf]
  %v39 = vld [vmem:[%s2] sm:$0xff]
  %v40 = vld [vmem:[%s2 + $0x8] sm:$0xff]
  %v41 = vld [vmem:[%s2 + $0x10] sm:$0xff]
  %v42 = vld [vmem:[%s2 + $0x18] sm:$0xff]
  %v43 = vld [vmem:[%s2 + $0x20] sm:$0xff]
  %v44 = vld [vmem:[%s2 + $0x28] sm:$0xff]
  %v45 = vld [vmem:[%s2 + $0x30] sm:$0xff]
  %v46 = vld [vmem:[%s2 + $0x38] sm:$0xff]
  %v55 = vunpack.c.l.b16 %v15
  %v56 = vunpack.c.l.b16 %v16
  %v57 = vunpack.c.l.b16 %v17
  %v58 = vunpack.c.l.b16 %v18
  %v59 = vunpack.c.l.b16 %v19
  %v60 = vunpack.c.l.b16 %v20
  %v61 = vunpack.c.l.b16 %v21
  %v62 = vunpack.c.l.b16 %v22
  %v63 = vpack.c.b16 %v56, %v55
  %v64 = vpack.c.b16 %v58, %v57
  %v65 = vpack.c.b16 %v60, %v59
  %v66 = vpack.c.b16 %v62, %v61
  %v87 = vunpack.c.l.b16 %v23
  %v88 = vunpack.c.l.b16 %v24
  %v89 = vunpack.c.l.b16 %v25
  %v90 = vunpack.c.l.b16 %v26
  %v91 = vunpack.c.l.b16 %v27
  %v92 = vunpack.c.l.b16 %v28
  %v93 = vunpack.c.l.b16 %v29
  %v94 = vunpack.c.l.b16 %v30
  %v95 = vunpack.c.l.b16 %v31
  %v96 = vunpack.c.l.b16 %v32
  %v97 = vunpack.c.l.b16 %v33
  %v98 = vunpack.c.l.b16 %v34
  %v99 = vunpack.c.l.b16 %v35
  %v100 = vunpack.c.l.b16 %v36
  %v101 = vunpack.c.l.b16 %v37
  %v102 = vunpack.c.l.b16 %v38
  %v103 = vpack.c.b16 %v88, %v87
  %v104 = vpack.c.b16 %v90, %v89
  %v105 = vpack.c.b16 %v92, %v91
  %v106 = vpack.c.b16 %v94, %v93
  %v107 = vpack.c.b16 %v96, %v95
  %v108 = vpack.c.b16 %v98, %v97
  %v109 = vpack.c.b16 %v100, %v99
  %v110 = vpack.c.b16 %v102, %v101
  %119 = vmatprep.subr.bf16.mxu0 0
  %120 = vmatpush1.bf16.msra.mxu0 %v110
  %121 = vmatprep.subr.bf16.mxu0 0
  %122 = vmatpush1.bf16.msra.mxu0 %v109
  %123 = vmatprep.subr.bf16.mxu0 0
  %124 = vmatpush1.bf16.msra.mxu0 %v108
  %125 = vmatprep.subr.bf16.mxu0 0
  %126 = vmatpush1.bf16.msra.mxu0 %v107
  %127 = vmatprep.subr.bf16.mxu0 0
  %128 = vmatpush1.bf16.msra.mxu0 %v106
  %129 = vmatprep.subr.bf16.mxu0 0
  %130 = vmatpush1.bf16.msra.mxu0 %v105
  %131 = vmatprep.subr.bf16.mxu0 0
  %132 = vmatpush1.bf16.msra.mxu0 %v104
  %133 = vmatprep.subr.bf16.mxu0 0
  %134 = vmatpush1.bf16.msra.mxu0 %v103
  %135 = vmatprep.subr.bf16.mxu0 0
  %136 = vmatpush2.bf16.msra.mxu0 0
  %137 = vmatprep.subr.bf16.mxu0 0
  %138 = vmatpush2.bf16.msra.mxu0 0
  %139 = vmatprep.subr.bf16.mxu0 0
  %140 = vmatpush2.bf16.msra.mxu0 0
  %141 = vmatprep.subr.bf16.mxu0 0
  %142 = vmatpush2.bf16.msra.mxu0 0
  %143 = vmatprep.subr.bf16.mxu0 0
  %144 = vmatpush2.bf16.msra.mxu0 0
  %145 = vmatprep.subr.bf16.mxu0 0
  %146 = vmatpush2.bf16.msra.mxu0 0
  %147 = vmatprep.subr.bf16.mxu0 0
  %148 = vmatpush2.bf16.msra.mxu0 0
  %149 = vmatprep.subr.bf16.mxu0 0
  %150 = vmatpush2.bf16.msra.mxu0 0
  %151 = vmatprep.mubr.bf16.mxu0 0
  %152 = vmatmul.mubr.bf16.gmra.mxu0 %v63
  %v153 = vpop.f32.mrf.mxu0
  %v154 = vadd.f32 %v39, %v153
  %v155 = vpop.f32.mrf.mxu0
  %v156 = vpop.f32.mrf.mxu0
  %v157 = vadd.f32 %v40, %v156
  %v158 = vpop.f32.mrf.mxu0
  %159 = vmatprep.mubr.bf16.mxu0 0
  %160 = vmatmul.mubr.bf16.gmra.mxu0 %v64
  %v161 = vpop.f32.mrf.mxu0
  %v162 = vadd.f32 %v41, %v161
  %v163 = vpop.f32.mrf.mxu0
  %v164 = vpop.f32.mrf.mxu0
  %v165 = vadd.f32 %v42, %v164
  %v166 = vpop.f32.mrf.mxu0
  %167 = vmatprep.mubr.bf16.mxu0 0
  %168 = vmatmul.mubr.bf16.gmra.mxu0 %v65
  %v169 = vpop.f32.mrf.mxu0
  %v170 = vadd.f32 %v43, %v169
  %v171 = vpop.f32.mrf.mxu0
  %v172 = vpop.f32.mrf.mxu0
  %v173 = vadd.f32 %v44, %v172
  %v174 = vpop.f32.mrf.mxu0
  %175 = vmatprep.mubr.bf16.mxu0 0
  %176 = vmatmul.mubr.bf16.gmra.mxu0 %v66
  %v177 = vpop.f32.mrf.mxu0
  %v178 = vadd.f32 %v45, %v177
  %v179 = vpop.f32.mrf.mxu0
  %v180 = vpop.f32.mrf.mxu0
  %v181 = vadd.f32 %v46, %v180
  %v182 = vpop.f32.mrf.mxu0
  %183 = vdwg.mxu0
  %184 = vst [vmem:[%s3] sm:$0xff] %v154
  %185 = vst [vmem:[%s3 + $0x8] sm:$0xff] %v157
  %186 = vst [vmem:[%s3 + $0x10] sm:$0xff] %v162
  %187 = vst [vmem:[%s3 + $0x18] sm:$0xff] %v165
  %188 = vst [vmem:[%s3 + $0x20] sm:$0xff] %v170
  %189 = vst [vmem:[%s3 + $0x28] sm:$0xff] %v173
  %190 = vst [vmem:[%s3 + $0x30] sm:$0xff] %v178
  %191 = vst [vmem:[%s3 + $0x38] sm:$0xff] %v181
  // Predicated region
  $region14: #{vit_forward.4} parent=0 // pred_check
    _
  $region15: #{vit_forward.4} parent=0 // pred_check_branch
    %193 = sbr.rel (0) target = $region17
  $region16: #{vit_forward.4} parent=0 // pred_region
    _
  $region17: #{vit_forward.4} parent=0 // pred_fallthru
    _
  // Predicated region
  $region18: #{vit_forward.4} parent=0 // pred_check
    _
  $region19: #{vit_forward.4} parent=0 // pred_check_branch
    %195 = sbr.rel (0) target = $region21
  $region20: #{vit_forward.4} parent=0 // pred_region
    _
  $region21: #{vit_forward.4} parent=0 // pred_fallthru
    _

// kernel: vit_forward.5
$region0: #{vit_forward.5}
  #allocation0 [shape = 'u32[]', space=smem, size = 0x4, offset = 0x4, fixed_abs, tag = 'smem constant byte address 0x4 - core index']
  #allocation1 [shape = 'u32[144,128]{1,0:T(1,128)}', space=vmem, size = 0x12000, scoped, tag = 'internal scratch']
  %s0 = inlined_call_operand.vmem [shape: f32[2,32,128], index: 0, kind: input, shape index: {}]
  %s1 = inlined_call_operand.vmem [shape: f32[1,128], index: 1, kind: input, shape index: {}]
  %s2 = inlined_call_operand.vmem [shape: f32[1,128], index: 2, kind: input, shape index: {}]
  %s3 = inlined_call_operand.vmem [shape: bf16[128,384], index: 3, kind: input, shape index: {}]
  %s4 = inlined_call_operand.vmem [shape: f32[1,384], index: 4, kind: input, shape index: {}]
  %s5 = inlined_call_operand.vmem [shape: bf16[128,128], index: 5, kind: input, shape index: {}]
  %s6 = inlined_call_operand.vmem [shape: f32[1,128], index: 6, kind: input, shape index: {}]
  %s7 = inlined_call_operand.vmem [shape: f32[1,128], index: 7, kind: input, shape index: {}]
  %s8 = inlined_call_operand.vmem [shape: f32[1,128], index: 8, kind: input, shape index: {}]
  %s9 = inlined_call_operand.vmem [shape: bf16[128,512], index: 9, kind: input, shape index: {}]
  %s10 = inlined_call_operand.vmem [shape: f32[1,512], index: 10, kind: input, shape index: {}]
  %s11 = inlined_call_operand.vmem [shape: bf16[512,128], index: 11, kind: input, shape index: {}]
  %s12 = inlined_call_operand.vmem [shape: f32[1,128], index: 12, kind: input, shape index: {}]
  %s13 = inlined_call_operand.vmem [shape: f32[2,32,128], index: 13, kind: output, shape index: {}]
  %s14 = sld [smem:[#allocation0]]
  $region85: #{vit_forward.5} parent=0
    _
  %s16 = ssub.s32 1, %s14
  %s17 = scalar_select 0, %s16, %s14
  loop: start=0, step=1, limit=4
  $region2: #{vit_forward.5} parent=0 // loop_pre_header
    _
  $region3: #{vit_forward.5} parent=0 // loop_header
    %s19 = sphi 0, %s23
    %p20 = scmp.ge.s32.totalorder %s19, 4
    %s29 = sphi 0, %s31
    %s32 = sphi 0, %s29
    %s33 = sphi 0, %s32
    %s49 = sphi 0, %s33
    %s53 = sphi 0, %s53
    %s55 = sphi 0, %s53
    %s56 = sphi 0, %s55
    %s70 = sphi 0, %s56
    %s74 = sphi 0, %s74
    %s76 = sphi 0, %s74
    %s77 = sphi 0, %s76
    %s91 = sphi 0, %s77
    %s95 = sphi 0, %s95
    %s97 = sphi 0, %s95
    %s98 = sphi 0, %s97
    %s112 = sphi 0, %s98
    %s116 = sphi 0, %s116
    %s118 = sphi 0, %s116
    %s119 = sphi 0, %s118
    %s133 = sphi 0, %s119
    %s137 = sphi 0, %s137
    %s139 = sphi 0, %s137
    %s140 = sphi 0, %s139
    %s154 = sphi 0, %s140
    %s158 = sphi 0, %s158
    %s160 = sphi 0, %s158
    %s161 = sphi 0, %s160
    %s175 = sphi 0, %s161
    %s179 = sphi 0, %s179
    %s181 = sphi 0, %s179
    %s182 = sphi 0, %s181
    %s196 = sphi 0, %s182
    %s200 = sphi 0, %s200
    %s202 = sphi 0, %s200
    %s203 = sphi 0, %s202
    %s217 = sphi 0, %s203
    %s221 = sphi 0, %s221
    %s223 = sphi 0, %s221
    %s224 = sphi 0, %s223
    %s238 = sphi 0, %s224
    %s242 = sphi 0, %s242
    %s244 = sphi 0, %s242
    %s245 = sphi 0, %s244
    %s259 = sphi 0, %s245
    %s263 = sphi 0, %s263
    %s265 = sphi 0, %s263
    %s266 = sphi 0, %s265
    %s280 = sphi 0, %s266
    %s284 = sphi 0, %s284
    %s286 = sphi 0, %s284
    %s287 = sphi 0, %s286
    %s301 = sphi 0, %s287
    %s307 = sphi 0, %s309
    %s310 = sphi 0, %s307
    %s311 = sphi 0, %s310
    %s327 = sphi 0, %s311
  $region4: #{vit_forward.5} parent=0 // loop_header_branch
    %22 = sbr.rel (%p20) target = $region8
  $region5: #{vit_forward.5} parent=0 // loop_body
    %s24 = ssub.s32 %s19, 1
    %s25 = ssub.s32 %s19, 2
    %s26 = sadd.s32 %s19, 1
    %s27 = ssub.s32 %s19, %s26
    %p28 = scmp.eq.s32.totalorder %s27, 0
    %s30 = sadd.s32 %s29, 1
    %s31 = scalar_select %p28, %s29, %s30
    %p34 = pneg %p28
    %p35 = scmp.eq.s32.totalorder %s19, 1
    %p36 = por %p34, %p35
    %p37 = scmp.ne.s32.totalorder %s29, %s32
    %p38 = scmp.eq.s32.totalorder %s19, 0
    %p39 = por %p37, %p38
    %p40 = scmp.ne.s32.totalorder %s29, %s32
    %p41 = scmp.eq.s32.totalorder %s24, 1
    %p42 = por %p40, %p41
    %p43 = scmp.ne.s32.totalorder %s32, %s33
    %p44 = scmp.eq.s32.totalorder %s24, 0
    %p45 = por %p43, %p44
    %p46 = scmp.ne.s32.totalorder %s32, %s33
    %p47 = scmp.eq.s32.totalorder %s25, 1
    %p48 = por %p46, %p47
    %p50 = scmp.ne.s32.totalorder %s33, %s49
    %p51 = scmp.eq.s32.totalorder %s25, 0
    %p52 = por %p50, %p51
    %s54 = sadd.s32 %s53, 1
    %p57 = scmp.eq.s32.totalorder %s19, 1
    %p58 = scmp.ne.s32.totalorder %s53, %s55
    %p59 = scmp.eq.s32.totalorder %s19, 0
    %p60 = por %p58, %p59
    %p61 = scmp.ne.s32.totalorder %s53, %s55
    %p62 = scmp.eq.s32.totalorder %s24, 1
    %p63 = por %p61, %p62
    %p64 = scmp.ne.s32.totalorder %s55, %s56
    %p65 = scmp.eq.s32.totalorder %s24, 0
    %p66 = por %p64, %p65
    %p67 = scmp.ne.s32.totalorder %s55, %s56
    %p68 = scmp.eq.s32.totalorder %s25, 1
    %p69 = por %p67, %p68
    %p71 = scmp.ne.s32.totalorder %s56, %s70
    %p72 = scmp.eq.s32.totalorder %s25, 0
    %p73 = por %p71, %p72
    %s75 = sadd.s32 %s74, 1
    %p78 = scmp.eq.s32.totalorder %s19, 1
    %p79 = scmp.ne.s32.totalorder %s74, %s76
    %p80 = scmp.eq.s32.totalorder %s19, 0
    %p81 = por %p79, %p80
    %p82 = scmp.ne.s32.totalorder %s74, %s76
    %p83 = scmp.eq.s32.totalorder %s24, 1
    %p84 = por %p82, %p83
    %p85 = scmp.ne.s32.totalorder %s76, %s77
    %p86 = scmp.eq.s32.totalorder %s24, 0
    %p87 = por %p85, %p86
    %p88 = scmp.ne.s32.totalorder %s76, %s77
    %p89 = scmp.eq.s32.totalorder %s25, 1
    %p90 = por %p88, %p89
    %p92 = scmp.ne.s32.totalorder %s77, %s91
    %p93 = scmp.eq.s32.totalorder %s25, 0
    %p94 = por %p92, %p93
    %s96 = sadd.s32 %s95, 1
    %p99 = scmp.eq.s32.totalorder %s19, 1
    %p100 = scmp.ne.s32.totalorder %s95, %s97
    %p101 = scmp.eq.s32.totalorder %s19, 0
    %p102 = por %p100, %p101
    %p103 = scmp.ne.s32.totalorder %s95, %s97
    %p104 = scmp.eq.s32.totalorder %s24, 1
    %p105 = por %p103, %p104
    %p106 = scmp.ne.s32.totalorder %s97, %s98
    %p107 = scmp.eq.s32.totalorder %s24, 0
    %p108 = por %p106, %p107
    %p109 = scmp.ne.s32.totalorder %s97, %s98
    %p110 = scmp.eq.s32.totalorder %s25, 1
    %p111 = por %p109, %p110
    %p113 = scmp.ne.s32.totalorder %s98, %s112
    %p114 = scmp.eq.s32.totalorder %s25, 0
    %p115 = por %p113, %p114
    %s117 = sadd.s32 %s116, 1
    %p120 = scmp.eq.s32.totalorder %s19, 1
    %p121 = scmp.ne.s32.totalorder %s116, %s118
    %p122 = scmp.eq.s32.totalorder %s19, 0
    %p123 = por %p121, %p122
    %p124 = scmp.ne.s32.totalorder %s116, %s118
    %p125 = scmp.eq.s32.totalorder %s24, 1
    %p126 = por %p124, %p125
    %p127 = scmp.ne.s32.totalorder %s118, %s119
    %p128 = scmp.eq.s32.totalorder %s24, 0
    %p129 = por %p127, %p128
    %p130 = scmp.ne.s32.totalorder %s118, %s119
    %p131 = scmp.eq.s32.totalorder %s25, 1
    %p132 = por %p130, %p131
    %p134 = scmp.ne.s32.totalorder %s119, %s133
    %p135 = scmp.eq.s32.totalorder %s25, 0
    %p136 = por %p134, %p135
    %s138 = sadd.s32 %s137, 1
    %p141 = scmp.eq.s32.totalorder %s19, 1
    %p142 = scmp.ne.s32.totalorder %s137, %s139
    %p143 = scmp.eq.s32.totalorder %s19, 0
    %p144 = por %p142, %p143
    %p145 = scmp.ne.s32.totalorder %s137, %s139
    %p146 = scmp.eq.s32.totalorder %s24, 1
    %p147 = por %p145, %p146
    %p148 = scmp.ne.s32.totalorder %s139, %s140
    %p149 = scmp.eq.s32.totalorder %s24, 0
    %p150 = por %p148, %p149
    %p151 = scmp.ne.s32.totalorder %s139, %s140
    %p152 = scmp.eq.s32.totalorder %s25, 1
    %p153 = por %p151, %p152
    %p155 = scmp.ne.s32.totalorder %s140, %s154
    %p156 = scmp.eq.s32.totalorder %s25, 0
    %p157 = por %p155, %p156
    %s159 = sadd.s32 %s158, 1
    %p162 = scmp.eq.s32.totalorder %s19, 1
    %p163 = scmp.ne.s32.totalorder %s158, %s160
    %p164 = scmp.eq.s32.totalorder %s19, 0
    %p165 = por %p163, %p164
    %p166 = scmp.ne.s32.totalorder %s158, %s160
    %p167 = scmp.eq.s32.totalorder %s24, 1
    %p168 = por %p166, %p167
    %p169 = scmp.ne.s32.totalorder %s160, %s161
    %p170 = scmp.eq.s32.totalorder %s24, 0
    %p171 = por %p169, %p170
    %p172 = scmp.ne.s32.totalorder %s160, %s161
    %p173 = scmp.eq.s32.totalorder %s25, 1
    %p174 = por %p172, %p173
    %p176 = scmp.ne.s32.totalorder %s161, %s175
    %p177 = scmp.eq.s32.totalorder %s25, 0
    %p178 = por %p176, %p177
    %s180 = sadd.s32 %s179, 1
    %p183 = scmp.eq.s32.totalorder %s19, 1
    %p184 = scmp.ne.s32.totalorder %s179, %s181
    %p185 = scmp.eq.s32.totalorder %s19, 0
    %p186 = por %p184, %p185
    %p187 = scmp.ne.s32.totalorder %s179, %s181
    %p188 = scmp.eq.s32.totalorder %s24, 1
    %p189 = por %p187, %p188
    %p190 = scmp.ne.s32.totalorder %s181, %s182
    %p191 = scmp.eq.s32.totalorder %s24, 0
    %p192 = por %p190, %p191
    %p193 = scmp.ne.s32.totalorder %s181, %s182
    %p194 = scmp.eq.s32.totalorder %s25, 1
    %p195 = por %p193, %p194
    %p197 = scmp.ne.s32.totalorder %s182, %s196
    %p198 = scmp.eq.s32.totalorder %s25, 0
    %p199 = por %p197, %p198
    %s201 = sadd.s32 %s200, 1
    %p204 = scmp.eq.s32.totalorder %s19, 1
    %p205 = scmp.ne.s32.totalorder %s200, %s202
    %p206 = scmp.eq.s32.totalorder %s19, 0
    %p207 = por %p205, %p206
    %p208 = scmp.ne.s32.totalorder %s200, %s202
    %p209 = scmp.eq.s32.totalorder %s24, 1
    %p210 = por %p208, %p209
    %p211 = scmp.ne.s32.totalorder %s202, %s203
    %p212 = scmp.eq.s32.totalorder %s24, 0
    %p213 = por %p211, %p212
    %p214 = scmp.ne.s32.totalorder %s202, %s203
    %p215 = scmp.eq.s32.totalorder %s25, 1
    %p216 = por %p214, %p215
    %p218 = scmp.ne.s32.totalorder %s203, %s217
    %p219 = scmp.eq.s32.totalorder %s25, 0
    %p220 = por %p218, %p219
    %s222 = sadd.s32 %s221, 1
    %p225 = scmp.eq.s32.totalorder %s19, 1
    %p226 = scmp.ne.s32.totalorder %s221, %s223
    %p227 = scmp.eq.s32.totalorder %s19, 0
    %p228 = por %p226, %p227
    %p229 = scmp.ne.s32.totalorder %s221, %s223
    %p230 = scmp.eq.s32.totalorder %s24, 1
    %p231 = por %p229, %p230
    %p232 = scmp.ne.s32.totalorder %s223, %s224
    %p233 = scmp.eq.s32.totalorder %s24, 0
    %p234 = por %p232, %p233
    %p235 = scmp.ne.s32.totalorder %s223, %s224
    %p236 = scmp.eq.s32.totalorder %s25, 1
    %p237 = por %p235, %p236
    %p239 = scmp.ne.s32.totalorder %s224, %s238
    %p240 = scmp.eq.s32.totalorder %s25, 0
    %p241 = por %p239, %p240
    %s243 = sadd.s32 %s242, 1
    %p246 = scmp.eq.s32.totalorder %s19, 1
    %p247 = scmp.ne.s32.totalorder %s242, %s244
    %p248 = scmp.eq.s32.totalorder %s19, 0
    %p249 = por %p247, %p248
    %p250 = scmp.ne.s32.totalorder %s242, %s244
    %p251 = scmp.eq.s32.totalorder %s24, 1
    %p252 = por %p250, %p251
    %p253 = scmp.ne.s32.totalorder %s244, %s245
    %p254 = scmp.eq.s32.totalorder %s24, 0
    %p255 = por %p253, %p254
    %p256 = scmp.ne.s32.totalorder %s244, %s245
    %p257 = scmp.eq.s32.totalorder %s25, 1
    %p258 = por %p256, %p257
    %p260 = scmp.ne.s32.totalorder %s245, %s259
    %p261 = scmp.eq.s32.totalorder %s25, 0
    %p262 = por %p260, %p261
    %s264 = sadd.s32 %s263, 1
    %p267 = scmp.eq.s32.totalorder %s19, 1
    %p268 = scmp.ne.s32.totalorder %s263, %s265
    %p269 = scmp.eq.s32.totalorder %s19, 0
    %p270 = por %p268, %p269
    %p271 = scmp.ne.s32.totalorder %s263, %s265
    %p272 = scmp.eq.s32.totalorder %s24, 1
    %p273 = por %p271, %p272
    %p274 = scmp.ne.s32.totalorder %s265, %s266
    %p275 = scmp.eq.s32.totalorder %s24, 0
    %p276 = por %p274, %p275
    %p277 = scmp.ne.s32.totalorder %s265, %s266
    %p278 = scmp.eq.s32.totalorder %s25, 1
    %p279 = por %p277, %p278
    %p281 = scmp.ne.s32.totalorder %s266, %s280
    %p282 = scmp.eq.s32.totalorder %s25, 0
    %p283 = por %p281, %p282
    %s285 = sadd.s32 %s284, 1
    %p288 = scmp.eq.s32.totalorder %s19, 1
    %p289 = scmp.ne.s32.totalorder %s284, %s286
    %p290 = scmp.eq.s32.totalorder %s19, 0
    %p291 = por %p289, %p290
    %p292 = scmp.ne.s32.totalorder %s284, %s286
    %p293 = scmp.eq.s32.totalorder %s24, 1
    %p294 = por %p292, %p293
    %p295 = scmp.ne.s32.totalorder %s286, %s287
    %p296 = scmp.eq.s32.totalorder %s24, 0
    %p297 = por %p295, %p296
    %p298 = scmp.ne.s32.totalorder %s286, %s287
    %p299 = scmp.eq.s32.totalorder %s25, 1
    %p300 = por %p298, %p299
    %p302 = scmp.ne.s32.totalorder %s287, %s301
    %p303 = scmp.eq.s32.totalorder %s25, 0
    %p304 = por %p302, %p303
    %s305 = ssub.s32 %s19, %s26
    %p306 = scmp.eq.s32.totalorder %s305, 0
    %s308 = sadd.s32 %s307, 1
    %s309 = scalar_select %p306, %s307, %s308
    %p312 = pneg %p306
    %p313 = scmp.eq.s32.totalorder %s19, 1
    %p314 = por %p312, %p313
    %p315 = scmp.ne.s32.totalorder %s307, %s310
    %p316 = scmp.eq.s32.totalorder %s19, 0
    %p317 = por %p315, %p316
    %p318 = scmp.ne.s32.totalorder %s307, %s310
    %p319 = scmp.eq.s32.totalorder %s24, 1
    %p320 = por %p318, %p319
    %p321 = scmp.ne.s32.totalorder %s310, %s311
    %p322 = scmp.eq.s32.totalorder %s24, 0
    %p323 = por %p321, %p322
    %p324 = scmp.ne.s32.totalorder %s310, %s311
    %p325 = scmp.eq.s32.totalorder %s25, 1
    %p326 = por %p324, %p325
    %p328 = scmp.ne.s32.totalorder %s311, %s327
    %p329 = scmp.eq.s32.totalorder %s25, 0
    %p330 = por %p328, %p329
    %p331 = scmp.le.s32.totalorder 1, %s19
    %p332 = scmp.lt.s32.totalorder %s19, 3
    %p333 = pnand %p331, %p332
    %p334 = pneg %p333
    // Predicated region
    $region9: #{vit_forward.5} parent=5 // pred_check
      _
    $region10: #{vit_forward.5} parent=5 // pred_check_branch
      %336 = sbr.rel (%p333) target = $region12
    $region11: #{vit_forward.5} parent=5 // pred_region
      %s337 = ssub.s32 %s19, 1
      // Predicated region
      $region13: #{vit_forward.5} parent=11 // pred_check
        %p338 = pneg %p66
      $region14: #{vit_forward.5} parent=11 // pred_check_branch
        %340 = sbr.rel (%p338) target = $region16
      $region15: #{vit_forward.5} parent=11 // pred_region
        _
      $region16: #{vit_forward.5} parent=11 // pred_fallthru
        _
      // Predicated region
      $region17: #{vit_forward.5} parent=11 // pred_check
        %p341 = pneg %p87
      $region18: #{vit_forward.5} parent=11 // pred_check_branch
        %343 = sbr.rel (%p341) target = $region20
      $region19: #{vit_forward.5} parent=11 // pred_region
        _
      $region20: #{vit_forward.5} parent=11 // pred_fallthru
        _
      // Predicated region
      $region21: #{vit_forward.5} parent=11 // pred_check
        %p344 = pneg %p108
      $region22: #{vit_forward.5} parent=11 // pred_check_branch
        %346 = sbr.rel (%p344) target = $region24
      $region23: #{vit_forward.5} parent=11 // pred_region
        _
      $region24: #{vit_forward.5} parent=11 // pred_fallthru
        _
      // Predicated region
      $region25: #{vit_forward.5} parent=11 // pred_check
        %p347 = pneg %p129
      $region26: #{vit_forward.5} parent=11 // pred_check_branch
        %349 = sbr.rel (%p347) target = $region28
      $region27: #{vit_forward.5} parent=11 // pred_region
        _
      $region28: #{vit_forward.5} parent=11 // pred_fallthru
        _
      // Predicated region
      $region29: #{vit_forward.5} parent=11 // pred_check
        %p350 = pneg %p150
      $region30: #{vit_forward.5} parent=11 // pred_check_branch
        %352 = sbr.rel (%p350) target = $region32
      $region31: #{vit_forward.5} parent=11 // pred_region
        _
      $region32: #{vit_forward.5} parent=11 // pred_fallthru
        _
      // Predicated region
      $region33: #{vit_forward.5} parent=11 // pred_check
        %p353 = pneg %p171
      $region34: #{vit_forward.5} parent=11 // pred_check_branch
        %355 = sbr.rel (%p353) target = $region36
      $region35: #{vit_forward.5} parent=11 // pred_region
        _
      $region36: #{vit_forward.5} parent=11 // pred_fallthru
        _
      // Predicated region
      $region37: #{vit_forward.5} parent=11 // pred_check
        %p356 = pneg %p192
      $region38: #{vit_forward.5} parent=11 // pred_check_branch
        %358 = sbr.rel (%p356) target = $region40
      $region39: #{vit_forward.5} parent=11 // pred_region
        _
      $region40: #{vit_forward.5} parent=11 // pred_fallthru
        _
      // Predicated region
      $region41: #{vit_forward.5} parent=11 // pred_check
        %p359 = pneg %p213
      $region42: #{vit_forward.5} parent=11 // pred_check_branch
        %361 = sbr.rel (%p359) target = $region44
      $region43: #{vit_forward.5} parent=11 // pred_region
        _
      $region44: #{vit_forward.5} parent=11 // pred_fallthru
        _
      // Predicated region
      $region45: #{vit_forward.5} parent=11 // pred_check
        %p362 = pneg %p234
      $region46: #{vit_forward.5} parent=11 // pred_check_branch
        %364 = sbr.rel (%p362) target = $region48
      $region47: #{vit_forward.5} parent=11 // pred_region
        _
      $region48: #{vit_forward.5} parent=11 // pred_fallthru
        _
      // Predicated region
      $region49: #{vit_forward.5} parent=11 // pred_check
        %p365 = pneg %p255
      $region50: #{vit_forward.5} parent=11 // pred_check_branch
        %367 = sbr.rel (%p365) target = $region52
      $region51: #{vit_forward.5} parent=11 // pred_region
        _
      $region52: #{vit_forward.5} parent=11 // pred_fallthru
        _
      // Predicated region
      $region53: #{vit_forward.5} parent=11 // pred_check
        %p368 = pneg %p276
      $region54: #{vit_forward.5} parent=11 // pred_check_branch
        %370 = sbr.rel (%p368) target = $region56
      $region55: #{vit_forward.5} parent=11 // pred_region
        _
      $region56: #{vit_forward.5} parent=11 // pred_fallthru
        _
      // Predicated region
      $region57: #{vit_forward.5} parent=11 // pred_check
        %p371 = pneg %p297
      $region58: #{vit_forward.5} parent=11 // pred_check_branch
        %373 = sbr.rel (%p371) target = $region60
      $region59: #{vit_forward.5} parent=11 // pred_region
        _
      $region60: #{vit_forward.5} parent=11 // pred_fallthru
        _
    $region12: #{vit_forward.5} parent=5 // pred_fallthru
      _
    %p374 = scmp.lt.s32.totalorder %s19, 2
    // Predicated region
    $region61: #{vit_forward.5} parent=5 // pred_check
      %p375 = pneg %p374
    $region62: #{vit_forward.5} parent=5 // pred_check_branch
      %377 = sbr.rel (%p375) target = $region64
    $region63: #{vit_forward.5} parent=5 // pred_region
      // Predicated region
      $region65: #{vit_forward.5} parent=63 // pred_check
        %p378 = pneg %p39
      $region66: #{vit_forward.5} parent=63 // pred_check_branch
        %380 = sbr.rel (%p378) target = $region68
      $region67: #{vit_forward.5} parent=63 // pred_region
        %p381 = scmp.lt.s32.totalorder %s19, 1
        %s382 = scalar_select %p381, %s19, 1
        %s383 = smul.addr %s382, 4
        %s384 = smul.addr %s383, 8
        %s385 = scalar_lea.vmem %s0, %s384
      $region68: #{vit_forward.5} parent=63 // pred_fallthru
        _
    $region64: #{vit_forward.5} parent=5 // pred_fallthru
      _
    %p386 = scmp.le.s32.totalorder 1, %s19
    %p387 = scmp.lt.s32.totalorder %s19, 3
    %p388 = pnand %p386, %p387
    %p389 = pneg %p388
    // Predicated region
    $region69: #{vit_forward.5} parent=5 // pred_check
      _
    $region70: #{vit_forward.5} parent=5 // pred_check_branch
      %391 = sbr.rel (%p388) target = $region72
    $region71: #{vit_forward.5} parent=5 // pred_region
      %s392 = ssub.s32 %s19, 1
      %p393 = scmp.lt.s32.totalorder %s24, 1
      %s394 = scalar_select %p393, %s24, 1
      %s395 = smul.addr %s394, 4
      %s396 = smul.addr %s395, 8
      %s397 = scalar_lea.vmem %s0, %s396
      %p398 = pneg %p45
      %p399 = pneg %p42
      %p400 = pneg %p66
      %p401 = pneg %p63
      %p402 = pneg %p87
      %p403 = pneg %p84
      %p404 = pneg %p108
      %p405 = pneg %p105
      %p406 = pneg %p129
      %p407 = pneg %p126
      %p408 = pneg %p150
      %p409 = pneg %p147
      %p410 = pneg %p171
      %p411 = pneg %p168
      %p412 = pneg %p192
      %p413 = pneg %p189
      %p414 = pneg %p213
      %p415 = pneg %p210
      %p416 = pneg %p234
      %p417 = pneg %p231
      %p418 = pneg %p255
      %p419 = pneg %p252
      %p420 = pneg %p276
      %p421 = pneg %p273
      %p422 = pneg %p297
      %p423 = pneg %p294
      %p424 = pneg %p323
      %p425 = pneg %p320
      %p426 = scmp.lt.s32.totalorder %s24, 1
      %s427 = scalar_select %p426, %s24, 1
      %s428 = smul.addr %s427, 4
      %s429 = smul.addr %s428, 8
      %s430 = scalar_lea.vmem %s13, %s429
      %p431 = scmp.lt.s32.totalorder %s24, 1
      %s432 = scalar_select %p431, %s24, 1
      %s433 = smul.addr %s432, 4
      %s434 = smul.addr %s433, 8
      %s435 = scalar_lea.vmem %s0, %s434
      %p436 = scmp.lt.s32.totalorder %s24, 1
      %s437 = scalar_select %p436, %s24, 1
      %s438 = smul.addr %s437, 4
      %s439 = smul.addr %s438, 8
      %s440 = scalar_lea.vmem %s13, %s439
      %v442 = vld [vmem:[%s435] sm:$0xff]
      %v443 = vld [vmem:[%s435 + $0x8] sm:$0xff]
      %v444 = vld [vmem:[%s435 + $0x10] sm:$0xff]
      %v445 = vld [vmem:[%s435 + $0x18] sm:$0xff]
      %v446 = vld [vmem:[%s1] sm:$0x1]
      %v447 = vld [vmem:[%s2] sm:$0x1]
      %448 = vadd.xlane.f32.xlu0 %v442
      %v449 = vpop.xlane.xlu0 %448
      %450 = vadd.xlane.f32.xlu0 %v443
      %v451 = vpop.xlane.xlu0 %450
      %452 = vadd.xlane.f32.xlu0 %v444
      %v453 = vpop.xlane.xlu0 %452
      %454 = vadd.xlane.f32.xlu0 %v445
      %v455 = vpop.xlane.xlu0 %454
      %v456 = vrcp.pop 128.0
      %v457 = vmul.f32 %v449, %v456
      %v458 = vmul.f32 %v451, %v456
      %v459 = vmul.f32 %v453, %v456
      %v460 = vmul.f32 %v455, %v456
      %v461 = vsub.f32 %v442, %v457
      %v462 = vsub.f32 %v443, %v458
      %v463 = vsub.f32 %v444, %v459
      %v464 = vsub.f32 %v445, %v460
      %v465 = vmul.f32 %v461, %v461
      %v466 = vmul.f32 %v462, %v462
      %v467 = vmul.f32 %v463, %v463
      %v468 = vmul.f32 %v464, %v464
      %469 = vadd.xlane.f32.xlu0 %v465
      %v470 = vpop.xlane.xlu0 %469
      %471 = vadd.xlane.f32.xlu0 %v466
      %v472 = vpop.xlane.xlu0 %471
      %473 = vadd.xlane.f32.xlu0 %v467
      %v474 = vpop.xlane.xlu0 %473
      %475 = vadd.xlane.f32.xlu0 %v468
      %v476 = vpop.xlane.xlu0 %475
      %v477 = vmul.f32 %v470, %v456
      %v478 = vmul.f32 %v472, %v456
      %v479 = vmul.f32 %v474, %v456
      %v480 = vmul.f32 %v476, %v456
      %v481 = vadd.f32 %v477, 1e-05
      %v482 = vadd.f32 %v478, 1e-05
      %v483 = vadd.f32 %v479, 1e-05
      %v484 = vadd.f32 %v480, 1e-05
      %v485 = vrsqrt.pop %v481
      %v486 = vrsqrt.pop %v482
      %v487 = vrsqrt.pop %v483
      %v488 = vrsqrt.pop %v484
      %v489 = vmul.f32 %v461, %v485
      %v490 = vmul.f32 %v462, %v486
      %v491 = vmul.f32 %v463, %v487
      %v492 = vmul.f32 %v464, %v488
      %v494 = vlaneseq
      %v495 = vshrl.u32 %v494, 7
      %v496 = vsub.s32 0, %v495
      %v497 = vrot.slane %v446, %v496
      %v499 = vmul.f32 %v489, %v497
      %v500 = vmul.f32 %v490, %v497
      %v501 = vmul.f32 %v491, %v497
      %v502 = vmul.f32 %v492, %v497
      %v504 = vlaneseq
      %v505 = vshrl.u32 %v504, 7
      %v506 = vsub.s32 0, %v505
      %v507 = vrot.slane %v447, %v506
      %v509 = vadd.f32 %v499, %v507
      %v510 = vadd.f32 %v500, %v507
      %v511 = vadd.f32 %v501, %v507
      %v512 = vadd.f32 %v502, %v507
      %v513 = vpack.c.bf16 %v510, %v509
      %v514 = vpack.c.bf16 %v512, %v511
      %v515 = vld [vmem:[%s3] sm:$0xff]
      %v516 = vld [vmem:[%s3 + $0x8] sm:$0xf]
      %v517 = vld [vmem:[%s3 + $0xc] sm:$0xff]
      %v518 = vld [vmem:[%s3 + $0x14] sm:$0xf]
      %v519 = vld [vmem:[%s3 + $0x18] sm:$0xff]
      %v520 = vld [vmem:[%s3 + $0x20] sm:$0xf]
      %v521 = vld [vmem:[%s3 + $0x24] sm:$0xff]
      %v522 = vld [vmem:[%s3 + $0x2c] sm:$0xf]
      %v523 = vld [vmem:[%s3 + $0x30] sm:$0xff]
      %v524 = vld [vmem:[%s3 + $0x38] sm:$0xf]
      %v525 = vld [vmem:[%s3 + $0x3c] sm:$0xff]
      %v526 = vld [vmem:[%s3 + $0x44] sm:$0xf]
      %v527 = vld [vmem:[%s3 + $0x48] sm:$0xff]
      %v528 = vld [vmem:[%s3 + $0x50] sm:$0xf]
      %v529 = vld [vmem:[%s3 + $0x54] sm:$0xff]
      %v530 = vld [vmem:[%s3 + $0x5c] sm:$0xf]
      %v531 = vld [vmem:[%s3 + $0x60] sm:$0xff]
      %v532 = vld [vmem:[%s3 + $0x68] sm:$0xf]
      %v533 = vld [vmem:[%s3 + $0x6c] sm:$0xff]
      %v534 = vld [vmem:[%s3 + $0x74] sm:$0xf]
      %v535 = vld [vmem:[%s3 + $0x78] sm:$0xff]
      %v536 = vld [vmem:[%s3 + $0x80] sm:$0xf]
      %v537 = vld [vmem:[%s3 + $0x84] sm:$0xff]
      %v538 = vld [vmem:[%s3 + $0x8c] sm:$0xf]
      %v539 = vld [vmem:[%s3 + $0x90] sm:$0xff]
      %v540 = vld [vmem:[%s3 + $0x98] sm:$0xf]
      %v541 = vld [vmem:[%s3 + $0x9c] sm:$0xff]
      %v542 = vld [vmem:[%s3 + $0xa4] sm:$0xf]
      %v543 = vld [vmem:[%s3 + $0xa8] sm:$0xff]
      %v544 = vld [vmem:[%s3 + $0xb0] sm:$0xf]
      %v545 = vld [vmem:[%s3 + $0xb4] sm:$0xff]
      %v546 = vld [vmem:[%s3 + $0xbc] sm:$0xf]
      %v547 = vld [vmem:[%s4] sm:$0x7]
      %v549 = vlaneseq
      %v550 = vshrl.u32 %v549, 7
      %v551 = vsub.s32 0, %v550
      %v552 = vrot.slane %v547, %v551
      %v553 = vlaneseq
      %v554 = vshrl.u32 %v553, 7
      %v555 = vsub.s32 1, %v554
      %v556 = vrot.slane %v547, %v555
      %v557 = vlaneseq
      %v558 = vshrl.u32 %v557, 7
      %v559 = vsub.s32 2, %v558
      %v560 = vrot.slane %v547, %v559
      %v596 = vunpack.c.l.b16 %v515
      %v597 = vunpack.c.h.b16 %v515
      %v598 = vunpack.c.l.b16 %v516
      %v599 = vunpack.c.l.b16 %v517
      %v600 = vunpack.c.h.b16 %v517
      %v601 = vunpack.c.l.b16 %v518
      %v602 = vunpack.c.l.b16 %v519
      %v603 = vunpack.c.h.b16 %v519
      %v604 = vunpack.c.l.b16 %v520
      %v605 = vunpack.c.l.b16 %v521
      %v606 = vunpack.c.h.b16 %v521
      %v607 = vunpack.c.l.b16 %v522
      %v608 = vunpack.c.l.b16 %v523
      %v609 = vunpack.c.h.b16 %v523
      %v610 = vunpack.c.l.b16 %v524
      %v611 = vunpack.c.l.b16 %v525
      %v612 = vunpack.c.h.b16 %v525
      %v613 = vunpack.c.l.b16 %v526
      %v614 = vunpack.c.l.b16 %v527
      %v615 = vunpack.c.h.b16 %v527
      %v616 = vunpack.c.l.b16 %v528
      %v617 = vunpack.c.l.b16 %v529
      %v618 = vunpack.c.h.b16 %v529
      %v619 = vunpack.c.l.b16 %v530
      %v620 = vunpack.c.l.b16 %v531
      %v621 = vunpack.c.h.b16 %v531
      %v622 = vunpack.c.l.b16 %v532
      %v623 = vunpack.c.l.b16 %v533
      %v624 = vunpack.c.h.b16 %v533
      %v625 = vunpack.c.l.b16 %v534
      %v626 = vunpack.c.l.b16 %v535
      %v627 = vunpack.c.h.b16 %v535
      %v628 = vunpack.c.l.b16 %v536
      %v629 = vunpack.c.l.b16 %v537
      %v630 = vunpack.c.h.b16 %v537
      %v631 = vunpack.c.l.b16 %v538
      %v632 = vunpack.c.l.b16 %v539
      %v633 = vunpack.c.h.b16 %v539
      %v634 = vunpack.c.l.b16 %v540
      %v635 = vunpack.c.l.b16 %v541
      %v636 = vunpack.c.h.b16 %v541
      %v637 = vunpack.c.l.b16 %v542
      %v638 = vunpack.c.l.b16 %v543
      %v639 = vunpack.c.h.b16 %v543
      %v640 = vunpack.c.l.b16 %v544
      %v641 = vunpack.c.l.b16 %v545
      %v642 = vunpack.c.h.b16 %v545
      %v643 = vunpack.c.l.b16 %v546
      %v644 = vpack.c.b16 %v599, %v596
      %v645 = vpack.c.b16 %v600, %v597
      %v646 = vpack.c.b16 %v601, %v598
      %v647 = vpack.c.b16 %v605, %v602
      %v648 = vpack.c.b16 %v606, %v603
      %v649 = vpack.c.b16 %v607, %v604
      %v650 = vpack.c.b16 %v611, %v608
      %v651 = vpack.c.b16 %v612, %v609
      %v652 = vpack.c.b16 %v613, %v610
      %v653 = vpack.c.b16 %v617, %v614
      %v654 = vpack.c.b16 %v618, %v615
      %v655 = vpack.c.b16 %v619, %v616
      %v656 = vpack.c.b16 %v623, %v620
      %v657 = vpack.c.b16 %v624, %v621
      %v658 = vpack.c.b16 %v625, %v622
      %v659 = vpack.c.b16 %v629, %v626
      %v660 = vpack.c.b16 %v630, %v627
      %v661 = vpack.c.b16 %v631, %v628
      %v662 = vpack.c.b16 %v635, %v632
      %v663 = vpack.c.b16 %v636, %v633
      %v664 = vpack.c.b16 %v637, %v634
      %v665 = vpack.c.b16 %v641, %v638
      %v666 = vpack.c.b16 %v642, %v639
      %v667 = vpack.c.b16 %v643, %v640
      %692 = vmatprep.subr.bf16.mxu0 %v666
      %693 = vmatpush1.bf16.msra.mxu0 %v665
      %694 = vmatprep.subr.bf16.mxu0 %v663
      %695 = vmatpush1.bf16.msra.mxu0 %v662
      %696 = vmatprep.subr.bf16.mxu0 %v660
      %697 = vmatpush1.bf16.msra.mxu0 %v659
      %698 = vmatprep.subr.bf16.mxu0 %v657
      %699 = vmatpush1.bf16.msra.mxu0 %v656
      %700 = vmatprep.subr.bf16.mxu0 %v654
      %701 = vmatpush1.bf16.msra.mxu0 %v653
      %702 = vmatprep.subr.bf16.mxu0 %v651
      %703 = vmatpush1.bf16.msra.mxu0 %v650
      %704 = vmatprep.subr.bf16.mxu0 %v648
      %705 = vmatpush1.bf16.msra.mxu0 %v647
      %706 = vmatprep.subr.bf16.mxu0 %v645
      %707 = vmatpush1.bf16.msra.mxu0 %v644
      %708 = vmatprep.subr.bf16.mxu0 0
      %709 = vmatpush2.bf16.msra.mxu0 0
      %710 = vmatprep.subr.bf16.mxu0 0
      %711 = vmatpush2.bf16.msra.mxu0 0
      %712 = vmatprep.subr.bf16.mxu0 0
      %713 = vmatpush2.bf16.msra.mxu0 0
      %714 = vmatprep.subr.bf16.mxu0 0
      %715 = vmatpush2.bf16.msra.mxu0 0
      %716 = vmatprep.subr.bf16.mxu0 0
      %717 = vmatpush2.bf16.msra.mxu0 0
      %718 = vmatprep.subr.bf16.mxu0 0
      %719 = vmatpush2.bf16.msra.mxu0 0
      %720 = vmatprep.subr.bf16.mxu0 0
      %721 = vmatpush2.bf16.msra.mxu0 0
      %722 = vmatprep.subr.bf16.mxu0 0
      %723 = vmatpush2.bf16.msra.mxu0 0
      %724 = vmatprep.mubr.bf16.mxu0 0
      %725 = vmatmul.mubr.bf16.gmra.mxu0 %v513
      %v726 = vpop.f32.mrf.mxu0
      %v727 = vadd.f32 %v552, %v726
      %v728 = vpop.f32.mrf.mxu0
      %v729 = vadd.f32 %v556, %v728
      %v730 = vpop.f32.mrf.mxu0
      %v731 = vadd.f32 %v552, %v730
      %v732 = vpop.f32.mrf.mxu0
      %v733 = vadd.f32 %v556, %v732
      %734 = vmatprep.mubr.bf16.mxu0 0
      %735 = vmatmul.mubr.bf16.gmra.mxu0 %v514
      %v736 = vpop.f32.mrf.mxu0
      %v737 = vadd.f32 %v552, %v736
      %v738 = vpop.f32.mrf.mxu0
      %v739 = vadd.f32 %v556, %v738
      %v740 = vpop.f32.mrf.mxu0
      %v741 = vadd.f32 %v552, %v740
      %v742 = vpop.f32.mrf.mxu0
      %v743 = vadd.f32 %v556, %v742
      %744 = vdwg.mxu0
      %745 = vmatprep.subr.bf16.mxu0 0
      %746 = vmatpush1.bf16.msra.mxu0 %v667
      %747 = vmatprep.subr.bf16.mxu0 0
      %748 = vmatpush1.bf16.msra.mxu0 %v664
      %749 = vmatprep.subr.bf16.mxu0 0
      %750 = vmatpush1.bf16.msra.mxu0 %v661
      %751 = vmatprep.subr.bf16.mxu0 0
      %752 = vmatpush1.bf16.msra.mxu0 %v658
      %753 = vmatprep.subr.bf16.mxu0 0
      %754 = vmatpush1.bf16.msra.mxu0 %v655
      %755 = vmatprep.subr.bf16.mxu0 0
      %756 = vmatpush1.bf16.msra.mxu0 %v652
      %757 = vmatprep.subr.bf16.mxu0 0
      %758 = vmatpush1.bf16.msra.mxu0 %v649
      %759 = vmatprep.subr.bf16.mxu0 0
      %760 = vmatpush1.bf16.msra.mxu0 %v646
      %761 = vmatprep.subr.bf16.mxu0 0
      %762 = vmatpush2.bf16.msra.mxu0 0
      %763 = vmatprep.subr.bf16.mxu0 0
      %764 = vmatpush2.bf16.msra.mxu0 0
      %765 = vmatprep.subr.bf16.mxu0 0
      %766 = vmatpush2.bf16.msra.mxu0 0
      %767 = vmatprep.subr.bf16.mxu0 0
      %768 = vmatpush2.bf16.msra.mxu0 0
      %769 = vmatprep.subr.bf16.mxu0 0
      %770 = vmatpush2.bf16.msra.mxu0 0
      %771 = vmatprep.subr.bf16.mxu0 0
      %772 = vmatpush2.bf16.msra.mxu0 0
      %773 = vmatprep.subr.bf16.mxu0 0
      %774 = vmatpush2.bf16.msra.mxu0 0
      %775 = vmatprep.subr.bf16.mxu0 0
      %776 = vmatpush2.bf16.msra.mxu0 0
      %777 = vmatprep.mubr.bf16.mxu0 0
      %778 = vmatmul.mubr.bf16.gmra.mxu0 %v513
      %v779 = vpop.f32.mrf.mxu0
      %v780 = vadd.f32 %v560, %v779
      %v781 = vpop.f32.mrf.mxu0
      %v782 = vpop.f32.mrf.mxu0
      %v783 = vadd.f32 %v560, %v782
      %v784 = vpop.f32.mrf.mxu0
      %785 = vmatprep.mubr.bf16.mxu0 0
      %786 = vmatmul.mubr.bf16.gmra.mxu0 %v514
      %v787 = vpop.f32.mrf.mxu0
      %v788 = vadd.f32 %v560, %v787
      %v789 = vpop.f32.mrf.mxu0
      %v790 = vpop.f32.mrf.mxu0
      %v791 = vadd.f32 %v560, %v790
      %v792 = vpop.f32.mrf.mxu0
      %793 = vdwg.mxu0
      %v794 = vlaneseq
      %v795 = vand.u32 %v794, 127
      %vm796 = vcmp.lt.s32.totalorder %v795, 17
      %v797 = vpack.c.bf16 %v731, %v727
      %v798 = vpack.c.bf16 %v741, %v737
      %v799 = vpack.c.bf16 %v733, %v729
      %v800 = vpack.c.bf16 %v743, %v739
      %vm801 = vcmask 261120
      %v803 = vsel %vm801, %v797, 0
      %v806 = vsel %vm801, %v798, 0
      %v809 = vsel %vm801, %v799, 0
      %v812 = vsel %vm801, %v800, 0
      %814 = vmatprep.subr.bf16.mxu0 0
      %815 = vmatpush1.bf16.xpose.msra.mxu0 0
      %816 = vmatprep.subr.bf16.mxu0 0
      %817 = vmatpush1.bf16.xpose.msra.mxu0 0
      %818 = vmatprep.subr.bf16.mxu0 0
      %819 = vmatpush1.bf16.xpose.msra.mxu0 0
      %820 = vmatprep.subr.bf16.mxu0 0
      %821 = vmatpush1.bf16.xpose.msra.mxu0 0
      %822 = vmatprep.subr.bf16.mxu0 0
      %823 = vmatpush1.bf16.xpose.msra.mxu0 0
      %824 = vmatprep.subr.bf16.mxu0 0
      %825 = vmatpush1.bf16.xpose.msra.mxu0 0
      %826 = vmatprep.subr.bf16.mxu0 0
      %827 = vmatpush1.bf16.xpose.msra.mxu0 %v812
      %828 = vmatprep.subr.bf16.mxu0 0
      %829 = vmatpush1.bf16.xpose.msra.mxu0 %v809
      %830 = vmatprep.subr.bf16.mxu0 0
      %831 = vmatpush2.bf16.xpose.msra.mxu0 0
      %832 = vmatprep.subr.bf16.mxu0 0
      %833 = vmatpush2.bf16.xpose.msra.mxu0 0
      %834 = vmatprep.subr.bf16.mxu0 0
      %835 = vmatpush2.bf16.xpose.msra.mxu0 0
      %836 = vmatprep.subr.bf16.mxu0 0
      %837 = vmatpush2.bf16.xpose.msra.mxu0 0
      %838 = vmatprep.subr.bf16.mxu0 0
      %839 = vmatpush2.bf16.xpose.msra.mxu0 0
      %840 = vmatprep.subr.bf16.mxu0 0
      %841 = vmatpush2.bf16.xpose.msra.mxu0 0
      %842 = vmatprep.subr.bf16.mxu0 0
      %843 = vmatpush2.bf16.xpose.msra.mxu0 0
      %844 = vmatprep.subr.bf16.mxu0 0
      %845 = vmatpush2.bf16.xpose.msra.mxu0 0
      %846 = vmatprep.mubr.bf16.mxu0 0
      %847 = vmatmul.mubr.bf16.gmra.mxu0 %v803
      %v848 = vpop.f32.mrf.mxu0
      %v849 = vadd.f32 0.0, %v848
      %v850 = vpop.f32.mrf.mxu0
      %v851 = vpop.f32.mrf.mxu0
      %v852 = vadd.f32 0.0, %v851
      %v853 = vpop.f32.mrf.mxu0
      %854 = vmatprep.mubr.bf16.mxu0 0
      %855 = vmatmul.mubr.bf16.gmra.mxu0 %v806
      %v856 = vpop.f32.mrf.mxu0
      %v857 = vadd.f32 0.0, %v856
      %v858 = vpop.f32.mrf.mxu0
      %v859 = vpop.f32.mrf.mxu0
      %v860 = vadd.f32 0.0, %v859
      %v861 = vpop.f32.mrf.mxu0
      %862 = vdwg.mxu0
      %v863 = vmul.f32 %v849, 0.088388346
      %v864 = vmul.f32 %v852, 0.088388346
      %v865 = vmul.f32 %v857, 0.088388346
      %v866 = vmul.f32 %v860, 0.088388346
      %v867 = vsel %vm796, %v863, -1e+30
      %v868 = vsel %vm796, %v864, -1e+30
      %v869 = vsel %vm796, %v865, -1e+30
      %v870 = vsel %vm796, %v866, -1e+30
      %v871 = vsel %vm801, %v867, -inf
      %872 = vmax.xlane.f32.xlu0 %v871
      %v873 = vpop.xlane.xlu0 %872
      %v874 = vsel %vm801, %v868, -inf
      %875 = vmax.xlane.f32.xlu0 %v874
      %v876 = vpop.xlane.xlu0 %875
      %v877 = vsel %vm801, %v869, -inf
      %878 = vmax.xlane.f32.xlu0 %v877
      %v879 = vpop.xlane.xlu0 %878
      %v880 = vsel %vm801, %v870, -inf
      %881 = vmax.xlane.f32.xlu0 %v880
      %v882 = vpop.xlane.xlu0 %881
      %v883 = vsub.f32 %v867, %v873
      %v884 = vsub.f32 %v868, %v876
      %v885 = vsub.f32 %v869, %v879
      %v886 = vsub.f32 %v870, %v882
      %v887 = vmul.f32 %v883, 1.442695
      %v888 = vpow.pop %v887
      %v889 = vmul.f32 %v884, 1.442695
      %v890 = vpow.pop %v889
      %v891 = vmul.f32 %v885, 1.442695
      %v892 = vpow.pop %v891
      %v893 = vmul.f32 %v886, 1.442695
      %v894 = vpow.pop %v893
      %v895 = vsel %vm801, %v888, 0.0
      %896 = vadd.xlane.f32.xlu0 %v895
      %v897 = vpop.xlane.xlu0 %896
      %v898 = vsel %vm801, %v890, 0.0
      %899 = vadd.xlane.f32.xlu0 %v898
      %v900 = vpop.xlane.xlu0 %899
      %v901 = vsel %vm801, %v892, 0.0
      %902 = vadd.xlane.f32.xlu0 %v901
      %v903 = vpop.xlane.xlu0 %902
      %v904 = vsel %vm801, %v894, 0.0
      %905 = vadd.xlane.f32.xlu0 %v904
      %v906 = vpop.xlane.xlu0 %905
      %v907 = vrcp.pop %v897
      %v908 = vrcp.pop %v900
      %v909 = vrcp.pop %v903
      %v910 = vrcp.pop %v906
      %v911 = vmul.f32 %v888, %v907
      %v912 = vmul.f32 %v890, %v908
      %v913 = vmul.f32 %v892, %v909
      %v914 = vmul.f32 %v894, %v910
      %v915 = vpack.c.bf16 %v912, %v911
      %v916 = vpack.c.bf16 %v914, %v913
      %v917 = vpack.c.bf16 %v783, %v780
      %v918 = vpack.c.bf16 %v791, %v788
      %v920 = vsel %vm801, %v915, 0
      %v923 = vsel %vm801, %v916, 0
      %925 = vmatprep.subr.bf16.mxu0 0
      %926 = vmatpush1.bf16.msra.mxu0 0
      %927 = vmatprep.subr.bf16.mxu0 0
      %928 = vmatpush1.bf16.msra.mxu0 0
      %929 = vmatprep.subr.bf16.mxu0 0
      %930 = vmatpush1.bf16.msra.mxu0 0
      %931 = vmatprep.subr.bf16.mxu0 0
      %932 = vmatpush1.bf16.msra.mxu0 0
      %933 = vmatprep.subr.bf16.mxu0 0
      %934 = vmatpush1.bf16.msra.mxu0 0
      %935 = vmatprep.subr.bf16.mxu0 0
      %936 = vmatpush1.bf16.msra.mxu0 0
      %937 = vmatprep.subr.bf16.mxu0 0
      %938 = vmatpush1.bf16.msra.mxu0 %v918
      %939 = vmatprep.subr.bf16.mxu0 0
      %940 = vmatpush1.bf16.msra.mxu0 %v917
      %941 = vmatprep.subr.bf16.mxu0 0
      %942 = vmatpush2.bf16.msra.mxu0 0
      %943 = vmatprep.subr.bf16.mxu0 0
      %944 = vmatpush2.bf16.msra.mxu0 0
      %945 = vmatprep.subr.bf16.mxu0 0
      %946 = vmatpush2.bf16.msra.mxu0 0
      %947 = vmatprep.subr.bf16.mxu0 0
      %948 = vmatpush2.bf16.msra.mxu0 0
      %949 = vmatprep.subr.bf16.mxu0 0
      %950 = vmatpush2.bf16.msra.mxu0 0
      %951 = vmatprep.subr.bf16.mxu0 0
      %952 = vmatpush2.bf16.msra.mxu0 0
      %953 = vmatprep.subr.bf16.mxu0 0
      %954 = vmatpush2.bf16.msra.mxu0 0
      %955 = vmatprep.subr.bf16.mxu0 0
      %956 = vmatpush2.bf16.msra.mxu0 0
      %957 = vmatprep.mubr.bf16.mxu0 0
      %958 = vmatmul.mubr.bf16.gmra.mxu0 %v920
      %v959 = vpop.f32.mrf.mxu0
      %v960 = vadd.f32 0.0, %v959
      %v961 = vpop.f32.mrf.mxu0
      %v962 = vpop.f32.mrf.mxu0
      %v963 = vadd.f32 0.0, %v962
      %v964 = vpop.f32.mrf.mxu0
      %965 = vmatprep.mubr.bf16.mxu0 0
      %966 = vmatmul.mubr.bf16.gmra.mxu0 %v923
      %v967 = vpop.f32.mrf.mxu0
      %v968 = vadd.f32 0.0, %v967
      %v969 = vpop.f32.mrf.mxu0
      %v970 = vpop.f32.mrf.mxu0
      %v971 = vadd.f32 0.0, %v970
      %v972 = vpop.f32.mrf.mxu0
      %973 = vdwg.mxu0
      %976 = vrot.lane.b32.xlu0 %v797, 96
      %v977 = vpop.permute.xlu0 %976
      %978 = vrot.lane.b32.xlu0 %v798, 96
      %v979 = vpop.permute.xlu0 %978
      %982 = vrot.lane.b32.xlu0 %v799, 96
      %v983 = vpop.permute.xlu0 %982
      %984 = vrot.lane.b32.xlu0 %v800, 96
      %v985 = vpop.permute.xlu0 %984
      %v987 = vsel %vm801, %v977, 0
      %v990 = vsel %vm801, %v979, 0
      %v993 = vsel %vm801, %v983, 0
      %v996 = vsel %vm801, %v985, 0
      %998 = vmatprep.subr.bf16.mxu0 0
      %999 = vmatpush1.bf16.xpose.msra.mxu0 0
      %1000 = vmatprep.subr.bf16.mxu0 0
      %1001 = vmatpush1.bf16.xpose.msra.mxu0 0
      %1002 = vmatprep.subr.bf16.mxu0 0
      %1003 = vmatpush1.bf16.xpose.msra.mxu0 0
      %1004 = vmatprep.subr.bf16.mxu0 0
      %1005 = vmatpush1.bf16.xpose.msra.mxu0 0
      %1006 = vmatprep.subr.bf16.mxu0 0
      %1007 = vmatpush1.bf16.xpose.msra.mxu0 0
      %1008 = vmatprep.subr.bf16.mxu0 0
      %1009 = vmatpush1.bf16.xpose.msra.mxu0 0
      %1010 = vmatprep.subr.bf16.mxu0 0
      %1011 = vmatpush1.bf16.xpose.msra.mxu0 %v996
      %1012 = vmatprep.subr.bf16.mxu0 0
      %1013 = vmatpush1.bf16.xpose.msra.mxu0 %v993
      %1014 = vmatprep.subr.bf16.mxu0 0
      %1015 = vmatpush2.bf16.xpose.msra.mxu0 0
      %1016 = vmatprep.subr.bf16.mxu0 0
      %1017 = vmatpush2.bf16.xpose.msra.mxu0 0
      %1018 = vmatprep.subr.bf16.mxu0 0
      %1019 = vmatpush2.bf16.xpose.msra.mxu0 0
      %1020 = vmatprep.subr.bf16.mxu0 0
      %1021 = vmatpush2.bf16.xpose.msra.mxu0 0
      %1022 = vmatprep.subr.bf16.mxu0 0
      %1023 = vmatpush2.bf16.xpose.msra.mxu0 0
      %1024 = vmatprep.subr.bf16.mxu0 0
      %1025 = vmatpush2.bf16.xpose.msra.mxu0 0
      %1026 = vmatprep.subr.bf16.mxu0 0
      %1027 = vmatpush2.bf16.xpose.msra.mxu0 0
      %1028 = vmatprep.subr.bf16.mxu0 0
      %1029 = vmatpush2.bf16.xpose.msra.mxu0 0
      %1030 = vmatprep.mubr.bf16.mxu0 0
      %1031 = vmatmul.mubr.bf16.gmra.mxu0 %v987
      %v1032 = vpop.f32.mrf.mxu0
      %v1033 = vadd.f32 0.0, %v1032
      %v1034 = vpop.f32.mrf.mxu0
      %v1035 = vpop.f32.mrf.mxu0
      %v1036 = vadd.f32 0.0, %v1035
      %v1037 = vpop.f32.mrf.mxu0
      %1038 = vmatprep.mubr.bf16.mxu0 0
      %1039 = vmatmul.mubr.bf16.gmra.mxu0 %v990
      %v1040 = vpop.f32.mrf.mxu0
      %v1041 = vadd.f32 0.0, %v1040
      %v1042 = vpop.f32.mrf.mxu0
      %v1043 = vpop.f32.mrf.mxu0
      %v1044 = vadd.f32 0.0, %v1043
      %v1045 = vpop.f32.mrf.mxu0
      %1046 = vdwg.mxu0
      %v1047 = vmul.f32 %v1033, 0.088388346
      %v1048 = vmul.f32 %v1036, 0.088388346
      %v1049 = vmul.f32 %v1041, 0.088388346
      %v1050 = vmul.f32 %v1044, 0.088388346
      %v1051 = vsel %vm796, %v1047, -1e+30
      %v1052 = vsel %vm796, %v1048, -1e+30
      %v1053 = vsel %vm796, %v1049, -1e+30
      %v1054 = vsel %vm796, %v1050, -1e+30
      %v1055 = vsel %vm801, %v1051, -inf
      %1056 = vmax.xlane.f32.xlu0 %v1055
      %v1057 = vpop.xlane.xlu0 %1056
      %v1058 = vsel %vm801, %v1052, -inf
      %1059 = vmax.xlane.f32.xlu0 %v1058
      %v1060 = vpop.xlane.xlu0 %1059
      %v1061 = vsel %vm801, %v1053, -inf
      %1062 = vmax.xlane.f32.xlu0 %v1061
      %v1063 = vpop.xlane.xlu0 %1062
      %v1064 = vsel %vm801, %v1054, -inf
      %1065 = vmax.xlane.f32.xlu0 %v1064
      %v1066 = vpop.xlane.xlu0 %1065
      %v1067 = vsub.f32 %v1051, %v1057
      %v1068 = vsub.f32 %v1052, %v1060
      %v1069 = vsub.f32 %v1053, %v1063
      %v1070 = vsub.f32 %v1054, %v1066
      %v1071 = vmul.f32 %v1067, 1.442695
      %v1072 = vpow.pop %v1071
      %v1073 = vmul.f32 %v1068, 1.442695
      %v1074 = vpow.pop %v1073
      %v1075 = vmul.f32 %v1069, 1.442695
      %v1076 = vpow.pop %v1075
      %v1077 = vmul.f32 %v1070, 1.442695
      %v1078 = vpow.pop %v1077
      %v1079 = vsel %vm801, %v1072, 0.0
      %1080 = vadd.xlane.f32.xlu0 %v1079
      %v1081 = vpop.xlane.xlu0 %1080
      %v1082 = vsel %vm801, %v1074, 0.0
      %1083 = vadd.xlane.f32.xlu0 %v1082
      %v1084 = vpop.xlane.xlu0 %1083
      %v1085 = vsel %vm801, %v1076, 0.0
      %1086 = vadd.xlane.f32.xlu0 %v1085
      %v1087 = vpop.xlane.xlu0 %1086
      %v1088 = vsel %vm801, %v1078, 0.0
      %1089 = vadd.xlane.f32.xlu0 %v1088
      %v1090 = vpop.xlane.xlu0 %1089
      %v1091 = vrcp.pop %v1081
      %v1092 = vrcp.pop %v1084
      %v1093 = vrcp.pop %v1087
      %v1094 = vrcp.pop %v1090
      %v1095 = vmul.f32 %v1072, %v1091
      %v1096 = vmul.f32 %v1074, %v1092
      %v1097 = vmul.f32 %v1076, %v1093
      %v1098 = vmul.f32 %v1078, %v1094
      %v1099 = vpack.c.bf16 %v1096, %v1095
      %v1100 = vpack.c.bf16 %v1098, %v1097
      %1103 = vrot.lane.b32.xlu0 %v917, 96
      %v1104 = vpop.permute.xlu0 %1103
      %1105 = vrot.lane.b32.xlu0 %v918, 96
      %v1106 = vpop.permute.xlu0 %1105
      %v1110 = vsel %vm801, %v1099, 0
      %v1113 = vsel %vm801, %v1100, 0
      %1115 = vmatprep.subr.bf16.mxu0 0
      %1116 = vmatpush1.bf16.msra.mxu0 0
      %1117 = vmatprep.subr.bf16.mxu0 0
      %1118 = vmatpush1.bf16.msra.mxu0 0
      %1119 = vmatprep.subr.bf16.mxu0 0
      %1120 = vmatpush1.bf16.msra.mxu0 0
      %1121 = vmatprep.subr.bf16.mxu0 0
      %1122 = vmatpush1.bf16.msra.mxu0 0
      %1123 = vmatprep.subr.bf16.mxu0 0
      %1124 = vmatpush1.bf16.msra.mxu0 0
      %1125 = vmatprep.subr.bf16.mxu0 0
      %1126 = vmatpush1.bf16.msra.mxu0 0
      %1127 = vmatprep.subr.bf16.mxu0 0
      %1128 = vmatpush1.bf16.msra.mxu0 %v1106
      %1129 = vmatprep.subr.bf16.mxu0 0
      %1130 = vmatpush1.bf16.msra.mxu0 %v1104
      %1131 = vmatprep.subr.bf16.mxu0 0
      %1132 = vmatpush2.bf16.msra.mxu0 0
      %1133 = vmatprep.subr.bf16.mxu0 0
      %1134 = vmatpush2.bf16.msra.mxu0 0
      %1135 = vmatprep.subr.bf16.mxu0 0
      %1136 = vmatpush2.bf16.msra.mxu0 0
      %1137 = vmatprep.subr.bf16.mxu0 0
      %1138 = vmatpush2.bf16.msra.mxu0 0
      %1139 = vmatprep.subr.bf16.mxu0 0
      %1140 = vmatpush2.bf16.msra.mxu0 0
      %1141 = vmatprep.subr.bf16.mxu0 0
      %1142 = vmatpush2.bf16.msra.mxu0 0
      %1143 = vmatprep.subr.bf16.mxu0 0
      %1144 = vmatpush2.bf16.msra.mxu0 0
      %1145 = vmatprep.subr.bf16.mxu0 0
      %1146 = vmatpush2.bf16.msra.mxu0 0
      %1147 = vmatprep.mubr.bf16.mxu0 0
      %1148 = vmatmul.mubr.bf16.gmra.mxu0 %v1110
      %v1149 = vpop.f32.mrf.mxu0
      %v1150 = vadd.f32 0.0, %v1149
      %v1151 = vpop.f32.mrf.mxu0
      %v1152 = vpop.f32.mrf.mxu0
      %v1153 = vadd.f32 0.0, %v1152
      %v1154 = vpop.f32.mrf.mxu0
      %1155 = vmatprep.mubr.bf16.mxu0 0
      %1156 = vmatmul.mubr.bf16.gmra.mxu0 %v1113
      %v1157 = vpop.f32.mrf.mxu0
      %v1158 = vadd.f32 0.0, %v1157
      %v1159 = vpop.f32.mrf.mxu0
      %v1160 = vpop.f32.mrf.mxu0
      %v1161 = vadd.f32 0.0, %v1160
      %v1162 = vpop.f32.mrf.mxu0
      %1163 = vdwg.mxu0
      %1164 = vrot.lane.b32.xlu0 %v797, 64
      %v1165 = vpop.permute.xlu0 %1164
      %1166 = vrot.lane.b32.xlu0 %v798, 64
      %v1167 = vpop.permute.xlu0 %1166
      %1168 = vrot.lane.b32.xlu0 %v799, 64
      %v1169 = vpop.permute.xlu0 %1168
      %1170 = vrot.lane.b32.xlu0 %v800, 64
      %v1171 = vpop.permute.xlu0 %1170
      %v1173 = vsel %vm801, %v1165, 0
      %v1176 = vsel %vm801, %v1167, 0
      %v1179 = vsel %vm801, %v1169, 0
      %v1182 = vsel %vm801, %v1171, 0
      %1184 = vmatprep.subr.bf16.mxu0 0
      %1185 = vmatpush1.bf16.xpose.msra.mxu0 0
      %1186 = vmatprep.subr.bf16.mxu0 0
      %1187 = vmatpush1.bf16.xpose.msra.mxu0 0
      %1188 = vmatprep.subr.bf16.mxu0 0
      %1189 = vmatpush1.bf16.xpose.msra.mxu0 0
      %1190 = vmatprep.subr.bf16.mxu0 0
      %1191 = vmatpush1.bf16.xpose.msra.mxu0 0
      %1192 = vmatprep.subr.bf16.mxu0 0
      %1193 = vmatpush1.bf16.xpose.msra.mxu0 0
      %1194 = vmatprep.subr.bf16.mxu0 0
      %1195 = vmatpush1.bf16.xpose.msra.mxu0 0
      %1196 = vmatprep.subr.bf16.mxu0 0
      %1197 = vmatpush1.bf16.xpose.msra.mxu0 %v1182
      %1198 = vmatprep.subr.bf16.mxu0 0
      %1199 = vmatpush1.bf16.xpose.msra.mxu0 %v1179
      %1200 = vmatprep.subr.bf16.mxu0 0
      %1201 = vmatpush2.bf16.xpose.msra.mxu0 0
      %1202 = vmatprep.subr.bf16.mxu0 0
      %1203 = vmatpush2.bf16.xpose.msra.mxu0 0
      %1204 = vmatprep.subr.bf16.mxu0 0
      %1205 = vmatpush2.bf16.xpose.msra.mxu0 0
      %1206 = vmatprep.subr.bf16.mxu0 0
      %1207 = vmatpush2.bf16.xpose.msra.mxu0 0
      %1208 = vmatprep.subr.bf16.mxu0 0
      %1209 = vmatpush2.bf16.xpose.msra.mxu0 0
      %1210 = vmatprep.subr.bf16.mxu0 0
      %1211 = vmatpush2.bf16.xpose.msra.mxu0 0
      %1212 = vmatprep.subr.bf16.mxu0 0
      %1213 = vmatpush2.bf16.xpose.msra.mxu0 0
      %1214 = vmatprep.subr.bf16.mxu0 0
      %1215 = vmatpush2.bf16.xpose.msra.mxu0 0
      %1216 = vmatprep.mubr.bf16.mxu0 0
      %1217 = vmatmul.mubr.bf16.gmra.mxu0 %v1173
      %v1218 = vpop.f32.mrf.mxu0
      %v1219 = vadd.f32 0.0, %v1218
      %v1220 = vpop.f32.mrf.mxu0
      %v1221 = vpop.f32.mrf.mxu0
      %v1222 = vadd.f32 0.0, %v1221
      %v1223 = vpop.f32.mrf.mxu0
      %1224 = vmatprep.mubr.bf16.mxu0 0
      %1225 = vmatmul.mubr.bf16.gmra.mxu0 %v1176
      %v1226 = vpop.f32.mrf.mxu0
      %v1227 = vadd.f32 0.0, %v1226
      %v1228 = vpop.f32.mrf.mxu0
      %v1229 = vpop.f32.mrf.mxu0
      %v1230 = vadd.f32 0.0, %v1229
      %v1231 = vpop.f32.mrf.mxu0
      %1232 = vdwg.mxu0
      %v1233 = vmul.f32 %v1219, 0.088388346
      %v1234 = vmul.f32 %v1222, 0.088388346
      %v1235 = vmul.f32 %v1227, 0.088388346
      %v1236 = vmul.f32 %v1230, 0.088388346
      %v1237 = vsel %vm796, %v1233, -1e+30
      %v1238 = vsel %vm796, %v1234, -1e+30
      %v1239 = vsel %vm796, %v1235, -1e+30
      %v1240 = vsel %vm796, %v1236, -1e+30
      %v1241 = vsel %vm801, %v1237, -inf
      %1242 = vmax.xlane.f32.xlu0 %v1241
      %v1243 = vpop.xlane.xlu0 %1242
      %v1244 = vsel %vm801, %v1238, -inf
      %1245 = vmax.xlane.f32.xlu0 %v1244
      %v1246 = vpop.xlane.xlu0 %1245
      %v1247 = vsel %vm801, %v1239, -inf
      %1248 = vmax.xlane.f32.xlu0 %v1247
      %v1249 = vpop.xlane.xlu0 %1248
      %v1250 = vsel %vm801, %v1240, -inf
      %1251 = vmax.xlane.f32.xlu0 %v1250
      %v1252 = vpop.xlane.xlu0 %1251
      %v1253 = vsub.f32 %v1237, %v1243
      %v1254 = vsub.f32 %v1238, %v1246
      %v1255 = vsub.f32 %v1239, %v1249
      %v1256 = vsub.f32 %v1240, %v1252
      %v1257 = vmul.f32 %v1253, 1.442695
      %v1258 = vpow.pop %v1257
      %v1259 = vmul.f32 %v1254, 1.442695
      %v1260 = vpow.pop %v1259
      %v1261 = vmul.f32 %v1255, 1.442695
      %v1262 = vpow.pop %v1261
      %v1263 = vmul.f32 %v1256, 1.442695
      %v1264 = vpow.pop %v1263
      %v1265 = vsel %vm801, %v1258, 0.0
      %1266 = vadd.xlane.f32.xlu0 %v1265
      %v1267 = vpop.xlane.xlu0 %1266
      %v1268 = vsel %vm801, %v1260, 0.0
      %1269 = vadd.xlane.f32.xlu0 %v1268
      %v1270 = vpop.xlane.xlu0 %1269
      %v1271 = vsel %vm801, %v1262, 0.0
      %1272 = vadd.xlane.f32.xlu0 %v1271
      %v1273 = vpop.xlane.xlu0 %1272
      %v1274 = vsel %vm801, %v1264, 0.0
      %1275 = vadd.xlane.f32.xlu0 %v1274
      %v1276 = vpop.xlane.xlu0 %1275
      %v1277 = vrcp.pop %v1267
      %v1278 = vrcp.pop %v1270
      %v1279 = vrcp.pop %v1273
      %v1280 = vrcp.pop %v1276
      %v1281 = vmul.f32 %v1258, %v1277
      %v1282 = vmul.f32 %v1260, %v1278
      %v1283 = vmul.f32 %v1262, %v1279
      %v1284 = vmul.f32 %v1264, %v1280
      %v1285 = vpack.c.bf16 %v1282, %v1281
      %v1286 = vpack.c.bf16 %v1284, %v1283
      %1287 = vrot.lane.b32.xlu0 %v917, 64
      %v1288 = vpop.permute.xlu0 %1287
      %1289 = vrot.lane.b32.xlu0 %v918, 64
      %v1290 = vpop.permute.xlu0 %1289
      %v1294 = vsel %vm801, %v1285, 0
      %v1297 = vsel %vm801, %v1286, 0
      %1299 = vmatprep.subr.bf16.mxu0 0
      %1300 = vmatpush1.bf16.msra.mxu0 0
      %1301 = vmatprep.subr.bf16.mxu0 0
      %1302 = vmatpush1.bf16.msra.mxu0 0
      %1303 = vmatprep.subr.bf16.mxu0 0
      %1304 = vmatpush1.bf16.msra.mxu0 0
      %1305 = vmatprep.subr.bf16.mxu0 0
      %1306 = vmatpush1.bf16.msra.mxu0 0
      %1307 = vmatprep.subr.bf16.mxu0 0
      %1308 = vmatpush1.bf16.msra.mxu0 0
      %1309 = vmatprep.subr.bf16.mxu0 0
      %1310 = vmatpush1.bf16.msra.mxu0 0
      %1311 = vmatprep.subr.bf16.mxu0 0
      %1312 = vmatpush1.bf16.msra.mxu0 %v1290
      %1313 = vmatprep.subr.bf16.mxu0 0
      %1314 = vmatpush1.bf16.msra.mxu0 %v1288
      %1315 = vmatprep.subr.bf16.mxu0 0
      %1316 = vmatpush2.bf16.msra.mxu0 0
      %1317 = vmatprep.subr.bf16.mxu0 0
      %1318 = vmatpush2.bf16.msra.mxu0 0
      %1319 = vmatprep.subr.bf16.mxu0 0
      %1320 = vmatpush2.bf16.msra.mxu0 0
      %1321 = vmatprep.subr.bf16.mxu0 0
      %1322 = vmatpush2.bf16.msra.mxu0 0
      %1323 = vmatprep.subr.bf16.mxu0 0
      %1324 = vmatpush2.bf16.msra.mxu0 0
      %1325 = vmatprep.subr.bf16.mxu0 0
      %1326 = vmatpush2.bf16.msra.mxu0 0
      %1327 = vmatprep.subr.bf16.mxu0 0
      %1328 = vmatpush2.bf16.msra.mxu0 0
      %1329 = vmatprep.subr.bf16.mxu0 0
      %1330 = vmatpush2.bf16.msra.mxu0 0
      %1331 = vmatprep.mubr.bf16.mxu0 0
      %1332 = vmatmul.mubr.bf16.gmra.mxu0 %v1294
      %v1333 = vpop.f32.mrf.mxu0
      %v1334 = vadd.f32 0.0, %v1333
      %v1335 = vpop.f32.mrf.mxu0
      %v1336 = vpop.f32.mrf.mxu0
      %v1337 = vadd.f32 0.0, %v1336
      %v1338 = vpop.f32.mrf.mxu0
      %1339 = vmatprep.mubr.bf16.mxu0 0
      %1340 = vmatmul.mubr.bf16.gmra.mxu0 %v1297
      %v1341 = vpop.f32.mrf.mxu0
      %v1342 = vadd.f32 0.0, %v1341
      %v1343 = vpop.f32.mrf.mxu0
      %v1344 = vpop.f32.mrf.mxu0
      %v1345 = vadd.f32 0.0, %v1344
      %v1346 = vpop.f32.mrf.mxu0
      %1347 = vdwg.mxu0
      %1348 = vrot.lane.b32.xlu0 %v797, 32
      %v1349 = vpop.permute.xlu0 %1348
      %1350 = vrot.lane.b32.xlu0 %v798, 32
      %v1351 = vpop.permute.xlu0 %1350
      %1352 = vrot.lane.b32.xlu0 %v799, 32
      %v1353 = vpop.permute.xlu0 %1352
      %1354 = vrot.lane.b32.xlu0 %v800, 32
      %v1355 = vpop.permute.xlu0 %1354
      %v1357 = vsel %vm801, %v1349, 0
      %v1360 = vsel %vm801, %v1351, 0
      %v1363 = vsel %vm801, %v1353, 0
      %v1366 = vsel %vm801, %v1355, 0
      %1368 = vmatprep.subr.bf16.mxu0 0
      %1369 = vmatpush1.bf16.xpose.msra.mxu0 0
      %1370 = vmatprep.subr.bf16.mxu0 0
      %1371 = vmatpush1.bf16.xpose.msra.mxu0 0
      %1372 = vmatprep.subr.bf16.mxu0 0
      %1373 = vmatpush1.bf16.xpose.msra.mxu0 0
      %1374 = vmatprep.subr.bf16.mxu0 0
      %1375 = vmatpush1.bf16.xpose.msra.mxu0 0
      %1376 = vmatprep.subr.bf16.mxu0 0
      %1377 = vmatpush1.bf16.xpose.msra.mxu0 0
      %1378 = vmatprep.subr.bf16.mxu0 0
      %1379 = vmatpush1.bf16.xpose.msra.mxu0 0
      %1380 = vmatprep.subr.bf16.mxu0 0
      %1381 = vmatpush1.bf16.xpose.msra.mxu0 %v1366
      %1382 = vmatprep.subr.bf16.mxu0 0
      %1383 = vmatpush1.bf16.xpose.msra.mxu0 %v1363
      %1384 = vmatprep.subr.bf16.mxu0 0
      %1385 = vmatpush2.bf16.xpose.msra.mxu0 0
      %1386 = vmatprep.subr.bf16.mxu0 0
      %1387 = vmatpush2.bf16.xpose.msra.mxu0 0
      %1388 = vmatprep.subr.bf16.mxu0 0
      %1389 = vmatpush2.bf16.xpose.msra.mxu0 0
      %1390 = vmatprep.subr.bf16.mxu0 0
      %1391 = vmatpush2.bf16.xpose.msra.mxu0 0
      %1392 = vmatprep.subr.bf16.mxu0 0
      %1393 = vmatpush2.bf16.xpose.msra.mxu0 0
      %1394 = vmatprep.subr.bf16.mxu0 0
      %1395 = vmatpush2.bf16.xpose.msra.mxu0 0
      %1396 = vmatprep.subr.bf16.mxu0 0
      %1397 = vmatpush2.bf16.xpose.msra.mxu0 0
      %1398 = vmatprep.subr.bf16.mxu0 0
      %1399 = vmatpush2.bf16.xpose.msra.mxu0 0
      %1400 = vmatprep.mubr.bf16.mxu0 0
      %1401 = vmatmul.mubr.bf16.gmra.mxu0 %v1357
      %v1402 = vpop.f32.mrf.mxu0
      %v1403 = vadd.f32 0.0, %v1402
      %v1404 = vpop.f32.mrf.mxu0
      %v1405 = vpop.f32.mrf.mxu0
      %v1406 = vadd.f32 0.0, %v1405
      %v1407 = vpop.f32.mrf.mxu0
      %1408 = vmatprep.mubr.bf16.mxu0 0
      %1409 = vmatmul.mubr.bf16.gmra.mxu0 %v1360
      %v1410 = vpop.f32.mrf.mxu0
      %v1411 = vadd.f32 0.0, %v1410
      %v1412 = vpop.f32.mrf.mxu0
      %v1413 = vpop.f32.mrf.mxu0
      %v1414 = vadd.f32 0.0, %v1413
      %v1415 = vpop.f32.mrf.mxu0
      %1416 = vdwg.mxu0
      %v1417 = vmul.f32 %v1403, 0.088388346
      %v1418 = vmul.f32 %v1406, 0.088388346
      %v1419 = vmul.f32 %v1411, 0.088388346
      %v1420 = vmul.f32 %v1414, 0.088388346
      %v1421 = vsel %vm796, %v1417, -1e+30
      %v1422 = vsel %vm796, %v1418, -1e+30
      %v1423 = vsel %vm796, %v1419, -1e+30
      %v1424 = vsel %vm796, %v1420, -1e+30
      %v1425 = vsel %vm801, %v1421, -inf
      %1426 = vmax.xlane.f32.xlu0 %v1425
      %v1427 = vpop.xlane.xlu0 %1426
      %v1428 = vsel %vm801, %v1422, -inf
      %1429 = vmax.xlane.f32.xlu0 %v1428
      %v1430 = vpop.xlane.xlu0 %1429
      %v1431 = vsel %vm801, %v1423, -inf
      %1432 = vmax.xlane.f32.xlu0 %v1431
      %v1433 = vpop.xlane.xlu0 %1432
      %v1434 = vsel %vm801, %v1424, -inf
      %1435 = vmax.xlane.f32.xlu0 %v1434
      %v1436 = vpop.xlane.xlu0 %1435
      %v1437 = vsub.f32 %v1421, %v1427
      %v1438 = vsub.f32 %v1422, %v1430
      %v1439 = vsub.f32 %v1423, %v1433
      %v1440 = vsub.f32 %v1424, %v1436
      %v1441 = vmul.f32 %v1437, 1.442695
      %v1442 = vpow.pop %v1441
      %v1443 = vmul.f32 %v1438, 1.442695
      %v1444 = vpow.pop %v1443
      %v1445 = vmul.f32 %v1439, 1.442695
      %v1446 = vpow.pop %v1445
      %v1447 = vmul.f32 %v1440, 1.442695
      %v1448 = vpow.pop %v1447
      %v1449 = vsel %vm801, %v1442, 0.0
      %1450 = vadd.xlane.f32.xlu0 %v1449
      %v1451 = vpop.xlane.xlu0 %1450
      %v1452 = vsel %vm801, %v1444, 0.0
      %1453 = vadd.xlane.f32.xlu0 %v1452
      %v1454 = vpop.xlane.xlu0 %1453
      %v1455 = vsel %vm801, %v1446, 0.0
      %1456 = vadd.xlane.f32.xlu0 %v1455
      %v1457 = vpop.xlane.xlu0 %1456
      %v1458 = vsel %vm801, %v1448, 0.0
      %1459 = vadd.xlane.f32.xlu0 %v1458
      %v1460 = vpop.xlane.xlu0 %1459
      %v1461 = vrcp.pop %v1451
      %v1462 = vrcp.pop %v1454
      %v1463 = vrcp.pop %v1457
      %v1464 = vrcp.pop %v1460
      %v1465 = vmul.f32 %v1442, %v1461
      %v1466 = vmul.f32 %v1444, %v1462
      %v1467 = vmul.f32 %v1446, %v1463
      %v1468 = vmul.f32 %v1448, %v1464
      %v1469 = vpack.c.bf16 %v1466, %v1465
      %v1470 = vpack.c.bf16 %v1468, %v1467
      %1471 = vrot.lane.b32.xlu0 %v917, 32
      %v1472 = vpop.permute.xlu0 %1471
      %1473 = vrot.lane.b32.xlu0 %v918, 32
      %v1474 = vpop.permute.xlu0 %1473
      %v1478 = vsel %vm801, %v1469, 0
      %v1481 = vsel %vm801, %v1470, 0
      %1483 = vmatprep.subr.bf16.mxu0 0
      %1484 = vmatpush1.bf16.msra.mxu0 0
      %1485 = vmatprep.subr.bf16.mxu0 0
      %1486 = vmatpush1.bf16.msra.mxu0 0
      %1487 = vmatprep.subr.bf16.mxu0 0
      %1488 = vmatpush1.bf16.msra.mxu0 0
      %1489 = vmatprep.subr.bf16.mxu0 0
      %1490 = vmatpush1.bf16.msra.mxu0 0
      %1491 = vmatprep.subr.bf16.mxu0 0
      %1492 = vmatpush1.bf16.msra.mxu0 0
      %1493 = vmatprep.subr.bf16.mxu0 0
      %1494 = vmatpush1.bf16.msra.mxu0 0
      %1495 = vmatprep.subr.bf16.mxu0 0
      %1496 = vmatpush1.bf16.msra.mxu0 %v1474
      %1497 = vmatprep.subr.bf16.mxu0 0
      %1498 = vmatpush1.bf16.msra.mxu0 %v1472
      %1499 = vmatprep.subr.bf16.mxu0 0
      %1500 = vmatpush2.bf16.msra.mxu0 0
      %1501 = vmatprep.subr.bf16.mxu0 0
      %1502 = vmatpush2.bf16.msra.mxu0 0
      %1503 = vmatprep.subr.bf16.mxu0 0
      %1504 = vmatpush2.bf16.msra.mxu0 0
      %1505 = vmatprep.subr.bf16.mxu0 0
      %1506 = vmatpush2.bf16.msra.mxu0 0
      %1507 = vmatprep.subr.bf16.mxu0 0
      %1508 = vmatpush2.bf16.msra.mxu0 0
      %1509 = vmatprep.subr.bf16.mxu0 0
      %1510 = vmatpush2.bf16.msra.mxu0 0
      %1511 = vmatprep.subr.bf16.mxu0 0
      %1512 = vmatpush2.bf16.msra.mxu0 0
      %1513 = vmatprep.subr.bf16.mxu0 0
      %1514 = vmatpush2.bf16.msra.mxu0 0
      %1515 = vmatprep.mubr.bf16.mxu0 0
      %1516 = vmatmul.mubr.bf16.gmra.mxu0 %v1478
      %v1517 = vpop.f32.mrf.mxu0
      %v1518 = vadd.f32 0.0, %v1517
      %v1519 = vpop.f32.mrf.mxu0
      %v1520 = vpop.f32.mrf.mxu0
      %v1521 = vadd.f32 0.0, %v1520
      %v1522 = vpop.f32.mrf.mxu0
      %1523 = vmatprep.mubr.bf16.mxu0 0
      %1524 = vmatmul.mubr.bf16.gmra.mxu0 %v1481
      %v1525 = vpop.f32.mrf.mxu0
      %v1526 = vadd.f32 0.0, %v1525
      %v1527 = vpop.f32.mrf.mxu0
      %v1528 = vpop.f32.mrf.mxu0
      %v1529 = vadd.f32 0.0, %v1528
      %v1530 = vpop.f32.mrf.mxu0
      %1531 = vdwg.mxu0
      %1536 = vrot.lane.b32.xlu0 %v1150, 32
      %v1537 = vpop.permute.xlu0 %1536
      %1538 = vrot.lane.b32.xlu0 %v1153, 32
      %v1539 = vpop.permute.xlu0 %1538
      %1540 = vrot.lane.b32.xlu0 %v1158, 32
      %v1541 = vpop.permute.xlu0 %1540
      %1542 = vrot.lane.b32.xlu0 %v1161, 32
      %v1543 = vpop.permute.xlu0 %1542
      %1552 = vrot.lane.b32.xlu0 %v1334, 64
      %v1553 = vpop.permute.xlu0 %1552
      %1554 = vrot.lane.b32.xlu0 %v1337, 64
      %v1555 = vpop.permute.xlu0 %1554
      %1556 = vrot.lane.b32.xlu0 %v1342, 64
      %v1557 = vpop.permute.xlu0 %1556
      %1558 = vrot.lane.b32.xlu0 %v1345, 64
      %v1559 = vpop.permute.xlu0 %1558
      %1568 = vrot.lane.b32.xlu0 %v1518, 96
      %v1569 = vpop.permute.xlu0 %1568
      %1570 = vrot.lane.b32.xlu0 %v1521, 96
      %v1571 = vpop.permute.xlu0 %1570
      %1572 = vrot.lane.b32.xlu0 %v1526, 96
      %v1573 = vpop.permute.xlu0 %1572
      %1574 = vrot.lane.b32.xlu0 %v1529, 96
      %v1575 = vpop.permute.xlu0 %1574
      %v1580 = vsel %vm801, %v960, %v1537
      %v1581 = vsel %vm801, %v963, %v1539
      %v1582 = vsel %vm801, %v968, %v1541
      %v1583 = vsel %vm801, %v971, %v1543
      %vm1584 = vcmask 523264
      %v1585 = vsel %vm1584, %v1580, %v1553
      %v1586 = vsel %vm1584, %v1581, %v1555
      %v1587 = vsel %vm1584, %v1582, %v1557
      %v1588 = vsel %vm1584, %v1583, %v1559
      %vm1589 = vcmask 785408
      %v1590 = vsel %vm1589, %v1585, %v1569
      %v1591 = vsel %vm1589, %v1586, %v1571
      %v1592 = vsel %vm1589, %v1587, %v1573
      %v1593 = vsel %vm1589, %v1588, %v1575
      %v1594 = vpack.c.bf16 %v1591, %v1590
      %v1595 = vpack.c.bf16 %v1593, %v1592
      %v1596 = vld [vmem:[%s5] sm:$0xf]
      %v1597 = vld [vmem:[%s5 + $0x4] sm:$0xf]
      %v1598 = vld [vmem:[%s5 + $0x8] sm:$0xf]
      %v1599 = vld [vmem:[%s5 + $0xc] sm:$0xf]
      %v1600 = vld [vmem:[%s5 + $0x10] sm:$0xf]
      %v1601 = vld [vmem:[%s5 + $0x14] sm:$0xf]
      %v1602 = vld [vmem:[%s5 + $0x18] sm:$0xf]
      %v1603 = vld [vmem:[%s5 + $0x1c] sm:$0xf]
      %v1604 = vld [vmem:[%s5 + $0x20] sm:$0xf]
      %v1605 = vld [vmem:[%s5 + $0x24] sm:$0xf]
      %v1606 = vld [vmem:[%s5 + $0x28] sm:$0xf]
      %v1607 = vld [vmem:[%s5 + $0x2c] sm:$0xf]
      %v1608 = vld [vmem:[%s5 + $0x30] sm:$0xf]
      %v1609 = vld [vmem:[%s5 + $0x34] sm:$0xf]
      %v1610 = vld [vmem:[%s5 + $0x38] sm:$0xf]
      %v1611 = vld [vmem:[%s5 + $0x3c] sm:$0xf]
      %v1628 = vunpack.c.l.b16 %v1596
      %v1629 = vunpack.c.l.b16 %v1597
      %v1630 = vunpack.c.l.b16 %v1598
      %v1631 = vunpack.c.l.b16 %v1599
      %v1632 = vunpack.c.l.b16 %v1600
      %v1633 = vunpack.c.l.b16 %v1601
      %v1634 = vunpack.c.l.b16 %v1602
      %v1635 = vunpack.c.l.b16 %v1603
      %v1636 = vunpack.c.l.b16 %v1604
      %v1637 = vunpack.c.l.b16 %v1605
      %v1638 = vunpack.c.l.b16 %v1606
      %v1639 = vunpack.c.l.b16 %v1607
      %v1640 = vunpack.c.l.b16 %v1608
      %v1641 = vunpack.c.l.b16 %v1609
      %v1642 = vunpack.c.l.b16 %v1610
      %v1643 = vunpack.c.l.b16 %v1611
      %v1644 = vpack.c.b16 %v1629, %v1628
      %v1645 = vpack.c.b16 %v1631, %v1630
      %v1646 = vpack.c.b16 %v1633, %v1632
      %v1647 = vpack.c.b16 %v1635, %v1634
      %v1648 = vpack.c.b16 %v1637, %v1636
      %v1649 = vpack.c.b16 %v1639, %v1638
      %v1650 = vpack.c.b16 %v1641, %v1640
      %v1651 = vpack.c.b16 %v1643, %v1642
      %1660 = vmatprep.subr.bf16.mxu0 0
      %1661 = vmatpush1.bf16.msra.mxu0 %v1651
      %1662 = vmatprep.subr.bf16.mxu0 0
      %1663 = vmatpush1.bf16.msra.mxu0 %v1650
      %1664 = vmatprep.subr.bf16.mxu0 0
      %1665 = vmatpush1.bf16.msra.mxu0 %v1649
      %1666 = vmatprep.subr.bf16.mxu0 0
      %1667 = vmatpush1.bf16.msra.mxu0 %v1648
      %1668 = vmatprep.subr.bf16.mxu0 0
      %1669 = vmatpush1.bf16.msra.mxu0 %v1647
      %1670 = vmatprep.subr.bf16.mxu0 0
      %1671 = vmatpush1.bf16.msra.mxu0 %v1646
      %1672 = vmatprep.subr.bf16.mxu0 0
      %1673 = vmatpush1.bf16.msra.mxu0 %v1645
      %1674 = vmatprep.subr.bf16.mxu0 0
      %1675 = vmatpush1.bf16.msra.mxu0 %v1644
      %1676 = vmatprep.subr.bf16.mxu0 0
      %1677 = vmatpush2.bf16.msra.mxu0 0
      %1678 = vmatprep.subr.bf16.mxu0 0
      %1679 = vmatpush2.bf16.msra.mxu0 0
      %1680 = vmatprep.subr.bf16.mxu0 0
      %1681 = vmatpush2.bf16.msra.mxu0 0
      %1682 = vmatprep.subr.bf16.mxu0 0
      %1683 = vmatpush2.bf16.msra.mxu0 0
      %1684 = vmatprep.subr.bf16.mxu0 0
      %1685 = vmatpush2.bf16.msra.mxu0 0
      %1686 = vmatprep.subr.bf16.mxu0 0
      %1687 = vmatpush2.bf16.msra.mxu0 0
      %1688 = vmatprep.subr.bf16.mxu0 0
      %1689 = vmatpush2.bf16.msra.mxu0 0
      %1690 = vmatprep.subr.bf16.mxu0 0
      %1691 = vmatpush2.bf16.msra.mxu0 0
      %1692 = vmatprep.mubr.bf16.mxu0 0
      %1693 = vmatmul.mubr.bf16.gmra.mxu0 %v1594
      %v1694 = vpop.f32.mrf.mxu0
      %v1695 = vadd.f32 0.0, %v1694
      %v1696 = vpop.f32.mrf.mxu0
      %v1697 = vpop.f32.mrf.mxu0
      %v1698 = vadd.f32 0.0, %v1697
      %v1699 = vpop.f32.mrf.mxu0
      %1700 = vmatprep.mubr.bf16.mxu0 0
      %1701 = vmatmul.mubr.bf16.gmra.mxu0 %v1595
      %v1702 = vpop.f32.mrf.mxu0
      %v1703 = vadd.f32 0.0, %v1702
      %v1704 = vpop.f32.mrf.mxu0
      %v1705 = vpop.f32.mrf.mxu0
      %v1706 = vadd.f32 0.0, %v1705
      %v1707 = vpop.f32.mrf.mxu0
      %1708 = vdwg.mxu0
      %v1709 = vadd.f32 %v442, %v1695
      %v1710 = vadd.f32 %v443, %v1698
      %v1711 = vadd.f32 %v444, %v1703
      %v1712 = vadd.f32 %v445, %v1706
      %v1713 = vld [vmem:[%s6] sm:$0x1]
      %v1715 = vlaneseq
      %v1716 = vshrl.u32 %v1715, 7
      %v1717 = vsub.s32 0, %v1716
      %v1718 = vrot.slane %v1713, %v1717
      %v1720 = vadd.f32 %v1709, %v1718
      %v1721 = vadd.f32 %v1710, %v1718
      %v1722 = vadd.f32 %v1711, %v1718
      %v1723 = vadd.f32 %v1712, %v1718
      %v1724 = vld [vmem:[%s7] sm:$0x1]
      %v1725 = vld [vmem:[%s8] sm:$0x1]
      %1726 = vadd.xlane.f32.xlu0 %v1720
      %v1727 = vpop.xlane.xlu0 %1726
      %1728 = vadd.xlane.f32.xlu0 %v1721
      %v1729 = vpop.xlane.xlu0 %1728
      %1730 = vadd.xlane.f32.xlu0 %v1722
      %v1731 = vpop.xlane.xlu0 %1730
      %1732 = vadd.xlane.f32.xlu0 %v1723
      %v1733 = vpop.xlane.xlu0 %1732
      %v1734 = vmul.f32 %v1727, %v456
      %v1735 = vmul.f32 %v1729, %v456
      %v1736 = vmul.f32 %v1731, %v456
      %v1737 = vmul.f32 %v1733, %v456
      %v1738 = vsub.f32 %v1720, %v1734
      %v1739 = vsub.f32 %v1721, %v1735
      %v1740 = vsub.f32 %v1722, %v1736
      %v1741 = vsub.f32 %v1723, %v1737
      %v1742 = vmul.f32 %v1738, %v1738
      %v1743 = vmul.f32 %v1739, %v1739
      %v1744 = vmul.f32 %v1740, %v1740
      %v1745 = vmul.f32 %v1741, %v1741
      %1746 = vadd.xlane.f32.xlu0 %v1742
      %v1747 = vpop.xlane.xlu0 %1746
      %1748 = vadd.xlane.f32.xlu0 %v1743
      %v1749 = vpop.xlane.xlu0 %1748
      %1750 = vadd.xlane.f32.xlu0 %v1744
      %v1751 = vpop.xlane.xlu0 %1750
      %1752 = vadd.xlane.f32.xlu0 %v1745
      %v1753 = vpop.xlane.xlu0 %1752
      %v1754 = vmul.f32 %v1747, %v456
      %v1755 = vmul.f32 %v1749, %v456
      %v1756 = vmul.f32 %v1751, %v456
      %v1757 = vmul.f32 %v1753, %v456
      %v1758 = vadd.f32 %v1754, 1e-05
      %v1759 = vadd.f32 %v1755, 1e-05
      %v1760 = vadd.f32 %v1756, 1e-05
      %v1761 = vadd.f32 %v1757, 1e-05
      %v1762 = vrsqrt.pop %v1758
      %v1763 = vrsqrt.pop %v1759
      %v1764 = vrsqrt.pop %v1760
      %v1765 = vrsqrt.pop %v1761
      %v1766 = vmul.f32 %v1738, %v1762
      %v1767 = vmul.f32 %v1739, %v1763
      %v1768 = vmul.f32 %v1740, %v1764
      %v1769 = vmul.f32 %v1741, %v1765
      %v1771 = vlaneseq
      %v1772 = vshrl.u32 %v1771, 7
      %v1773 = vsub.s32 0, %v1772
      %v1774 = vrot.slane %v1724, %v1773
      %v1776 = vmul.f32 %v1766, %v1774
      %v1777 = vmul.f32 %v1767, %v1774
      %v1778 = vmul.f32 %v1768, %v1774
      %v1779 = vmul.f32 %v1769, %v1774
      %v1781 = vlaneseq
      %v1782 = vshrl.u32 %v1781, 7
      %v1783 = vsub.s32 0, %v1782
      %v1784 = vrot.slane %v1725, %v1783
      %v1786 = vadd.f32 %v1776, %v1784
      %v1787 = vadd.f32 %v1777, %v1784
      %v1788 = vadd.f32 %v1778, %v1784
      %v1789 = vadd.f32 %v1779, %v1784
      %v1790 = vpack.c.bf16 %v1787, %v1786
      %v1791 = vpack.c.bf16 %v1789, %v1788
      %v1792 = vld [vmem:[%s9] sm:$0xff]
      %v1793 = vld [vmem:[%s9 + $0x8] sm:$0xff]
      %v1794 = vld [vmem:[%s9 + $0x10] sm:$0xff]
      %v1795 = vld [vmem:[%s9 + $0x18] sm:$0xff]
      %v1796 = vld [vmem:[%s9 + $0x20] sm:$0xff]
      %v1797 = vld [vmem:[%s9 + $0x28] sm:$0xff]
      %v1798 = vld [vmem:[%s9 + $0x30] sm:$0xff]
      %v1799 = vld [vmem:[%s9 + $0x38] sm:$0xff]
      %v1800 = vld [vmem:[%s9 + $0x40] sm:$0xff]
      %v1801 = vld [vmem:[%s9 + $0x48] sm:$0xff]
      %v1802 = vld [vmem:[%s9 + $0x50] sm:$0xff]
      %v1803 = vld [vmem:[%s9 + $0x58] sm:$0xff]
      %v1804 = vld [vmem:[%s9 + $0x60] sm:$0xff]
      %v1805 = vld [vmem:[%s9 + $0x68] sm:$0xff]
      %v1806 = vld [vmem:[%s9 + $0x70] sm:$0xff]
      %v1807 = vld [vmem:[%s9 + $0x78] sm:$0xff]
      %v1808 = vld [vmem:[%s9 + $0x80] sm:$0xff]
      %v1809 = vld [vmem:[%s9 + $0x88] sm:$0xff]
      %v1810 = vld [vmem:[%s9 + $0x90] sm:$0xff]
      %v1811 = vld [vmem:[%s9 + $0x98] sm:$0xff]
      %v1812 = vld [vmem:[%s9 + $0xa0] sm:$0xff]
      %v1813 = vld [vmem:[%s9 + $0xa8] sm:$0xff]
      %v1814 = vld [vmem:[%s9 + $0xb0] sm:$0xff]
      %v1815 = vld [vmem:[%s9 + $0xb8] sm:$0xff]
      %v1816 = vld [vmem:[%s9 + $0xc0] sm:$0xff]
      %v1817 = vld [vmem:[%s9 + $0xc8] sm:$0xff]
      %v1818 = vld [vmem:[%s9 + $0xd0] sm:$0xff]
      %v1819 = vld [vmem:[%s9 + $0xd8] sm:$0xff]
      %v1820 = vld [vmem:[%s9 + $0xe0] sm:$0xff]
      %v1821 = vld [vmem:[%s9 + $0xe8] sm:$0xff]
      %v1822 = vld [vmem:[%s9 + $0xf0] sm:$0xff]
      %v1823 = vld [vmem:[%s9 + $0xf8] sm:$0xff]
      %v1824 = vld [vmem:[%s10] sm:$0xf]
      %v1826 = vlaneseq
      %v1827 = vshrl.u32 %v1826, 7
      %v1828 = vsub.s32 0, %v1827
      %v1829 = vrot.slane %v1824, %v1828
      %v1830 = vlaneseq
      %v1831 = vshrl.u32 %v1830, 7
      %v1832 = vsub.s32 1, %v1831
      %v1833 = vrot.slane %v1824, %v1832
      %v1834 = vlaneseq
      %v1835 = vshrl.u32 %v1834, 7
      %v1836 = vsub.s32 2, %v1835
      %v1837 = vrot.slane %v1824, %v1836
      %v1838 = vlaneseq
      %v1839 = vshrl.u32 %v1838, 7
      %v1840 = vsub.s32 3, %v1839
      %v1841 = vrot.slane %v1824, %v1840
      %v1878 = vunpack.c.l.b16 %v1792
      %v1879 = vunpack.c.h.b16 %v1792
      %v1880 = vunpack.c.l.b16 %v1793
      %v1881 = vunpack.c.h.b16 %v1793
      %v1882 = vunpack.c.l.b16 %v1794
      %v1883 = vunpack.c.h.b16 %v1794
      %v1884 = vunpack.c.l.b16 %v1795
      %v1885 = vunpack.c.h.b16 %v1795
      %v1886 = vunpack.c.l.b16 %v1796
      %v1887 = vunpack.c.h.b16 %v1796
      %v1888 = vunpack.c.l.b16 %v1797
      %v1889 = vunpack.c.h.b16 %v1797
      %v1890 = vunpack.c.l.b16 %v1798
      %v1891 = vunpack.c.h.b16 %v1798
      %v1892 = vunpack.c.l.b16 %v1799
      %v1893 = vunpack.c.h.b16 %v1799
      %v1894 = vunpack.c.l.b16 %v1800
      %v1895 = vunpack.c.h.b16 %v1800
      %v1896 = vunpack.c.l.b16 %v1801
      %v1897 = vunpack.c.h.b16 %v1801
      %v1898 = vunpack.c.l.b16 %v1802
      %v1899 = vunpack.c.h.b16 %v1802
      %v1900 = vunpack.c.l.b16 %v1803
      %v1901 = vunpack.c.h.b16 %v1803
      %v1902 = vunpack.c.l.b16 %v1804
      %v1903 = vunpack.c.h.b16 %v1804
      %v1904 = vunpack.c.l.b16 %v1805
      %v1905 = vunpack.c.h.b16 %v1805
      %v1906 = vunpack.c.l.b16 %v1806
      %v1907 = vunpack.c.h.b16 %v1806
      %v1908 = vunpack.c.l.b16 %v1807
      %v1909 = vunpack.c.h.b16 %v1807
      %v1910 = vunpack.c.l.b16 %v1808
      %v1911 = vunpack.c.h.b16 %v1808
      %v1912 = vunpack.c.l.b16 %v1809
      %v1913 = vunpack.c.h.b16 %v1809
      %v1914 = vunpack.c.l.b16 %v1810
      %v1915 = vunpack.c.h.b16 %v1810
      %v1916 = vunpack.c.l.b16 %v1811
      %v1917 = vunpack.c.h.b16 %v1811
      %v1918 = vunpack.c.l.b16 %v1812
      %v1919 = vunpack.c.h.b16 %v1812
      %v1920 = vunpack.c.l.b16 %v1813
      %v1921 = vunpack.c.h.b16 %v1813
      %v1922 = vunpack.c.l.b16 %v1814
      %v1923 = vunpack.c.h.b16 %v1814
      %v1924 = vunpack.c.l.b16 %v1815
      %v1925 = vunpack.c.h.b16 %v1815
      %v1926 = vunpack.c.l.b16 %v1816
      %v1927 = vunpack.c.h.b16 %v1816
      %v1928 = vunpack.c.l.b16 %v1817
      %v1929 = vunpack.c.h.b16 %v1817
      %v1930 = vunpack.c.l.b16 %v1818
      %v1931 = vunpack.c.h.b16 %v1818
      %v1932 = vunpack.c.l.b16 %v1819
      %v1933 = vunpack.c.h.b16 %v1819
      %v1934 = vunpack.c.l.b16 %v1820
      %v1935 = vunpack.c.h.b16 %v1820
      %v1936 = vunpack.c.l.b16 %v1821
      %v1937 = vunpack.c.h.b16 %v1821
      %v1938 = vunpack.c.l.b16 %v1822
      %v1939 = vunpack.c.h.b16 %v1822
      %v1940 = vunpack.c.l.b16 %v1823
      %v1941 = vunpack.c.h.b16 %v1823
      %v1942 = vpack.c.b16 %v1882, %v1878
      %v1943 = vpack.c.b16 %v1883, %v1879
      %v1944 = vpack.c.b16 %v1884, %v1880
      %v1945 = vpack.c.b16 %v1885, %v1881
      %v1946 = vpack.c.b16 %v1890, %v1886
      %v1947 = vpack.c.b16 %v1891, %v1887
      %v1948 = vpack.c.b16 %v1892, %v1888
      %v1949 = vpack.c.b16 %v1893, %v1889
      %v1950 = vpack.c.b16 %v1898, %v1894
      %v1951 = vpack.c.b16 %v1899, %v1895
      %v1952 = vpack.c.b16 %v1900, %v1896
      %v1953 = vpack.c.b16 %v1901, %v1897
      %v1954 = vpack.c.b16 %v1906, %v1902
      %v1955 = vpack.c.b16 %v1907, %v1903
      %v1956 = vpack.c.b16 %v1908, %v1904
      %v1957 = vpack.c.b16 %v1909, %v1905
      %v1958 = vpack.c.b16 %v1914, %v1910
      %v1959 = vpack.c.b16 %v1915, %v1911
      %v1960 = vpack.c.b16 %v1916, %v1912
      %v1961 = vpack.c.b16 %v1917, %v1913
      %v1962 = vpack.c.b16 %v1922, %v1918
      %v1963 = vpack.c.b16 %v1923, %v1919
      %v1964 = vpack.c.b16 %v1924, %v1920
      %v1965 = vpack.c.b16 %v1925, %v1921
      %v1966 = vpack.c.b16 %v1930, %v1926
      %v1967 = vpack.c.b16 %v1931, %v1927
      %v1968 = vpack.c.b16 %v1932, %v1928
      %v1969 = vpack.c.b16 %v1933, %v1929
      %v1970 = vpack.c.b16 %v1938, %v1934
      %v1971 = vpack.c.b16 %v1939, %v1935
      %v1972 = vpack.c.b16 %v1940, %v1936
      %v1973 = vpack.c.b16 %v1941, %v1937
      %2006 = vmatprep.subr.bf16.mxu0 %v1971
      %2007 = vmatpush1.bf16.msra.mxu0 %v1970
      %2008 = vmatprep.subr.bf16.mxu0 %v1967
      %2009 = vmatpush1.bf16.msra.mxu0 %v1966
      %2010 = vmatprep.subr.bf16.mxu0 %v1963
      %2011 = vmatpush1.bf16.msra.mxu0 %v1962
      %2012 = vmatprep.subr.bf16.mxu0 %v1959
      %2013 = vmatpush1.bf16.msra.mxu0 %v1958
      %2014 = vmatprep.subr.bf16.mxu0 %v1955
      %2015 = vmatpush1.bf16.msra.mxu0 %v1954
      %2016 = vmatprep.subr.bf16.mxu0 %v1951
      %2017 = vmatpush1.bf16.msra.mxu0 %v1950
      %2018 = vmatprep.subr.bf16.mxu0 %v1947
      %2019 = vmatpush1.bf16.msra.mxu0 %v1946
      %2020 = vmatprep.subr.bf16.mxu0 %v1943
      %2021 = vmatpush1.bf16.msra.mxu0 %v1942
      %2022 = vmatprep.subr.bf16.mxu0 0
      %2023 = vmatpush2.bf16.msra.mxu0 0
      %2024 = vmatprep.subr.bf16.mxu0 0
      %2025 = vmatpush2.bf16.msra.mxu0 0
      %2026 = vmatprep.subr.bf16.mxu0 0
      %2027 = vmatpush2.bf16.msra.mxu0 0
      %2028 = vmatprep.subr.bf16.mxu0 0
      %2029 = vmatpush2.bf16.msra.mxu0 0
      %2030 = vmatprep.subr.bf16.mxu0 0
      %2031 = vmatpush2.bf16.msra.mxu0 0
      %2032 = vmatprep.subr.bf16.mxu0 0
      %2033 = vmatpush2.bf16.msra.mxu0 0
      %2034 = vmatprep.subr.bf16.mxu0 0
      %2035 = vmatpush2.bf16.msra.mxu0 0
      %2036 = vmatprep.subr.bf16.mxu0 0
      %2037 = vmatpush2.bf16.msra.mxu0 0
      %2038 = vmatprep.mubr.bf16.mxu0 0
      %2039 = vmatmul.mubr.bf16.gmra.mxu0 %v1790
      %v2040 = vpop.f32.mrf.mxu0
      %v2041 = vadd.f32 %v1829, %v2040
      %v2042 = vpop.f32.mrf.mxu0
      %v2043 = vadd.f32 %v1833, %v2042
      %v2044 = vpop.f32.mrf.mxu0
      %v2045 = vadd.f32 %v1829, %v2044
      %v2046 = vpop.f32.mrf.mxu0
      %v2047 = vadd.f32 %v1833, %v2046
      %2048 = vmatprep.mubr.bf16.mxu0 0
      %2049 = vmatmul.mubr.bf16.gmra.mxu0 %v1791
      %v2050 = vpop.f32.mrf.mxu0
      %v2051 = vadd.f32 %v1829, %v2050
      %v2052 = vpop.f32.mrf.mxu0
      %v2053 = vadd.f32 %v1833, %v2052
      %v2054 = vpop.f32.mrf.mxu0
      %v2055 = vadd.f32 %v1829, %v2054
      %v2056 = vpop.f32.mrf.mxu0
      %v2057 = vadd.f32 %v1833, %v2056
      %2058 = vdwg.mxu0
      %2059 = vmatprep.subr.bf16.mxu0 %v1973
      %2060 = vmatpush1.bf16.msra.mxu0 %v1972
      %2061 = vmatprep.subr.bf16.mxu0 %v1969
      %2062 = vmatpush1.bf16.msra.mxu0 %v1968
      %2063 = vmatprep.subr.bf16.mxu0 %v1965
      %2064 = vmatpush1.bf16.msra.mxu0 %v1964
      %2065 = vmatprep.subr.bf16.mxu0 %v1961
      %2066 = vmatpush1.bf16.msra.mxu0 %v1960
      %2067 = vmatprep.subr.bf16.mxu0 %v1957
      %2068 = vmatpush1.bf16.msra.mxu0 %v1956
      %2069 = vmatprep.subr.bf16.mxu0 %v1953
      %2070 = vmatpush1.bf16.msra.mxu0 %v1952
      %2071 = vmatprep.subr.bf16.mxu0 %v1949
      %2072 = vmatpush1.bf16.msra.mxu0 %v1948
      %2073 = vmatprep.subr.bf16.mxu0 %v1945
      %2074 = vmatpush1.bf16.msra.mxu0 %v1944
      %2075 = vmatprep.subr.bf16.mxu0 0
      %2076 = vmatpush2.bf16.msra.mxu0 0
      %2077 = vmatprep.subr.bf16.mxu0 0
      %2078 = vmatpush2.bf16.msra.mxu0 0
      %2079 = vmatprep.subr.bf16.mxu0 0
      %2080 = vmatpush2.bf16.msra.mxu0 0
      %2081 = vmatprep.subr.bf16.mxu0 0
      %2082 = vmatpush2.bf16.msra.mxu0 0
      %2083 = vmatprep.subr.bf16.mxu0 0
      %2084 = vmatpush2.bf16.msra.mxu0 0
      %2085 = vmatprep.subr.bf16.mxu0 0
      %2086 = vmatpush2.bf16.msra.mxu0 0
      %2087 = vmatprep.subr.bf16.mxu0 0
      %2088 = vmatpush2.bf16.msra.mxu0 0
      %2089 = vmatprep.subr.bf16.mxu0 0
      %2090 = vmatpush2.bf16.msra.mxu0 0
      %2091 = vmatprep.mubr.bf16.mxu0 0
      %2092 = vmatmul.mubr.bf16.gmra.mxu0 %v1790
      %v2093 = vpop.f32.mrf.mxu0
      %v2094 = vadd.f32 %v1837, %v2093
      %v2095 = vpop.f32.mrf.mxu0
      %v2096 = vadd.f32 %v1841, %v2095
      %v2097 = vpop.f32.mrf.mxu0
      %v2098 = vadd.f32 %v1837, %v2097
      %v2099 = vpop.f32.mrf.mxu0
      %v2100 = vadd.f32 %v1841, %v2099
      %2101 = vmatprep.mubr.bf16.mxu0 0
      %2102 = vmatmul.mubr.bf16.gmra.mxu0 %v1791
      %v2103 = vpop.f32.mrf.mxu0
      %v2104 = vadd.f32 %v1837, %v2103
      %v2105 = vpop.f32.mrf.mxu0
      %v2106 = vadd.f32 %v1841, %v2105
      %v2107 = vpop.f32.mrf.mxu0
      %v2108 = vadd.f32 %v1837, %v2107
      %v2109 = vpop.f32.mrf.mxu0
      %v2110 = vadd.f32 %v1841, %v2109
      %2111 = vdwg.mxu0
      %v2112 = vmul.f32 %v2041, %v2041
      %v2113 = vmul.f32 %v2043, %v2043
      %v2114 = vmul.f32 %v2094, %v2094
      %v2115 = vmul.f32 %v2096, %v2096
      %v2116 = vmul.f32 %v2045, %v2045
      %v2117 = vmul.f32 %v2047, %v2047
      %v2118 = vmul.f32 %v2098, %v2098
      %v2119 = vmul.f32 %v2100, %v2100
      %v2120 = vmul.f32 %v2051, %v2051
      %v2121 = vmul.f32 %v2053, %v2053
      %v2122 = vmul.f32 %v2104, %v2104
      %v2123 = vmul.f32 %v2106, %v2106
      %v2124 = vmul.f32 %v2055, %v2055
      %v2125 = vmul.f32 %v2057, %v2057
      %v2126 = vmul.f32 %v2108, %v2108
      %v2127 = vmul.f32 %v2110, %v2110
      %v2128 = vmul.f32 %v2041, %v2112
      %v2129 = vmul.f32 %v2043, %v2113
      %v2130 = vmul.f32 %v2094, %v2114
      %v2131 = vmul.f32 %v2096, %v2115
      %v2132 = vmul.f32 %v2045, %v2116
      %v2133 = vmul.f32 %v2047, %v2117
      %v2134 = vmul.f32 %v2098, %v2118
      %v2135 = vmul.f32 %v2100, %v2119
      %v2136 = vmul.f32 %v2051, %v2120
      %v2137 = vmul.f32 %v2053, %v2121
      %v2138 = vmul.f32 %v2104, %v2122
      %v2139 = vmul.f32 %v2106, %v2123
      %v2140 = vmul.f32 %v2055, %v2124
      %v2141 = vmul.f32 %v2057, %v2125
      %v2142 = vmul.f32 %v2108, %v2126
      %v2143 = vmul.f32 %v2110, %v2127
      %v2144 = vmul.f32 %v2128, 0.044715
      %v2145 = vmul.f32 %v2129, 0.044715
      %v2146 = vmul.f32 %v2130, 0.044715
      %v2147 = vmul.f32 %v2131, 0.044715
      %v2148 = vmul.f32 %v2132, 0.044715
      %v2149 = vmul.f32 %v2133, 0.044715
      %v2150 = vmul.f32 %v2134, 0.044715
      %v2151 = vmul.f32 %v2135, 0.044715
      %v2152 = vmul.f32 %v2136, 0.044715
      %v2153 = vmul.f32 %v2137, 0.044715
      %v2154 = vmul.f32 %v2138, 0.044715
      %v2155 = vmul.f32 %v2139, 0.044715
      %v2156 = vmul.f32 %v2140, 0.044715
      %v2157 = vmul.f32 %v2141, 0.044715
      %v2158 = vmul.f32 %v2142, 0.044715
      %v2159 = vmul.f32 %v2143, 0.044715
      %v2160 = vadd.f32 %v2041, %v2144
      %v2161 = vadd.f32 %v2043, %v2145
      %v2162 = vadd.f32 %v2094, %v2146
      %v2163 = vadd.f32 %v2096, %v2147
      %v2164 = vadd.f32 %v2045, %v2148
      %v2165 = vadd.f32 %v2047, %v2149
      %v2166 = vadd.f32 %v2098, %v2150
      %v2167 = vadd.f32 %v2100, %v2151
      %v2168 = vadd.f32 %v2051, %v2152
      %v2169 = vadd.f32 %v2053, %v2153
      %v2170 = vadd.f32 %v2104, %v2154
      %v2171 = vadd.f32 %v2106, %v2155
      %v2172 = vadd.f32 %v2055, %v2156
      %v2173 = vadd.f32 %v2057, %v2157
      %v2174 = vadd.f32 %v2108, %v2158
      %v2175 = vadd.f32 %v2110, %v2159
      %v2176 = vmul.f32 %v2160, 0.7978846
      %v2177 = vmul.f32 %v2161, 0.7978846
      %v2178 = vmul.f32 %v2162, 0.7978846
      %v2179 = vmul.f32 %v2163, 0.7978846
      %v2180 = vmul.f32 %v2164, 0.7978846
      %v2181 = vmul.f32 %v2165, 0.7978846
      %v2182 = vmul.f32 %v2166, 0.7978846
      %v2183 = vmul.f32 %v2167, 0.7978846
      %v2184 = vmul.f32 %v2168, 0.7978846
      %v2185 = vmul.f32 %v2169, 0.7978846
      %v2186 = vmul.f32 %v2170, 0.7978846
      %v2187 = vmul.f32 %v2171, 0.7978846
      %v2188 = vmul.f32 %v2172, 0.7978846
      %v2189 = vmul.f32 %v2173, 0.7978846
      %v2190 = vmul.f32 %v2174, 0.7978846
      %v2191 = vmul.f32 %v2175, 0.7978846
      %v2192 = vtanh.pop %v2176
      %v2193 = vtanh.pop %v2177
      %v2194 = vtanh.pop %v2178
      %v2195 = vtanh.pop %v2179
      %v2196 = vtanh.pop %v2180
      %v2197 = vtanh.pop %v2181
      %v2198 = vtanh.pop %v2182
      %v2199 = vtanh.pop %v2183
      %v2200 = vtanh.pop %v2184
      %v2201 = vtanh.pop %v2185
      %v2202 = vtanh.pop %v2186
      %v2203 = vtanh.pop %v2187
      %v2204 = vtanh.pop %v2188
      %v2205 = vtanh.pop %v2189
      %v2206 = vtanh.pop %v2190
      %v2207 = vtanh.pop %v2191
      %v2208 = vadd.f32 %v2192, 1.0
      %v2209 = vadd.f32 %v2193, 1.0
      %v2210 = vadd.f32 %v2194, 1.0
      %v2211 = vadd.f32 %v2195, 1.0
      %v2212 = vadd.f32 %v2196, 1.0
      %v2213 = vadd.f32 %v2197, 1.0
      %v2214 = vadd.f32 %v2198, 1.0
      %v2215 = vadd.f32 %v2199, 1.0
      %v2216 = vadd.f32 %v2200, 1.0
      %v2217 = vadd.f32 %v2201, 1.0
      %v2218 = vadd.f32 %v2202, 1.0
      %v2219 = vadd.f32 %v2203, 1.0
      %v2220 = vadd.f32 %v2204, 1.0
      %v2221 = vadd.f32 %v2205, 1.0
      %v2222 = vadd.f32 %v2206, 1.0
      %v2223 = vadd.f32 %v2207, 1.0
      %v2224 = vmul.f32 %v2208, 0.5
      %v2225 = vmul.f32 %v2209, 0.5
      %v2226 = vmul.f32 %v2210, 0.5
      %v2227 = vmul.f32 %v2211, 0.5
      %v2228 = vmul.f32 %v2212, 0.5
      %v2229 = vmul.f32 %v2213, 0.5
      %v2230 = vmul.f32 %v2214, 0.5
      %v2231 = vmul.f32 %v2215, 0.5
      %v2232 = vmul.f32 %v2216, 0.5
      %v2233 = vmul.f32 %v2217, 0.5
      %v2234 = vmul.f32 %v2218, 0.5
      %v2235 = vmul.f32 %v2219, 0.5
      %v2236 = vmul.f32 %v2220, 0.5
      %v2237 = vmul.f32 %v2221, 0.5
      %v2238 = vmul.f32 %v2222, 0.5
      %v2239 = vmul.f32 %v2223, 0.5
      %v2240 = vmul.f32 %v2041, %v2224
      %v2241 = vmul.f32 %v2043, %v2225
      %v2242 = vmul.f32 %v2094, %v2226
      %v2243 = vmul.f32 %v2096, %v2227
      %v2244 = vmul.f32 %v2045, %v2228
      %v2245 = vmul.f32 %v2047, %v2229
      %v2246 = vmul.f32 %v2098, %v2230
      %v2247 = vmul.f32 %v2100, %v2231
      %v2248 = vmul.f32 %v2051, %v2232
      %v2249 = vmul.f32 %v2053, %v2233
      %v2250 = vmul.f32 %v2104, %v2234
      %v2251 = vmul.f32 %v2106, %v2235
      %v2252 = vmul.f32 %v2055, %v2236
      %v2253 = vmul.f32 %v2057, %v2237
      %v2254 = vmul.f32 %v2108, %v2238
      %v2255 = vmul.f32 %v2110, %v2239
      %v2256 = vpack.c.bf16 %v2244, %v2240
      %v2257 = vpack.c.bf16 %v2245, %v2241
      %v2258 = vpack.c.bf16 %v2246, %v2242
      %v2259 = vpack.c.bf16 %v2247, %v2243
      %v2260 = vpack.c.bf16 %v2252, %v2248
      %v2261 = vpack.c.bf16 %v2253, %v2249
      %v2262 = vpack.c.bf16 %v2254, %v2250
      %v2263 = vpack.c.bf16 %v2255, %v2251
      %v2264 = vld [vmem:[%s11] sm:$0xf]
      %v2265 = vld [vmem:[%s11 + $0x4] sm:$0xf]
      %v2266 = vld [vmem:[%s11 + $0x8] sm:$0xf]
      %v2267 = vld [vmem:[%s11 + $0xc] sm:$0xf]
      %v2268 = vld [vmem:[%s11 + $0x10] sm:$0xf]
      %v2269 = vld [vmem:[%s11 + $0x14] sm:$0xf]
      %v2270 = vld [vmem:[%s11 + $0x18] sm:$0xf]
      %v2271 = vld [vmem:[%s11 + $0x1c] sm:$0xf]
      %v2272 = vld [vmem:[%s11 + $0x20] sm:$0xf]
      %v2273 = vld [vmem:[%s11 + $0x24] sm:$0xf]
      %v2274 = vld [vmem:[%s11 + $0x28] sm:$0xf]
      %v2275 = vld [vmem:[%s11 + $0x2c] sm:$0xf]
      %v2276 = vld [vmem:[%s11 + $0x30] sm:$0xf]
      %v2277 = vld [vmem:[%s11 + $0x34] sm:$0xf]
      %v2278 = vld [vmem:[%s11 + $0x38] sm:$0xf]
      %v2279 = vld [vmem:[%s11 + $0x3c] sm:$0xf]
      %v2280 = vld [vmem:[%s11 + $0x40] sm:$0xf]
      %v2281 = vld [vmem:[%s11 + $0x44] sm:$0xf]
      %v2282 = vld [vmem:[%s11 + $0x48] sm:$0xf]
      %v2283 = vld [vmem:[%s11 + $0x4c] sm:$0xf]
      %v2284 = vld [vmem:[%s11 + $0x50] sm:$0xf]
      %v2285 = vld [vmem:[%s11 + $0x54] sm:$0xf]
      %v2286 = vld [vmem:[%s11 + $0x58] sm:$0xf]
      %v2287 = vld [vmem:[%s11 + $0x5c] sm:$0xf]
      %v2288 = vld [vmem:[%s11 + $0x60] sm:$0xf]
      %v2289 = vld [vmem:[%s11 + $0x64] sm:$0xf]
      %v2290 = vld [vmem:[%s11 + $0x68] sm:$0xf]
      %v2291 = vld [vmem:[%s11 + $0x6c] sm:$0xf]
      %v2292 = vld [vmem:[%s11 + $0x70] sm:$0xf]
      %v2293 = vld [vmem:[%s11 + $0x74] sm:$0xf]
      %v2294 = vld [vmem:[%s11 + $0x78] sm:$0xf]
      %v2295 = vld [vmem:[%s11 + $0x7c] sm:$0xf]
      %v2296 = vld [vmem:[%s11 + $0x80] sm:$0xf]
      %v2297 = vld [vmem:[%s11 + $0x84] sm:$0xf]
      %v2298 = vld [vmem:[%s11 + $0x88] sm:$0xf]
      %v2299 = vld [vmem:[%s11 + $0x8c] sm:$0xf]
      %v2300 = vld [vmem:[%s11 + $0x90] sm:$0xf]
      %v2301 = vld [vmem:[%s11 + $0x94] sm:$0xf]
      %v2302 = vld [vmem:[%s11 + $0x98] sm:$0xf]
      %v2303 = vld [vmem:[%s11 + $0x9c] sm:$0xf]
      %v2304 = vld [vmem:[%s11 + $0xa0] sm:$0xf]
      %v2305 = vld [vmem:[%s11 + $0xa4] sm:$0xf]
      %v2306 = vld [vmem:[%s11 + $0xa8] sm:$0xf]
      %v2307 = vld [vmem:[%s11 + $0xac] sm:$0xf]
      %v2308 = vld [vmem:[%s11 + $0xb0] sm:$0xf]
      %v2309 = vld [vmem:[%s11 + $0xb4] sm:$0xf]
      %v2310 = vld [vmem:[%s11 + $0xb8] sm:$0xf]
      %v2311 = vld [vmem:[%s11 + $0xbc] sm:$0xf]
      %v2312 = vld [vmem:[%s11 + $0xc0] sm:$0xf]
      %v2313 = vld [vmem:[%s11 + $0xc4] sm:$0xf]
      %v2314 = vld [vmem:[%s11 + $0xc8] sm:$0xf]
      %v2315 = vld [vmem:[%s11 + $0xcc] sm:$0xf]
      %v2316 = vld [vmem:[%s11 + $0xd0] sm:$0xf]
      %v2317 = vld [vmem:[%s11 + $0xd4] sm:$0xf]
      %v2318 = vld [vmem:[%s11 + $0xd8] sm:$0xf]
      %v2319 = vld [vmem:[%s11 + $0xdc] sm:$0xf]
      %v2320 = vld [vmem:[%s11 + $0xe0] sm:$0xf]
      %v2321 = vld [vmem:[%s11 + $0xe4] sm:$0xf]
      %v2322 = vld [vmem:[%s11 + $0xe8] sm:$0xf]
      %v2323 = vld [vmem:[%s11 + $0xec] sm:$0xf]
      %v2324 = vld [vmem:[%s11 + $0xf0] sm:$0xf]
      %v2325 = vld [vmem:[%s11 + $0xf4] sm:$0xf]
      %v2326 = vld [vmem:[%s11 + $0xf8] sm:$0xf]
      %v2327 = vld [vmem:[%s11 + $0xfc] sm:$0xf]
      %v2392 = vunpack.c.l.b16 %v2264
      %v2393 = vunpack.c.l.b16 %v2265
      %v2394 = vunpack.c.l.b16 %v2266
      %v2395 = vunpack.c.l.b16 %v2267
      %v2396 = vunpack.c.l.b16 %v2268
      %v2397 = vunpack.c.l.b16 %v2269
      %v2398 = vunpack.c.l.b16 %v2270
      %v2399 = vunpack.c.l.b16 %v2271
      %v2400 = vunpack.c.l.b16 %v2272
      %v2401 = vunpack.c.l.b16 %v2273
      %v2402 = vunpack.c.l.b16 %v2274
      %v2403 = vunpack.c.l.b16 %v2275
      %v2404 = vunpack.c.l.b16 %v2276
      %v2405 = vunpack.c.l.b16 %v2277
      %v2406 = vunpack.c.l.b16 %v2278
      %v2407 = vunpack.c.l.b16 %v2279
      %v2408 = vunpack.c.l.b16 %v2280
      %v2409 = vunpack.c.l.b16 %v2281
      %v2410 = vunpack.c.l.b16 %v2282
      %v2411 = vunpack.c.l.b16 %v2283
      %v2412 = vunpack.c.l.b16 %v2284
      %v2413 = vunpack.c.l.b16 %v2285
      %v2414 = vunpack.c.l.b16 %v2286
      %v2415 = vunpack.c.l.b16 %v2287
      %v2416 = vunpack.c.l.b16 %v2288
      %v2417 = vunpack.c.l.b16 %v2289
      %v2418 = vunpack.c.l.b16 %v2290
      %v2419 = vunpack.c.l.b16 %v2291
      %v2420 = vunpack.c.l.b16 %v2292
      %v2421 = vunpack.c.l.b16 %v2293
      %v2422 = vunpack.c.l.b16 %v2294
      %v2423 = vunpack.c.l.b16 %v2295
      %v2424 = vunpack.c.l.b16 %v2296
      %v2425 = vunpack.c.l.b16 %v2297
      %v2426 = vunpack.c.l.b16 %v2298
      %v2427 = vunpack.c.l.b16 %v2299
      %v2428 = vunpack.c.l.b16 %v2300
      %v2429 = vunpack.c.l.b16 %v2301
      %v2430 = vunpack.c.l.b16 %v2302
      %v2431 = vunpack.c.l.b16 %v2303
      %v2432 = vunpack.c.l.b16 %v2304
      %v2433 = vunpack.c.l.b16 %v2305
      %v2434 = vunpack.c.l.b16 %v2306
      %v2435 = vunpack.c.l.b16 %v2307
      %v2436 = vunpack.c.l.b16 %v2308
      %v2437 = vunpack.c.l.b16 %v2309
      %v2438 = vunpack.c.l.b16 %v2310
      %v2439 = vunpack.c.l.b16 %v2311
      %v2440 = vunpack.c.l.b16 %v2312
      %v2441 = vunpack.c.l.b16 %v2313
      %v2442 = vunpack.c.l.b16 %v2314
      %v2443 = vunpack.c.l.b16 %v2315
      %v2444 = vunpack.c.l.b16 %v2316
      %v2445 = vunpack.c.l.b16 %v2317
      %v2446 = vunpack.c.l.b16 %v2318
      %v2447 = vunpack.c.l.b16 %v2319
      %v2448 = vunpack.c.l.b16 %v2320
      %v2449 = vunpack.c.l.b16 %v2321
      %v2450 = vunpack.c.l.b16 %v2322
      %v2451 = vunpack.c.l.b16 %v2323
      %v2452 = vunpack.c.l.b16 %v2324
      %v2453 = vunpack.c.l.b16 %v2325
      %v2454 = vunpack.c.l.b16 %v2326
      %v2455 = vunpack.c.l.b16 %v2327
      %v2456 = vpack.c.b16 %v2393, %v2392
      %v2457 = vpack.c.b16 %v2395, %v2394
      %v2458 = vpack.c.b16 %v2397, %v2396
      %v2459 = vpack.c.b16 %v2399, %v2398
      %v2460 = vpack.c.b16 %v2401, %v2400
      %v2461 = vpack.c.b16 %v2403, %v2402
      %v2462 = vpack.c.b16 %v2405, %v2404
      %v2463 = vpack.c.b16 %v2407, %v2406
      %v2464 = vpack.c.b16 %v2409, %v2408
      %v2465 = vpack.c.b16 %v2411, %v2410
      %v2466 = vpack.c.b16 %v2413, %v2412
      %v2467 = vpack.c.b16 %v2415, %v2414
      %v2468 = vpack.c.b16 %v2417, %v2416
      %v2469 = vpack.c.b16 %v2419, %v2418
      %v2470 = vpack.c.b16 %v2421, %v2420
      %v2471 = vpack.c.b16 %v2423, %v2422
      %v2472 = vpack.c.b16 %v2425, %v2424
      %v2473 = vpack.c.b16 %v2427, %v2426
      %v2474 = vpack.c.b16 %v2429, %v2428
      %v2475 = vpack.c.b16 %v2431, %v2430
      %v2476 = vpack.c.b16 %v2433, %v2432
      %v2477 = vpack.c.b16 %v2435, %v2434
      %v2478 = vpack.c.b16 %v2437, %v2436
      %v2479 = vpack.c.b16 %v2439, %v2438
      %v2480 = vpack.c.b16 %v2441, %v2440
      %v2481 = vpack.c.b16 %v2443, %v2442
      %v2482 = vpack.c.b16 %v2445, %v2444
      %v2483 = vpack.c.b16 %v2447, %v2446
      %v2484 = vpack.c.b16 %v2449, %v2448
      %v2485 = vpack.c.b16 %v2451, %v2450
      %v2486 = vpack.c.b16 %v2453, %v2452
      %v2487 = vpack.c.b16 %v2455, %v2454
      %2520 = vmatprep.subr.bf16.mxu0 0
      %2521 = vmatpush1.bf16.msra.mxu0 %v2463
      %2522 = vmatprep.subr.bf16.mxu0 0
      %2523 = vmatpush1.bf16.msra.mxu0 %v2462
      %2524 = vmatprep.subr.bf16.mxu0 0
      %2525 = vmatpush1.bf16.msra.mxu0 %v2461
      %2526 = vmatprep.subr.bf16.mxu0 0
      %2527 = vmatpush1.bf16.msra.mxu0 %v2460
      %2528 = vmatprep.subr.bf16.mxu0 0
      %2529 = vmatpush1.bf16.msra.mxu0 %v2459
      %2530 = vmatprep.subr.bf16.mxu0 0
      %2531 = vmatpush1.bf16.msra.mxu0 %v2458
      %2532 = vmatprep.subr.bf16.mxu0 0
      %2533 = vmatpush1.bf16.msra.mxu0 %v2457
      %2534 = vmatprep.subr.bf16.mxu0 0
      %2535 = vmatpush1.bf16.msra.mxu0 %v2456
      %2536 = vmatprep.subr.bf16.mxu0 0
      %2537 = vmatpush2.bf16.msra.mxu0 %v2471
      %2538 = vmatprep.subr.bf16.mxu0 0
      %2539 = vmatpush2.bf16.msra.mxu0 %v2470
      %2540 = vmatprep.subr.bf16.mxu0 0
      %2541 = vmatpush2.bf16.msra.mxu0 %v2469
      %2542 = vmatprep.subr.bf16.mxu0 0
      %2543 = vmatpush2.bf16.msra.mxu0 %v2468
      %2544 = vmatprep.subr.bf16.mxu0 0
      %2545 = vmatpush2.bf16.msra.mxu0 %v2467
      %2546 = vmatprep.subr.bf16.mxu0 0
      %2547 = vmatpush2.bf16.msra.mxu0 %v2466
      %2548 = vmatprep.subr.bf16.mxu0 0
      %2549 = vmatpush2.bf16.msra.mxu0 %v2465
      %2550 = vmatprep.subr.bf16.mxu0 0
      %2551 = vmatpush2.bf16.msra.mxu0 %v2464
      %2552 = vmatprep.mubr.bf16.mxu0 %v2257
      %2553 = vmatmul.mubr.bf16.gmra.mxu0 %v2256
      %v2554 = vpop.f32.mrf.mxu0
      %v2555 = vadd.f32 0.0, %v2554
      %v2556 = vpop.f32.mrf.mxu0
      %v2557 = vpop.f32.mrf.mxu0
      %v2558 = vadd.f32 0.0, %v2557
      %v2559 = vpop.f32.mrf.mxu0
      %2560 = vmatprep.mubr.bf16.mxu0 %v2261
      %2561 = vmatmul.mubr.bf16.gmra.mxu0 %v2260
      %v2562 = vpop.f32.mrf.mxu0
      %v2563 = vadd.f32 0.0, %v2562
      %v2564 = vpop.f32.mrf.mxu0
      %v2565 = vpop.f32.mrf.mxu0
      %v2566 = vadd.f32 0.0, %v2565
      %v2567 = vpop.f32.mrf.mxu0
      %2568 = vdwg.mxu0
      %2569 = vmatprep.subr.bf16.mxu0 0
      %2570 = vmatpush1.bf16.msra.mxu0 %v2479
      %2571 = vmatprep.subr.bf16.mxu0 0
      %2572 = vmatpush1.bf16.msra.mxu0 %v2478
      %2573 = vmatprep.subr.bf16.mxu0 0
      %2574 = vmatpush1.bf16.msra.mxu0 %v2477
      %2575 = vmatprep.subr.bf16.mxu0 0
      %2576 = vmatpush1.bf16.msra.mxu0 %v2476
      %2577 = vmatprep.subr.bf16.mxu0 0
      %2578 = vmatpush1.bf16.msra.mxu0 %v2475
      %2579 = vmatprep.subr.bf16.mxu0 0
      %2580 = vmatpush1.bf16.msra.mxu0 %v2474
      %2581 = vmatprep.subr.bf16.mxu0 0
      %2582 = vmatpush1.bf16.msra.mxu0 %v2473
      %2583 = vmatprep.subr.bf16.mxu0 0
      %2584 = vmatpush1.bf16.msra.mxu0 %v2472
      %2585 = vmatprep.subr.bf16.mxu0 0
      %2586 = vmatpush2.bf16.msra.mxu0 %v2487
      %2587 = vmatprep.subr.bf16.mxu0 0
      %2588 = vmatpush2.bf16.msra.mxu0 %v2486
      %2589 = vmatprep.subr.bf16.mxu0 0
      %2590 = vmatpush2.bf16.msra.mxu0 %v2485
      %2591 = vmatprep.subr.bf16.mxu0 0
      %2592 = vmatpush2.bf16.msra.mxu0 %v2484
      %2593 = vmatprep.subr.bf16.mxu0 0
      %2594 = vmatpush2.bf16.msra.mxu0 %v2483
      %2595 = vmatprep.subr.bf16.mxu0 0
      %2596 = vmatpush2.bf16.msra.mxu0 %v2482
      %2597 = vmatprep.subr.bf16.mxu0 0
      %2598 = vmatpush2.bf16.msra.mxu0 %v2481
      %2599 = vmatprep.subr.bf16.mxu0 0
      %2600 = vmatpush2.bf16.msra.mxu0 %v2480
      %2601 = vmatprep.mubr.bf16.mxu0 %v2259
      %2602 = vmatmul.mubr.bf16.gmra.mxu0 %v2258
      %v2603 = vpop.f32.mrf.mxu0
      %v2604 = vadd.f32 %v2555, %v2603
      %v2605 = vpop.f32.mrf.mxu0
      %v2606 = vpop.f32.mrf.mxu0
      %v2607 = vadd.f32 %v2558, %v2606
      %v2608 = vpop.f32.mrf.mxu0
      %2609 = vmatprep.mubr.bf16.mxu0 %v2263
      %2610 = vmatmul.mubr.bf16.gmra.mxu0 %v2262
      %v2611 = vpop.f32.mrf.mxu0
      %v2612 = vadd.f32 %v2563, %v2611
      %v2613 = vpop.f32.mrf.mxu0
      %v2614 = vpop.f32.mrf.mxu0
      %v2615 = vadd.f32 %v2566, %v2614
      %v2616 = vpop.f32.mrf.mxu0
      %2617 = vdwg.mxu0
      %v2618 = vadd.f32 %v1720, %v2604
      %v2619 = vadd.f32 %v1721, %v2607
      %v2620 = vadd.f32 %v1722, %v2612
      %v2621 = vadd.f32 %v1723, %v2615
      %v2622 = vld [vmem:[%s12] sm:$0x1]
      %v2624 = vlaneseq
      %v2625 = vshrl.u32 %v2624, 7
      %v2626 = vsub.s32 0, %v2625
      %v2627 = vrot.slane %v2622, %v2626
      %v2629 = vadd.f32 %v2618, %v2627
      %v2630 = vadd.f32 %v2619, %v2627
      %v2631 = vadd.f32 %v2620, %v2627
      %v2632 = vadd.f32 %v2621, %v2627
      %v2633 = vlaneseq
      %v2634 = vshrl.u32 %v2633, 7
      %v2635 = vadd.s32 %v2634, 8
      %v2636 = vadd.s32 %v2634, 16
      %v2637 = vadd.s32 %v2634, 24
      %vm2638 = vcmp.lt.s32.totalorder %v2634, 17
      %vm2639 = vcmp.lt.s32.totalorder %v2635, 17
      %vm2640 = vcmp.lt.s32.totalorder %v2636, 17
      %vm2641 = vcmp.lt.s32.totalorder %v2637, 17
      %v2642 = vsel %vm2638, %v2629, 0.0
      %v2643 = vsel %vm2639, %v2630, 0.0
      %v2644 = vsel %vm2640, %v2631, 0.0
      %v2645 = vsel %vm2641, %v2632, 0.0
      %2646 = vst [vmem:[%s440] sm:$0xff] %v2642
      %2647 = vst [vmem:[%s440 + $0x8] sm:$0xff] %v2643
      %2648 = vst [vmem:[%s440 + $0x10] sm:$0xff] %v2644
      %2649 = vst [vmem:[%s440 + $0x18] sm:$0xff] %v2645
      %p2650 = scmp.lt.s32.totalorder %s24, 1
      %s2651 = scalar_select %p2650, %s24, 1
      %s2652 = smul.addr %s2651, 4
      %s2653 = smul.addr %s2652, 8
      %s2654 = scalar_lea.vmem %s13, %s2653
      // Predicated region
      $region73: #{vit_forward.5} parent=71 // pred_check
        %p2655 = pneg %p320
      $region74: #{vit_forward.5} parent=71 // pred_check_branch
        %2657 = sbr.rel (%p2655) target = $region76
      $region75: #{vit_forward.5} parent=71 // pred_region
        _
      $region76: #{vit_forward.5} parent=71 // pred_fallthru
        _
    $region72: #{vit_forward.5} parent=5 // pred_fallthru
      _
    %p2658 = scmp.le.s32.totalorder 2, %s19
    // Predicated region
    $region77: #{vit_forward.5} parent=5 // pred_check
      %p2659 = pneg %p2658
    $region78: #{vit_forward.5} parent=5 // pred_check_branch
      %2661 = sbr.rel (%p2659) target = $region80
    $region79: #{vit_forward.5} parent=5 // pred_region
      %s2662 = ssub.s32 %s19, 2
      // Predicated region
      $region81: #{vit_forward.5} parent=79 // pred_check
        %p2663 = pneg %p326
      $region82: #{vit_forward.5} parent=79 // pred_check_branch
        %2665 = sbr.rel (%p2663) target = $region84
      $region83: #{vit_forward.5} parent=79 // pred_region
        %p2666 = scmp.lt.s32.totalorder %s25, 1
        %s2667 = scalar_select %p2666, %s25, 1
        %s2668 = smul.addr %s2667, 4
        %s2669 = smul.addr %s2668, 8
        %s2670 = scalar_lea.vmem %s13, %s2669
      $region84: #{vit_forward.5} parent=79 // pred_fallthru
        _
    $region80: #{vit_forward.5} parent=5 // pred_fallthru
      _
  $region6: #{vit_forward.5} parent=0 // loop_footer
    %s23 = sadd.s32 1, %s19
  $region7: #{vit_forward.5} parent=0 // loop_footer_branch
    %18 = sbr.rel target = $region3
  $region8: #{vit_forward.5} parent=0 // loop_exit
    _

</llo_original>
